<compile_context>
chip_gen: v6e
topology: v6e:2x2x1
jax: 0.10.0
libtpu: 0.0.40
codegen_flags: <defaults>
</compile_context>

<pallas_src>
import jax
import jax.numpy as jnp
from jax.experimental import pallas as pl
from jax.experimental.pallas import tpu as pltpu

EPS = 1e-12       # F.normalize default eps
OUT_PAD = 128     # lane-dense padding of the 2-class output


def fusion_head_kernel(f1_ref, f2_ref,
                       w1_ref, b1_ref,
                       w2a_ref, w2b_ref, b2_ref,
                       w3_ref, b3_ref,
                       out_ref):
    # --- fc1: Linear(1280, 512) + ReLU(inplace) on clf_model1 features ---
    f1 = f1_ref[...]                                                # (TB, 1280) f32
    h1 = jnp.dot(f1.astype(jnp.bfloat16), w1_ref[...],
                 preferred_element_type=jnp.float32) + b1_ref[...]
    h1 = jnp.maximum(h1, 0.0)                                       # (TB, 512) f32

    # --- F.normalize(p=2, dim=1):  x / clamp_min(||x||, eps) == x * rsqrt(max(sumsq, eps^2))
    inv1 = jax.lax.rsqrt(jnp.maximum(jnp.sum(h1 * h1, axis=1, keepdims=True), EPS * EPS))
    n1 = h1 * inv1
    f2 = f2_ref[...]                                                # (TB, 512) f32
    inv2 = jax.lax.rsqrt(jnp.maximum(jnp.sum(f2 * f2, axis=1, keepdims=True), EPS * EPS))
    n2 = f2 * inv2

    # --- fc2[0]: Linear(1024, 512) on cat([n1, n2], dim=1) via weight split ---
    h2 = (jnp.dot(n1.astype(jnp.bfloat16), w2a_ref[...], preferred_element_type=jnp.float32)
          + jnp.dot(n2.astype(jnp.bfloat16), w2b_ref[...], preferred_element_type=jnp.float32)
          + b2_ref[...])                                            # (TB, 512)

    # --- fc2[1]: Dropout(p=0.5) -> identity at inference ---
    # TODO(synk): training-mode dropout would need pltpu.prng_seed + stateful_bernoulli.

    # --- fc2[2]: ReLU, fc2[3]: Linear(512, 2), padded to 128 output lanes ---
    h2 = jnp.maximum(h2, 0.0)
    out = jnp.dot(h2.astype(jnp.bfloat16), w3_ref[...],
                  preferred_element_type=jnp.float32) + b3_ref[...]
    out_ref[...] = out.astype(out_ref.dtype)                        # (TB, 128)


def _round_up(x, m):
    return ((x + m - 1) // m) * m


def fusion_head(feat1, feat2, w1, b1, w2a, w2b, b2, w3, b3, *, block_b=256):
    """feat1: (B, 1280) from clf_model1 (fc=Identity); feat2: (B, 512) from clf_model2.

    block_b: batch tile. 256 fills the v6e/v7x MXU; use 128 on v5e. Small batches
    fall back to a single sublane-aligned tile.
    """
    B = feat1.shape[0]
    n_cls = w3.shape[1]

    tb = block_b if B >= block_b else _round_up(B, 8)
    Bp = _round_up(B, tb)
    if Bp != B:
        pad = Bp - B
        feat1 = jnp.pad(feat1, ((0, pad), (0, 0)))
        feat2 = jnp.pad(feat2, ((0, pad), (0, 0)))

    # bf16 weights for the MXU operands (halves HBM weight bytes); biases stay f32.
    w1_bf = w1.astype(jnp.bfloat16)
    w2a_bf = w2a.astype(jnp.bfloat16)
    w2b_bf = w2b.astype(jnp.bfloat16)
    # Lane-dense final projection: zero-pad the 2-wide output dim to 128 lanes.
    w3_bf = jnp.pad(w3, ((0, 0), (0, OUT_PAD - n_cls))).astype(jnp.bfloat16)
    b3_p = jnp.pad(b3, ((0, 0), (0, OUT_PAD - n_cls)))

    vmem = pltpu.MemorySpace.VMEM

    def feat_spec(d):
        return pl.BlockSpec((tb, d), lambda i: (i, 0), memory_space=vmem)

    def resident(shape):  # weights/biases: same block every grid step -> VMEM resident
        return pl.BlockSpec(shape, lambda i: (0, 0), memory_space=vmem)

    out = pl.pallas_call(
        fusion_head_kernel,
        out_shape=jax.ShapeDtypeStruct((Bp, OUT_PAD), jnp.float32),
        grid_spec=pltpu.PrefetchScalarGridSpec(
            num_scalar_prefetch=0,
            grid=(Bp // tb,),
            in_specs=[
                feat_spec(1280),              # feat1 batch tile
                feat_spec(512),               # feat2 batch tile
                resident((1280, 512)),        # w1  (bf16)
                resident((1, 512)),           # b1
                resident((512, 512)),         # w2a (bf16)
                resident((512, 512)),         # w2b (bf16)
                resident((1, 512)),           # b2
                resident((512, OUT_PAD)),     # w3 padded (bf16)
                resident((1, OUT_PAD)),       # b3 padded
            ],
            out_specs=pl.BlockSpec((tb, OUT_PAD), lambda i: (i, 0), memory_space=vmem),
        ),
        compiler_params=pltpu.CompilerParams(dimension_semantics=("parallel",)),
    )(feat1, feat2, w1_bf, b1, w2a_bf, w2b_bf, b2, w3_bf, b3_p)

    return out[:B, :n_cls]


# --- deterministic stand-ins for the externally supplied backbones (plain-JAX glue) ---
def clf_model1_standin(img, w):   # GhostNet-like backbone with fc=Identity -> (B, 1280)
    return jnp.maximum(img.reshape(img.shape[0], -1) @ w, 0.0)


def clf_model2_standin(seq, w):   # RCA-CBAM-dilated seq model -> (B, 512)
    return jnp.tanh(seq.reshape(seq.shape[0], -1) @ w)


def linear_init(key, fan_in, fan_out):
    """PyTorch nn.Linear-style uniform init; weight stored transposed as (in, out)."""
    bound = 1.0 / (fan_in ** 0.5)
    kw, kb = jax.random.split(key)
    w = jax.random.uniform(kw, (fan_in, fan_out), jnp.float32, -bound, bound)
    b = jax.random.uniform(kb, (1, fan_out), jnp.float32, -bound, bound)
    return w, b


def reference_forward(feat1, feat2, w1, b1, w2, b2, w3, b3):
    """FusionModel head semantics, mirroring the kernel's bf16 rounding of the MXU
    operands (weights + pre-dot activations); accumulation and everything else f32."""
    def q(x):
        return x.astype(jnp.bfloat16).astype(jnp.float32)

    h1 = jnp.maximum(jnp.dot(q(feat1), q(w1)) + b1, 0.0)
    n1 = h1 * jax.lax.rsqrt(jnp.maximum(jnp.sum(h1 * h1, axis=1, keepdims=True), EPS * EPS))
    n2 = feat2 * jax.lax.rsqrt(jnp.maximum(jnp.sum(feat2 * feat2, axis=1, keepdims=True), EPS * EPS))
    fused = jnp.concatenate([n1, n2], axis=1)
    h2 = jnp.maximum(jnp.dot(q(fused), q(w2)) + b2, 0.0)   # dropout == identity (eval)
    return jnp.dot(q(h2), q(w3)) + b3


if __name__ == "__main__":
    key = jax.random.PRNGKey(0)
    keys = jax.random.split(key, 8)

    # Small shapes consistent with the forward: img1 is NCHW, seq is (B, S, D).
    B, C, H, W = 2, 4, 16, 16
    S, D = 8, 32

    img1 = jax.random.normal(keys[0], (B, C, H, W), jnp.float32)
    seq = jax.random.normal(keys[1], (B, S, D), jnp.float32)

    # Backbone stand-in parameters (deterministic).
    wb1 = 0.02 * jax.random.normal(keys[2], (C * H * W, 1280), jnp.float32)
    wb2 = 0.02 * jax.random.normal(keys[3], (S * D, 512), jnp.float32)

    feat1 = clf_model1_standin(img1, wb1)    # (B, 1280)
    feat2 = clf_model2_standin(seq, wb2)     # (B, 512)

    # Fusion-head parameters (shapes from FusionModel.__init__).
    w1, b1 = linear_init(keys[4], 1280, 512)        # fc1
    w2, b2 = linear_init(keys[5], 1024, 512)        # fc2[0]  (512 + 512 -> 512)
    w3, b3 = linear_init(keys[6], 512, 2)           # fc2[3]
    w2a, w2b = w2[:512], w2[512:]                   # concat split

    out = fusion_head(feat1, feat2, w1, b1, w2a, w2b, b2, w3, b3)
    out = jax.block_until_ready(out)

    ref = reference_forward(feat1, feat2, w1, b1, w2, b2, w3, b3)
    assert out.shape == (B, 2)
    assert jnp.allclose(out, ref, atol=1e-3, rtol=1e-3), float(jnp.max(jnp.abs(out - ref)))

    print("KERNEL_OK")
</pallas_src>

<mosaic_0001>
module attributes {stable_mosaic.version = 11 : i64} {
  func.func @fusion_head_kernel(%arg0: i32, %arg1: memref<8x1280xf32, #tpu.memory_space<vmem>>, %arg2: memref<8x512xf32, #tpu.memory_space<vmem>>, %arg3: memref<1280x512xbf16, #tpu.memory_space<vmem>>, %arg4: memref<1x512xf32, #tpu.memory_space<vmem>>, %arg5: memref<512x512xbf16, #tpu.memory_space<vmem>>, %arg6: memref<512x512xbf16, #tpu.memory_space<vmem>>, %arg7: memref<1x512xf32, #tpu.memory_space<vmem>>, %arg8: memref<512x128xbf16, #tpu.memory_space<vmem>>, %arg9: memref<1x128xf32, #tpu.memory_space<vmem>>, %arg10: memref<8x128xf32, #tpu.memory_space<vmem>>) attributes {dimension_semantics = [#tpu.dimension_semantics<parallel>], iteration_bounds = array<i64: 1>, scalar_prefetch = 0 : i64, scratch_operands = 0 : i64, tpu.core_type = #tpu.core_type<tc>, window_params = [{transform_indices = @transform_0, window_bounds = array<i64: 8, 1280>}, {transform_indices = @transform_1, window_bounds = array<i64: 8, 512>}, {pipeline_mode = #tpu.pipeline_mode<synchronous>, transform_indices = @transform_2, window_bounds = array<i64: 1280, 512>}, {pipeline_mode = #tpu.pipeline_mode<synchronous>, transform_indices = @transform_3, window_bounds = array<i64: 1, 512>}, {pipeline_mode = #tpu.pipeline_mode<synchronous>, transform_indices = @transform_4, window_bounds = array<i64: 512, 512>}, {pipeline_mode = #tpu.pipeline_mode<synchronous>, transform_indices = @transform_5, window_bounds = array<i64: 512, 512>}, {pipeline_mode = #tpu.pipeline_mode<synchronous>, transform_indices = @transform_6, window_bounds = array<i64: 1, 512>}, {pipeline_mode = #tpu.pipeline_mode<synchronous>, transform_indices = @transform_7, window_bounds = array<i64: 512, 128>}, {pipeline_mode = #tpu.pipeline_mode<synchronous>, transform_indices = @transform_8, window_bounds = array<i64: 1, 128>}, {transform_indices = @transform_9, window_bounds = array<i64: 8, 128>}]} {
    %c0 = arith.constant 0 : index
    %c0_0 = arith.constant 0 : index
    %0 = vector.load %arg1[%c0, %c0_0] : memref<8x1280xf32, #tpu.memory_space<vmem>>, vector<8x1280xf32>
    %1 = arith.truncf %0 : vector<8x1280xf32> to vector<8x1280xbf16>
    %c0_1 = arith.constant 0 : index
    %c0_2 = arith.constant 0 : index
    %2 = vector.load %arg3[%c0_1, %c0_2] : memref<1280x512xbf16, #tpu.memory_space<vmem>>, vector<1280x512xbf16>
    %cst = arith.constant dense<0.000000e+00> : vector<8x512xf32>
    %3 = tpu.matmul %1, %2, %cst {dimension_numbers = #tpu.dot_dimension_numbers<[1], [0], [0], [1], [0, 0, 1, 1], [], []>} : vector<8x1280xbf16>, vector<1280x512xbf16>, vector<8x512xf32> -> vector<8x512xf32>
    %c0_3 = arith.constant 0 : index
    %c0_4 = arith.constant 0 : index
    %4 = vector.load %arg4[%c0_3, %c0_4] : memref<1x512xf32, #tpu.memory_space<vmem>>, vector<1x512xf32>
    %5 = vector.broadcast %4 : vector<1x512xf32> to vector<8x512xf32>
    %6 = arith.addf %3, %5 : vector<8x512xf32>
    %cst_5 = arith.constant 0.000000e+00 : f32
    %7 = vector.broadcast %cst_5 : f32 to vector<8x512xf32>
    %8 = arith.maximumf %6, %7 : vector<8x512xf32>
    %9 = arith.mulf %8, %8 : vector<8x512xf32>
    %cst_6 = arith.constant dense<0.000000e+00> : vector<8xf32>
    %10 = vector.multi_reduction <add>, %9, %cst_6 [1] : vector<8x512xf32> to vector<8xf32>
    %11 = vector.shape_cast %10 : vector<8xf32> to vector<8x1xf32>
    %cst_7 = arith.constant 1.000000e-24 : f32
    %12 = vector.broadcast %cst_7 : f32 to vector<8x1xf32>
    %13 = arith.maximumf %11, %12 : vector<8x1xf32>
    %14 = math.rsqrt %13 : vector<8x1xf32>
    %15 = vector.broadcast %14 : vector<8x1xf32> to vector<8x512xf32>
    %16 = arith.mulf %8, %15 : vector<8x512xf32>
    %c0_8 = arith.constant 0 : index
    %c0_9 = arith.constant 0 : index
    %17 = vector.load %arg2[%c0_8, %c0_9] : memref<8x512xf32, #tpu.memory_space<vmem>>, vector<8x512xf32>
    %18 = arith.mulf %17, %17 : vector<8x512xf32>
    %cst_10 = arith.constant dense<0.000000e+00> : vector<8xf32>
    %19 = vector.multi_reduction <add>, %18, %cst_10 [1] : vector<8x512xf32> to vector<8xf32>
    %20 = vector.shape_cast %19 : vector<8xf32> to vector<8x1xf32>
    %cst_11 = arith.constant 1.000000e-24 : f32
    %21 = vector.broadcast %cst_11 : f32 to vector<8x1xf32>
    %22 = arith.maximumf %20, %21 : vector<8x1xf32>
    %23 = math.rsqrt %22 : vector<8x1xf32>
    %24 = vector.broadcast %23 : vector<8x1xf32> to vector<8x512xf32>
    %25 = arith.mulf %17, %24 : vector<8x512xf32>
    %26 = arith.truncf %16 : vector<8x512xf32> to vector<8x512xbf16>
    %c0_12 = arith.constant 0 : index
    %c0_13 = arith.constant 0 : index
    %27 = vector.load %arg5[%c0_12, %c0_13] : memref<512x512xbf16, #tpu.memory_space<vmem>>, vector<512x512xbf16>
    %cst_14 = arith.constant dense<0.000000e+00> : vector<8x512xf32>
    %28 = tpu.matmul %26, %27, %cst_14 {dimension_numbers = #tpu.dot_dimension_numbers<[1], [0], [0], [1], [0, 0, 1, 1], [], []>} : vector<8x512xbf16>, vector<512x512xbf16>, vector<8x512xf32> -> vector<8x512xf32>
    %29 = arith.truncf %25 : vector<8x512xf32> to vector<8x512xbf16>
    %c0_15 = arith.constant 0 : index
    %c0_16 = arith.constant 0 : index
    %30 = vector.load %arg6[%c0_15, %c0_16] : memref<512x512xbf16, #tpu.memory_space<vmem>>, vector<512x512xbf16>
    %cst_17 = arith.constant dense<0.000000e+00> : vector<8x512xf32>
    %31 = tpu.matmul %29, %30, %cst_17 {dimension_numbers = #tpu.dot_dimension_numbers<[1], [0], [0], [1], [0, 0, 1, 1], [], []>} : vector<8x512xbf16>, vector<512x512xbf16>, vector<8x512xf32> -> vector<8x512xf32>
    %32 = arith.addf %28, %31 : vector<8x512xf32>
    %c0_18 = arith.constant 0 : index
    %c0_19 = arith.constant 0 : index
    %33 = vector.load %arg7[%c0_18, %c0_19] : memref<1x512xf32, #tpu.memory_space<vmem>>, vector<1x512xf32>
    %34 = vector.broadcast %33 : vector<1x512xf32> to vector<8x512xf32>
    %35 = arith.addf %32, %34 : vector<8x512xf32>
    %cst_20 = arith.constant 0.000000e+00 : f32
    %36 = vector.broadcast %cst_20 : f32 to vector<8x512xf32>
    %37 = arith.maximumf %35, %36 : vector<8x512xf32>
    %38 = arith.truncf %37 : vector<8x512xf32> to vector<8x512xbf16>
    %c0_21 = arith.constant 0 : index
    %c0_22 = arith.constant 0 : index
    %39 = vector.load %arg8[%c0_21, %c0_22] : memref<512x128xbf16, #tpu.memory_space<vmem>>, vector<512x128xbf16>
    %cst_23 = arith.constant dense<0.000000e+00> : vector<8x128xf32>
    %40 = tpu.matmul %38, %39, %cst_23 {dimension_numbers = #tpu.dot_dimension_numbers<[1], [0], [0], [1], [0, 0, 1, 1], [], []>} : vector<8x512xbf16>, vector<512x128xbf16>, vector<8x128xf32> -> vector<8x128xf32>
    %c0_24 = arith.constant 0 : index
    %c0_25 = arith.constant 0 : index
    %41 = vector.load %arg9[%c0_24, %c0_25] : memref<1x128xf32, #tpu.memory_space<vmem>>, vector<1x128xf32>
    %42 = vector.broadcast %41 : vector<1x128xf32> to vector<8x128xf32>
    %43 = arith.addf %40, %42 : vector<8x128xf32>
    %c0_26 = arith.constant 0 : index
    %c0_27 = arith.constant 0 : index
    %44 = vector.load %arg10[%c0_26, %c0_27] : memref<8x128xf32, #tpu.memory_space<vmem>>, vector<8x128xf32>
    tpu.vector_store %arg10[%c0_26, %c0_27], %43 {strides = array<i32>} : memref<8x128xf32, #tpu.memory_space<vmem>>, vector<8x128xf32>,
    return
  }
  func.func @transform_0(%arg0: i32) -> (i32, i32) {
    %c0_i32 = arith.constant 0 : i32
    %c0_i32_0 = arith.constant 0 : i32
    return %arg0, %c0_i32 : i32, i32
  }
  func.func @transform_1(%arg0: i32) -> (i32, i32) {
    %c0_i32 = arith.constant 0 : i32
    %c0_i32_0 = arith.constant 0 : i32
    return %arg0, %c0_i32 : i32, i32
  }
  func.func @transform_2(%arg0: i32) -> (i32, i32) {
    %c0_i32 = arith.constant 0 : i32
    %c0_i32_0 = arith.constant 0 : i32
    %c0_i32_1 = arith.constant 0 : i32
    return %c0_i32, %c0_i32_0 : i32, i32
  }
  func.func @transform_3(%arg0: i32) -> (i32, i32) {
    %c0_i32 = arith.constant 0 : i32
    %c0_i32_0 = arith.constant 0 : i32
    %c0_i32_1 = arith.constant 0 : i32
    return %c0_i32, %c0_i32_0 : i32, i32
  }
  func.func @transform_4(%arg0: i32) -> (i32, i32) {
    %c0_i32 = arith.constant 0 : i32
    %c0_i32_0 = arith.constant 0 : i32
    %c0_i32_1 = arith.constant 0 : i32
    return %c0_i32, %c0_i32_0 : i32, i32
  }
  func.func @transform_5(%arg0: i32) -> (i32, i32) {
    %c0_i32 = arith.constant 0 : i32
    %c0_i32_0 = arith.constant 0 : i32
    %c0_i32_1 = arith.constant 0 : i32
    return %c0_i32, %c0_i32_0 : i32, i32
  }
  func.func @transform_6(%arg0: i32) -> (i32, i32) {
    %c0_i32 = arith.constant 0 : i32
    %c0_i32_0 = arith.constant 0 : i32
    %c0_i32_1 = arith.constant 0 : i32
    return %c0_i32, %c0_i32_0 : i32, i32
  }
  func.func @transform_7(%arg0: i32) -> (i32, i32) {
    %c0_i32 = arith.constant 0 : i32
    %c0_i32_0 = arith.constant 0 : i32
    %c0_i32_1 = arith.constant 0 : i32
    return %c0_i32, %c0_i32_0 : i32, i32
  }
  func.func @transform_8(%arg0: i32) -> (i32, i32) {
    %c0_i32 = arith.constant 0 : i32
    %c0_i32_0 = arith.constant 0 : i32
    %c0_i32_1 = arith.constant 0 : i32
    return %c0_i32, %c0_i32_0 : i32, i32
  }
  func.func @transform_9(%arg0: i32) -> (i32, i32) {
    %c0_i32 = arith.constant 0 : i32
    %c0_i32_0 = arith.constant 0 : i32
    return %arg0, %c0_i32 : i32, i32
  }
}

</mosaic_0001>

<llo_original>
// kernel: tpu_custom_call.1
$region0: #{tpu_custom_call.1}
  #allocation0 [shape = 'u32[]', space=smem, size = 0x4, offset = 0x4, fixed_abs, tag = 'smem constant byte address 0x4 - core index']
  #allocation1 [shape = 'u32[144,128]{1,0:T(1,128)}', space=vmem, size = 0x12000, scoped, tag = 'internal scratch']
  %s0 = inlined_call_operand.hbm [shape: f32[8,1280], index: 0, kind: input, shape index: {}]
  %s1 = inlined_call_operand.hbm [shape: f32[8,512], index: 1, kind: input, shape index: {}]
  %s2 = inlined_call_operand.hbm [shape: bf16[1280,512], index: 2, kind: input, shape index: {}]
  %s3 = inlined_call_operand.hbm [shape: f32[1,512], index: 3, kind: input, shape index: {}]
  %s4 = inlined_call_operand.hbm [shape: bf16[512,512], index: 4, kind: input, shape index: {}]
  %s5 = inlined_call_operand.hbm [shape: bf16[512,512], index: 5, kind: input, shape index: {}]
  %s6 = inlined_call_operand.hbm [shape: f32[1,512], index: 6, kind: input, shape index: {}]
  %s7 = inlined_call_operand.hbm [shape: bf16[512,128], index: 7, kind: input, shape index: {}]
  %s8 = inlined_call_operand.hbm [shape: f32[1,128], index: 8, kind: input, shape index: {}]
  %s9 = inlined_call_operand.hbm [shape: f32[8,128], index: 9, kind: output, shape index: {}]
  %s10 = sld [smem:[#allocation0]]
  $region82: #{tpu_custom_call.1} parent=0
    _
  %s12 = ssub.s32 1, %s10
  %s13 = scalar_select 0, %s12, %s10
  $region1: #{tpu_custom_call.1} parent=0
    #allocation2 [shape = 'u8[40960]{0}', space=vmem, size = 0xa000, scoped, tag = 'input window, operand 0, single buffered']
    #allocation3 [shape = 's32[1]{0}', space=sflag, size = 0x4, scoped, tag = 'scoped memory for tpu_custom_call.1']
    #allocation4 [shape = 's32[1]{0}', space=sflag, size = 0x4, scoped, tag = 'scoped memory for tpu_custom_call.1']
    #allocation5 [shape = 'u8[16384]{0}', space=vmem, size = 0x4000, scoped, tag = 'input window, operand 1, single buffered']
    #allocation6 [shape = 's32[1]{0}', space=sflag, size = 0x4, scoped, tag = 'scoped memory for tpu_custom_call.1']
    #allocation7 [shape = 'u8[1310720]{0}', space=vmem, size = 0x140000, scoped, tag = 'input window, operand 2, single buffered']
    #allocation8 [shape = 'u8[2048]{0}', space=vmem, size = 0x800, scoped, tag = 'input window, operand 3, single buffered']
    #allocation9 [shape = 's32[1]{0}', space=sflag, size = 0x4, scoped, tag = 'scoped memory for tpu_custom_call.1']
    #allocation10 [shape = 'u8[524288]{0}', space=vmem, size = 0x80000, scoped, tag = 'input window, operand 4, single buffered']
    #allocation11 [shape = 'u8[524288]{0}', space=vmem, size = 0x80000, scoped, tag = 'input window, operand 5, single buffered']
    #allocation12 [shape = 's32[1]{0}', space=sflag, size = 0x4, scoped, tag = 'scoped memory for tpu_custom_call.1']
    #allocation13 [shape = 'u8[2048]{0}', space=vmem, size = 0x800, scoped, tag = 'input window, operand 6, single buffered']
    #allocation14 [shape = 'u8[131072]{0}', space=vmem, size = 0x20000, scoped, tag = 'input window, operand 7, single buffered']
    #allocation15 [shape = 's32[1]{0}', space=sflag, size = 0x4, scoped, tag = 'scoped memory for tpu_custom_call.1']
    #allocation16 [shape = 'u8[512]{0}', space=vmem, size = 0x400, scoped, tag = 'input window, operand 8, single buffered']
    #allocation17 [shape = 'u8[4096]{0}', space=vmem, size = 0x1000, scoped, tag = 'output window, operand 0, single buffered']
    %14 = vsyncpa [#allocation3], 0
    %15 = vsyncpa [#allocation6], 0
    %16 = vsyncpa [#allocation9], 0
    %17 = vsyncpa [#allocation12], 0
    %18 = vsyncpa [#allocation15], 0
    %19 = vsyncpa [#allocation4], 0
    // Predicated region
    $region2: #{tpu_custom_call.1} parent=1 // pred_check
      _
    $region3: #{tpu_custom_call.1} parent=1 // pred_check_branch
      %21 = sbr.rel (0) target = $region5
    $region4: #{tpu_custom_call.1} parent=1 // pred_region
      %s23 = ssub.s32 1280, 1280
      %24 = vsyncadd [#allocation3], %s23
      %s26 = sshll.u32 [#allocation2], 4
      %s27 = int_to_ptr.vmem [resolvable:$true] %s26
      %29 = dma.hbm_to_vmem [thread:$0]  %s0, 1280, %s27, [#allocation3]
    $region5: #{tpu_custom_call.1} parent=1 // pred_fallthru
      _
    // Predicated region
    $region6: #{tpu_custom_call.1} parent=1 // pred_check
      _
    $region7: #{tpu_custom_call.1} parent=1 // pred_check_branch
      %31 = sbr.rel (0) target = $region9
    $region8: #{tpu_custom_call.1} parent=1 // pred_region
      %s33 = ssub.s32 512, 512
      %34 = vsyncadd [#allocation6], %s33
      %s36 = sshll.u32 [#allocation5], 4
      %s37 = int_to_ptr.vmem [resolvable:$true] %s36
      %39 = dma.hbm_to_vmem [thread:$0]  %s1, 512, %s37, [#allocation6]
    $region9: #{tpu_custom_call.1} parent=1 // pred_fallthru
      _
    // Predicated region
    $region10: #{tpu_custom_call.1} parent=1 // pred_check
      _
    $region11: #{tpu_custom_call.1} parent=1 // pred_check_branch
      %41 = sbr.rel (0) target = $region13
    $region12: #{tpu_custom_call.1} parent=1 // pred_region
      %s43 = ssub.s32 40960, 40960
      %44 = vsyncadd [#allocation6], %s43
      %s45 = sshll.u32 [#allocation7], 4
      %s46 = int_to_ptr.vmem [resolvable:$true] %s45
      %51 = dma.hbm_to_vmem [thread:$0]  %s2, 40960, %s46, [#allocation6], 256, 256, 16
    $region13: #{tpu_custom_call.1} parent=1 // pred_fallthru
      _
    // Predicated region
    $region14: #{tpu_custom_call.1} parent=1 // pred_check
      _
    $region15: #{tpu_custom_call.1} parent=1 // pred_check_branch
      %53 = sbr.rel (0) target = $region17
    $region16: #{tpu_custom_call.1} parent=1 // pred_region
      %s55 = ssub.s32 64, 64
      %56 = vsyncadd [#allocation9], %s55
      %s58 = sshll.u32 [#allocation8], 4
      %s59 = int_to_ptr.vmem [resolvable:$true] %s58
      %61 = dma.hbm_to_vmem [thread:$0]  %s3, 64, %s59, [#allocation9]
    $region17: #{tpu_custom_call.1} parent=1 // pred_fallthru
      _
    // Predicated region
    $region18: #{tpu_custom_call.1} parent=1 // pred_check
      _
    $region19: #{tpu_custom_call.1} parent=1 // pred_check_branch
      %63 = sbr.rel (0) target = $region21
    $region20: #{tpu_custom_call.1} parent=1 // pred_region
      %s65 = ssub.s32 16384, 16384
      %66 = vsyncadd [#allocation9], %s65
      %s67 = sshll.u32 [#allocation10], 4
      %s68 = int_to_ptr.vmem [resolvable:$true] %s67
      %73 = dma.hbm_to_vmem [thread:$0]  %s4, 16384, %s68, [#allocation9], 256, 256, 16
    $region21: #{tpu_custom_call.1} parent=1 // pred_fallthru
      _
    // Predicated region
    $region22: #{tpu_custom_call.1} parent=1 // pred_check
      _
    $region23: #{tpu_custom_call.1} parent=1 // pred_check_branch
      %75 = sbr.rel (0) target = $region25
    $region24: #{tpu_custom_call.1} parent=1 // pred_region
      %s77 = ssub.s32 16384, 16384
      %78 = vsyncadd [#allocation12], %s77
      %s79 = sshll.u32 [#allocation11], 4
      %s80 = int_to_ptr.vmem [resolvable:$true] %s79
      %85 = dma.hbm_to_vmem [thread:$0]  %s5, 16384, %s80, [#allocation12], 256, 256, 16
    $region25: #{tpu_custom_call.1} parent=1 // pred_fallthru
      _
    // Predicated region
    $region26: #{tpu_custom_call.1} parent=1 // pred_check
      _
    $region27: #{tpu_custom_call.1} parent=1 // pred_check_branch
      %87 = sbr.rel (0) target = $region29
    $region28: #{tpu_custom_call.1} parent=1 // pred_region
      %s89 = ssub.s32 64, 64
      %90 = vsyncadd [#allocation12], %s89
      %s92 = sshll.u32 [#allocation13], 4
      %s93 = int_to_ptr.vmem [resolvable:$true] %s92
      %95 = dma.hbm_to_vmem [thread:$0]  %s6, 64, %s93, [#allocation12]
    $region29: #{tpu_custom_call.1} parent=1 // pred_fallthru
      _
    // Predicated region
    $region30: #{tpu_custom_call.1} parent=1 // pred_check
      _
    $region31: #{tpu_custom_call.1} parent=1 // pred_check_branch
      %97 = sbr.rel (0) target = $region33
    $region32: #{tpu_custom_call.1} parent=1 // pred_region
      %s99 = ssub.s32 4096, 4096
      %100 = vsyncadd [#allocation15], %s99
      %s101 = sshll.u32 [#allocation14], 4
      %s102 = int_to_ptr.vmem [resolvable:$true] %s101
      %107 = dma.hbm_to_vmem [thread:$0]  %s7, 4096, %s102, [#allocation15], 64, 64, 4
    $region33: #{tpu_custom_call.1} parent=1 // pred_fallthru
      _
    // Predicated region
    $region34: #{tpu_custom_call.1} parent=1 // pred_check
      _
    $region35: #{tpu_custom_call.1} parent=1 // pred_check_branch
      %109 = sbr.rel (0) target = $region37
    $region36: #{tpu_custom_call.1} parent=1 // pred_region
      %s111 = ssub.s32 16, 16
      %112 = vsyncadd [#allocation15], %s111
      %s114 = sshll.u32 [#allocation16], 4
      %s115 = int_to_ptr.vmem [resolvable:$true] %s114
      %117 = dma.hbm_to_vmem [thread:$0]  %s8, 16, %s115, [#allocation15]
    $region37: #{tpu_custom_call.1} parent=1 // pred_fallthru
      _
    // Predicated region
    $region38: #{tpu_custom_call.1} parent=1 // pred_check
      _
    $region39: #{tpu_custom_call.1} parent=1 // pred_check_branch
      %119 = sbr.rel (0) target = $region41
    $region40: #{tpu_custom_call.1} parent=1 // pred_region
      %120 = dma.done [#allocation3], 1280
    $region41: #{tpu_custom_call.1} parent=1 // pred_fallthru
      _
    // Predicated region
    $region42: #{tpu_custom_call.1} parent=1 // pred_check
      _
    $region43: #{tpu_custom_call.1} parent=1 // pred_check_branch
      %122 = sbr.rel (0) target = $region45
    $region44: #{tpu_custom_call.1} parent=1 // pred_region
      %123 = dma.done [#allocation6], 512
    $region45: #{tpu_custom_call.1} parent=1 // pred_fallthru
      _
    // Predicated region
    $region46: #{tpu_custom_call.1} parent=1 // pred_check
      _
    $region47: #{tpu_custom_call.1} parent=1 // pred_check_branch
      %125 = sbr.rel (0) target = $region49
    $region48: #{tpu_custom_call.1} parent=1 // pred_region
      %126 = dma.done [#allocation6], 40960
    $region49: #{tpu_custom_call.1} parent=1 // pred_fallthru
      _
    // Predicated region
    $region50: #{tpu_custom_call.1} parent=1 // pred_check
      _
    $region51: #{tpu_custom_call.1} parent=1 // pred_check_branch
      %128 = sbr.rel (0) target = $region53
    $region52: #{tpu_custom_call.1} parent=1 // pred_region
      %129 = dma.done [#allocation9], 64
    $region53: #{tpu_custom_call.1} parent=1 // pred_fallthru
      _
    // Predicated region
    $region54: #{tpu_custom_call.1} parent=1 // pred_check
      _
    $region55: #{tpu_custom_call.1} parent=1 // pred_check_branch
      %131 = sbr.rel (0) target = $region57
    $region56: #{tpu_custom_call.1} parent=1 // pred_region
      %132 = dma.done [#allocation9], 16384
    $region57: #{tpu_custom_call.1} parent=1 // pred_fallthru
      _
    // Predicated region
    $region58: #{tpu_custom_call.1} parent=1 // pred_check
      _
    $region59: #{tpu_custom_call.1} parent=1 // pred_check_branch
      %134 = sbr.rel (0) target = $region61
    $region60: #{tpu_custom_call.1} parent=1 // pred_region
      %135 = dma.done [#allocation12], 16384
    $region61: #{tpu_custom_call.1} parent=1 // pred_fallthru
      _
    // Predicated region
    $region62: #{tpu_custom_call.1} parent=1 // pred_check
      _
    $region63: #{tpu_custom_call.1} parent=1 // pred_check_branch
      %137 = sbr.rel (0) target = $region65
    $region64: #{tpu_custom_call.1} parent=1 // pred_region
      %138 = dma.done [#allocation12], 64
    $region65: #{tpu_custom_call.1} parent=1 // pred_fallthru
      _
    // Predicated region
    $region66: #{tpu_custom_call.1} parent=1 // pred_check
      _
    $region67: #{tpu_custom_call.1} parent=1 // pred_check_branch
      %140 = sbr.rel (0) target = $region69
    $region68: #{tpu_custom_call.1} parent=1 // pred_region
      %141 = dma.done [#allocation15], 4096
    $region69: #{tpu_custom_call.1} parent=1 // pred_fallthru
      _
    // Predicated region
    $region70: #{tpu_custom_call.1} parent=1 // pred_check
      _
    $region71: #{tpu_custom_call.1} parent=1 // pred_check_branch
      %143 = sbr.rel (0) target = $region73
    $region72: #{tpu_custom_call.1} parent=1 // pred_region
      %144 = dma.done [#allocation15], 16
    $region73: #{tpu_custom_call.1} parent=1 // pred_fallthru
      _
    %v146 = vld [vmem:[#allocation2] sm:$0xff]
    %v147 = vld [vmem:[#allocation2 + $0x8] sm:$0xff]
    %v148 = vld [vmem:[#allocation2 + $0x10] sm:$0xff]
    %v149 = vld [vmem:[#allocation2 + $0x18] sm:$0xff]
    %v150 = vld [vmem:[#allocation2 + $0x20] sm:$0xff]
    %v151 = vld [vmem:[#allocation2 + $0x28] sm:$0xff]
    %v152 = vld [vmem:[#allocation2 + $0x30] sm:$0xff]
    %v153 = vld [vmem:[#allocation2 + $0x38] sm:$0xff]
    %v154 = vld [vmem:[#allocation2 + $0x40] sm:$0xff]
    %v155 = vld [vmem:[#allocation2 + $0x48] sm:$0xff]
    %v156 = vpack.c.bf16 %v146, %v146
    %v157 = vpack.c.bf16 %v147, %v147
    %v158 = vpack.c.bf16 %v148, %v148
    %v159 = vpack.c.bf16 %v149, %v149
    %v160 = vpack.c.bf16 %v150, %v150
    %v161 = vpack.c.bf16 %v151, %v151
    %v162 = vpack.c.bf16 %v152, %v152
    %v163 = vpack.c.bf16 %v153, %v153
    %v164 = vpack.c.bf16 %v154, %v154
    %v165 = vpack.c.bf16 %v155, %v155
    %v166 = vld [vmem:[#allocation7] sm:$0xff]
    %v167 = vld [vmem:[#allocation7 + $0x8] sm:$0xff]
    %v168 = vld [vmem:[#allocation7 + $0x10] sm:$0xff]
    %v169 = vld [vmem:[#allocation7 + $0x18] sm:$0xff]
    %v170 = vld [vmem:[#allocation7 + $0x20] sm:$0xff]
    %v171 = vld [vmem:[#allocation7 + $0x28] sm:$0xff]
    %v172 = vld [vmem:[#allocation7 + $0x30] sm:$0xff]
    %v173 = vld [vmem:[#allocation7 + $0x38] sm:$0xff]
    %v174 = vld [vmem:[#allocation7 + $0x40] sm:$0xff]
    %v175 = vld [vmem:[#allocation7 + $0x48] sm:$0xff]
    %v176 = vld [vmem:[#allocation7 + $0x50] sm:$0xff]
    %v177 = vld [vmem:[#allocation7 + $0x58] sm:$0xff]
    %v178 = vld [vmem:[#allocation7 + $0x60] sm:$0xff]
    %v179 = vld [vmem:[#allocation7 + $0x68] sm:$0xff]
    %v180 = vld [vmem:[#allocation7 + $0x70] sm:$0xff]
    %v181 = vld [vmem:[#allocation7 + $0x78] sm:$0xff]
    %v182 = vld [vmem:[#allocation7 + $0x80] sm:$0xff]
    %v183 = vld [vmem:[#allocation7 + $0x88] sm:$0xff]
    %v184 = vld [vmem:[#allocation7 + $0x90] sm:$0xff]
    %v185 = vld [vmem:[#allocation7 + $0x98] sm:$0xff]
    %v186 = vld [vmem:[#allocation7 + $0xa0] sm:$0xff]
    %v187 = vld [vmem:[#allocation7 + $0xa8] sm:$0xff]
    %v188 = vld [vmem:[#allocation7 + $0xb0] sm:$0xff]
    %v189 = vld [vmem:[#allocation7 + $0xb8] sm:$0xff]
    %v190 = vld [vmem:[#allocation7 + $0xc0] sm:$0xff]
    %v191 = vld [vmem:[#allocation7 + $0xc8] sm:$0xff]
    %v192 = vld [vmem:[#allocation7 + $0xd0] sm:$0xff]
    %v193 = vld [vmem:[#allocation7 + $0xd8] sm:$0xff]
    %v194 = vld [vmem:[#allocation7 + $0xe0] sm:$0xff]
    %v195 = vld [vmem:[#allocation7 + $0xe8] sm:$0xff]
    %v196 = vld [vmem:[#allocation7 + $0xf0] sm:$0xff]
    %v197 = vld [vmem:[#allocation7 + $0xf8] sm:$0xff]
    %v198 = vld [vmem:[#allocation7 + $0x100] sm:$0xff]
    %v199 = vld [vmem:[#allocation7 + $0x108] sm:$0xff]
    %v200 = vld [vmem:[#allocation7 + $0x110] sm:$0xff]
    %v201 = vld [vmem:[#allocation7 + $0x118] sm:$0xff]
    %v202 = vld [vmem:[#allocation7 + $0x120] sm:$0xff]
    %v203 = vld [vmem:[#allocation7 + $0x128] sm:$0xff]
    %v204 = vld [vmem:[#allocation7 + $0x130] sm:$0xff]
    %v205 = vld [vmem:[#allocation7 + $0x138] sm:$0xff]
    %v206 = vld [vmem:[#allocation7 + $0x140] sm:$0xff]
    %v207 = vld [vmem:[#allocation7 + $0x148] sm:$0xff]
    %v208 = vld [vmem:[#allocation7 + $0x150] sm:$0xff]
    %v209 = vld [vmem:[#allocation7 + $0x158] sm:$0xff]
    %v210 = vld [vmem:[#allocation7 + $0x160] sm:$0xff]
    %v211 = vld [vmem:[#allocation7 + $0x168] sm:$0xff]
    %v212 = vld [vmem:[#allocation7 + $0x170] sm:$0xff]
    %v213 = vld [vmem:[#allocation7 + $0x178] sm:$0xff]
    %v214 = vld [vmem:[#allocation7 + $0x180] sm:$0xff]
    %v215 = vld [vmem:[#allocation7 + $0x188] sm:$0xff]
    %v216 = vld [vmem:[#allocation7 + $0x190] sm:$0xff]
    %v217 = vld [vmem:[#allocation7 + $0x198] sm:$0xff]
    %v218 = vld [vmem:[#allocation7 + $0x1a0] sm:$0xff]
    %v219 = vld [vmem:[#allocation7 + $0x1a8] sm:$0xff]
    %v220 = vld [vmem:[#allocation7 + $0x1b0] sm:$0xff]
    %v221 = vld [vmem:[#allocation7 + $0x1b8] sm:$0xff]
    %v222 = vld [vmem:[#allocation7 + $0x1c0] sm:$0xff]
    %v223 = vld [vmem:[#allocation7 + $0x1c8] sm:$0xff]
    %v224 = vld [vmem:[#allocation7 + $0x1d0] sm:$0xff]
    %v225 = vld [vmem:[#allocation7 + $0x1d8] sm:$0xff]
    %v226 = vld [vmem:[#allocation7 + $0x1e0] sm:$0xff]
    %v227 = vld [vmem:[#allocation7 + $0x1e8] sm:$0xff]
    %v228 = vld [vmem:[#allocation7 + $0x1f0] sm:$0xff]
    %v229 = vld [vmem:[#allocation7 + $0x1f8] sm:$0xff]
    %v230 = vld [vmem:[#allocation7 + $0x200] sm:$0xff]
    %v231 = vld [vmem:[#allocation7 + $0x208] sm:$0xff]
    %v232 = vld [vmem:[#allocation7 + $0x210] sm:$0xff]
    %v233 = vld [vmem:[#allocation7 + $0x218] sm:$0xff]
    %v234 = vld [vmem:[#allocation7 + $0x220] sm:$0xff]
    %v235 = vld [vmem:[#allocation7 + $0x228] sm:$0xff]
    %v236 = vld [vmem:[#allocation7 + $0x230] sm:$0xff]
    %v237 = vld [vmem:[#allocation7 + $0x238] sm:$0xff]
    %v238 = vld [vmem:[#allocation7 + $0x240] sm:$0xff]
    %v239 = vld [vmem:[#allocation7 + $0x248] sm:$0xff]
    %v240 = vld [vmem:[#allocation7 + $0x250] sm:$0xff]
    %v241 = vld [vmem:[#allocation7 + $0x258] sm:$0xff]
    %v242 = vld [vmem:[#allocation7 + $0x260] sm:$0xff]
    %v243 = vld [vmem:[#allocation7 + $0x268] sm:$0xff]
    %v244 = vld [vmem:[#allocation7 + $0x270] sm:$0xff]
    %v245 = vld [vmem:[#allocation7 + $0x278] sm:$0xff]
    %v246 = vld [vmem:[#allocation7 + $0x280] sm:$0xff]
    %v247 = vld [vmem:[#allocation7 + $0x288] sm:$0xff]
    %v248 = vld [vmem:[#allocation7 + $0x290] sm:$0xff]
    %v249 = vld [vmem:[#allocation7 + $0x298] sm:$0xff]
    %v250 = vld [vmem:[#allocation7 + $0x2a0] sm:$0xff]
    %v251 = vld [vmem:[#allocation7 + $0x2a8] sm:$0xff]
    %v252 = vld [vmem:[#allocation7 + $0x2b0] sm:$0xff]
    %v253 = vld [vmem:[#allocation7 + $0x2b8] sm:$0xff]
    %v254 = vld [vmem:[#allocation7 + $0x2c0] sm:$0xff]
    %v255 = vld [vmem:[#allocation7 + $0x2c8] sm:$0xff]
    %v256 = vld [vmem:[#allocation7 + $0x2d0] sm:$0xff]
    %v257 = vld [vmem:[#allocation7 + $0x2d8] sm:$0xff]
    %v258 = vld [vmem:[#allocation7 + $0x2e0] sm:$0xff]
    %v259 = vld [vmem:[#allocation7 + $0x2e8] sm:$0xff]
    %v260 = vld [vmem:[#allocation7 + $0x2f0] sm:$0xff]
    %v261 = vld [vmem:[#allocation7 + $0x2f8] sm:$0xff]
    %v262 = vld [vmem:[#allocation7 + $0x300] sm:$0xff]
    %v263 = vld [vmem:[#allocation7 + $0x308] sm:$0xff]
    %v264 = vld [vmem:[#allocation7 + $0x310] sm:$0xff]
    %v265 = vld [vmem:[#allocation7 + $0x318] sm:$0xff]
    %v266 = vld [vmem:[#allocation7 + $0x320] sm:$0xff]
    %v267 = vld [vmem:[#allocation7 + $0x328] sm:$0xff]
    %v268 = vld [vmem:[#allocation7 + $0x330] sm:$0xff]
    %v269 = vld [vmem:[#allocation7 + $0x338] sm:$0xff]
    %v270 = vld [vmem:[#allocation7 + $0x340] sm:$0xff]
    %v271 = vld [vmem:[#allocation7 + $0x348] sm:$0xff]
    %v272 = vld [vmem:[#allocation7 + $0x350] sm:$0xff]
    %v273 = vld [vmem:[#allocation7 + $0x358] sm:$0xff]
    %v274 = vld [vmem:[#allocation7 + $0x360] sm:$0xff]
    %v275 = vld [vmem:[#allocation7 + $0x368] sm:$0xff]
    %v276 = vld [vmem:[#allocation7 + $0x370] sm:$0xff]
    %v277 = vld [vmem:[#allocation7 + $0x378] sm:$0xff]
    %v278 = vld [vmem:[#allocation7 + $0x380] sm:$0xff]
    %v279 = vld [vmem:[#allocation7 + $0x388] sm:$0xff]
    %v280 = vld [vmem:[#allocation7 + $0x390] sm:$0xff]
    %v281 = vld [vmem:[#allocation7 + $0x398] sm:$0xff]
    %v282 = vld [vmem:[#allocation7 + $0x3a0] sm:$0xff]
    %v283 = vld [vmem:[#allocation7 + $0x3a8] sm:$0xff]
    %v284 = vld [vmem:[#allocation7 + $0x3b0] sm:$0xff]
    %v285 = vld [vmem:[#allocation7 + $0x3b8] sm:$0xff]
    %v286 = vld [vmem:[#allocation7 + $0x3c0] sm:$0xff]
    %v287 = vld [vmem:[#allocation7 + $0x3c8] sm:$0xff]
    %v288 = vld [vmem:[#allocation7 + $0x3d0] sm:$0xff]
    %v289 = vld [vmem:[#allocation7 + $0x3d8] sm:$0xff]
    %v290 = vld [vmem:[#allocation7 + $0x3e0] sm:$0xff]
    %v291 = vld [vmem:[#allocation7 + $0x3e8] sm:$0xff]
    %v292 = vld [vmem:[#allocation7 + $0x3f0] sm:$0xff]
    %v293 = vld [vmem:[#allocation7 + $0x3f8] sm:$0xff]
    %v294 = vld [vmem:[#allocation7 + $0x400] sm:$0xff]
    %v295 = vld [vmem:[#allocation7 + $0x408] sm:$0xff]
    %v296 = vld [vmem:[#allocation7 + $0x410] sm:$0xff]
    %v297 = vld [vmem:[#allocation7 + $0x418] sm:$0xff]
    %v298 = vld [vmem:[#allocation7 + $0x420] sm:$0xff]
    %v299 = vld [vmem:[#allocation7 + $0x428] sm:$0xff]
    %v300 = vld [vmem:[#allocation7 + $0x430] sm:$0xff]
    %v301 = vld [vmem:[#allocation7 + $0x438] sm:$0xff]
    %v302 = vld [vmem:[#allocation7 + $0x440] sm:$0xff]
    %v303 = vld [vmem:[#allocation7 + $0x448] sm:$0xff]
    %v304 = vld [vmem:[#allocation7 + $0x450] sm:$0xff]
    %v305 = vld [vmem:[#allocation7 + $0x458] sm:$0xff]
    %v306 = vld [vmem:[#allocation7 + $0x460] sm:$0xff]
    %v307 = vld [vmem:[#allocation7 + $0x468] sm:$0xff]
    %v308 = vld [vmem:[#allocation7 + $0x470] sm:$0xff]
    %v309 = vld [vmem:[#allocation7 + $0x478] sm:$0xff]
    %v310 = vld [vmem:[#allocation7 + $0x480] sm:$0xff]
    %v311 = vld [vmem:[#allocation7 + $0x488] sm:$0xff]
    %v312 = vld [vmem:[#allocation7 + $0x490] sm:$0xff]
    %v313 = vld [vmem:[#allocation7 + $0x498] sm:$0xff]
    %v314 = vld [vmem:[#allocation7 + $0x4a0] sm:$0xff]
    %v315 = vld [vmem:[#allocation7 + $0x4a8] sm:$0xff]
    %v316 = vld [vmem:[#allocation7 + $0x4b0] sm:$0xff]
    %v317 = vld [vmem:[#allocation7 + $0x4b8] sm:$0xff]
    %v318 = vld [vmem:[#allocation7 + $0x4c0] sm:$0xff]
    %v319 = vld [vmem:[#allocation7 + $0x4c8] sm:$0xff]
    %v320 = vld [vmem:[#allocation7 + $0x4d0] sm:$0xff]
    %v321 = vld [vmem:[#allocation7 + $0x4d8] sm:$0xff]
    %v322 = vld [vmem:[#allocation7 + $0x4e0] sm:$0xff]
    %v323 = vld [vmem:[#allocation7 + $0x4e8] sm:$0xff]
    %v324 = vld [vmem:[#allocation7 + $0x4f0] sm:$0xff]
    %v325 = vld [vmem:[#allocation7 + $0x4f8] sm:$0xff]
    %v326 = vld [vmem:[#allocation7 + $0x500] sm:$0xff]
    %v327 = vld [vmem:[#allocation7 + $0x508] sm:$0xff]
    %v328 = vld [vmem:[#allocation7 + $0x510] sm:$0xff]
    %v329 = vld [vmem:[#allocation7 + $0x518] sm:$0xff]
    %v330 = vld [vmem:[#allocation7 + $0x520] sm:$0xff]
    %v331 = vld [vmem:[#allocation7 + $0x528] sm:$0xff]
    %v332 = vld [vmem:[#allocation7 + $0x530] sm:$0xff]
    %v333 = vld [vmem:[#allocation7 + $0x538] sm:$0xff]
    %v334 = vld [vmem:[#allocation7 + $0x540] sm:$0xff]
    %v335 = vld [vmem:[#allocation7 + $0x548] sm:$0xff]
    %v336 = vld [vmem:[#allocation7 + $0x550] sm:$0xff]
    %v337 = vld [vmem:[#allocation7 + $0x558] sm:$0xff]
    %v338 = vld [vmem:[#allocation7 + $0x560] sm:$0xff]
    %v339 = vld [vmem:[#allocation7 + $0x568] sm:$0xff]
    %v340 = vld [vmem:[#allocation7 + $0x570] sm:$0xff]
    %v341 = vld [vmem:[#allocation7 + $0x578] sm:$0xff]
    %v342 = vld [vmem:[#allocation7 + $0x580] sm:$0xff]
    %v343 = vld [vmem:[#allocation7 + $0x588] sm:$0xff]
    %v344 = vld [vmem:[#allocation7 + $0x590] sm:$0xff]
    %v345 = vld [vmem:[#allocation7 + $0x598] sm:$0xff]
    %v346 = vld [vmem:[#allocation7 + $0x5a0] sm:$0xff]
    %v347 = vld [vmem:[#allocation7 + $0x5a8] sm:$0xff]
    %v348 = vld [vmem:[#allocation7 + $0x5b0] sm:$0xff]
    %v349 = vld [vmem:[#allocation7 + $0x5b8] sm:$0xff]
    %v350 = vld [vmem:[#allocation7 + $0x5c0] sm:$0xff]
    %v351 = vld [vmem:[#allocation7 + $0x5c8] sm:$0xff]
    %v352 = vld [vmem:[#allocation7 + $0x5d0] sm:$0xff]
    %v353 = vld [vmem:[#allocation7 + $0x5d8] sm:$0xff]
    %v354 = vld [vmem:[#allocation7 + $0x5e0] sm:$0xff]
    %v355 = vld [vmem:[#allocation7 + $0x5e8] sm:$0xff]
    %v356 = vld [vmem:[#allocation7 + $0x5f0] sm:$0xff]
    %v357 = vld [vmem:[#allocation7 + $0x5f8] sm:$0xff]
    %v358 = vld [vmem:[#allocation7 + $0x600] sm:$0xff]
    %v359 = vld [vmem:[#allocation7 + $0x608] sm:$0xff]
    %v360 = vld [vmem:[#allocation7 + $0x610] sm:$0xff]
    %v361 = vld [vmem:[#allocation7 + $0x618] sm:$0xff]
    %v362 = vld [vmem:[#allocation7 + $0x620] sm:$0xff]
    %v363 = vld [vmem:[#allocation7 + $0x628] sm:$0xff]
    %v364 = vld [vmem:[#allocation7 + $0x630] sm:$0xff]
    %v365 = vld [vmem:[#allocation7 + $0x638] sm:$0xff]
    %v366 = vld [vmem:[#allocation7 + $0x640] sm:$0xff]
    %v367 = vld [vmem:[#allocation7 + $0x648] sm:$0xff]
    %v368 = vld [vmem:[#allocation7 + $0x650] sm:$0xff]
    %v369 = vld [vmem:[#allocation7 + $0x658] sm:$0xff]
    %v370 = vld [vmem:[#allocation7 + $0x660] sm:$0xff]
    %v371 = vld [vmem:[#allocation7 + $0x668] sm:$0xff]
    %v372 = vld [vmem:[#allocation7 + $0x670] sm:$0xff]
    %v373 = vld [vmem:[#allocation7 + $0x678] sm:$0xff]
    %v374 = vld [vmem:[#allocation7 + $0x680] sm:$0xff]
    %v375 = vld [vmem:[#allocation7 + $0x688] sm:$0xff]
    %v376 = vld [vmem:[#allocation7 + $0x690] sm:$0xff]
    %v377 = vld [vmem:[#allocation7 + $0x698] sm:$0xff]
    %v378 = vld [vmem:[#allocation7 + $0x6a0] sm:$0xff]
    %v379 = vld [vmem:[#allocation7 + $0x6a8] sm:$0xff]
    %v380 = vld [vmem:[#allocation7 + $0x6b0] sm:$0xff]
    %v381 = vld [vmem:[#allocation7 + $0x6b8] sm:$0xff]
    %v382 = vld [vmem:[#allocation7 + $0x6c0] sm:$0xff]
    %v383 = vld [vmem:[#allocation7 + $0x6c8] sm:$0xff]
    %v384 = vld [vmem:[#allocation7 + $0x6d0] sm:$0xff]
    %v385 = vld [vmem:[#allocation7 + $0x6d8] sm:$0xff]
    %v386 = vld [vmem:[#allocation7 + $0x6e0] sm:$0xff]
    %v387 = vld [vmem:[#allocation7 + $0x6e8] sm:$0xff]
    %v388 = vld [vmem:[#allocation7 + $0x6f0] sm:$0xff]
    %v389 = vld [vmem:[#allocation7 + $0x6f8] sm:$0xff]
    %v390 = vld [vmem:[#allocation7 + $0x700] sm:$0xff]
    %v391 = vld [vmem:[#allocation7 + $0x708] sm:$0xff]
    %v392 = vld [vmem:[#allocation7 + $0x710] sm:$0xff]
    %v393 = vld [vmem:[#allocation7 + $0x718] sm:$0xff]
    %v394 = vld [vmem:[#allocation7 + $0x720] sm:$0xff]
    %v395 = vld [vmem:[#allocation7 + $0x728] sm:$0xff]
    %v396 = vld [vmem:[#allocation7 + $0x730] sm:$0xff]
    %v397 = vld [vmem:[#allocation7 + $0x738] sm:$0xff]
    %v398 = vld [vmem:[#allocation7 + $0x740] sm:$0xff]
    %v399 = vld [vmem:[#allocation7 + $0x748] sm:$0xff]
    %v400 = vld [vmem:[#allocation7 + $0x750] sm:$0xff]
    %v401 = vld [vmem:[#allocation7 + $0x758] sm:$0xff]
    %v402 = vld [vmem:[#allocation7 + $0x760] sm:$0xff]
    %v403 = vld [vmem:[#allocation7 + $0x768] sm:$0xff]
    %v404 = vld [vmem:[#allocation7 + $0x770] sm:$0xff]
    %v405 = vld [vmem:[#allocation7 + $0x778] sm:$0xff]
    %v406 = vld [vmem:[#allocation7 + $0x780] sm:$0xff]
    %v407 = vld [vmem:[#allocation7 + $0x788] sm:$0xff]
    %v408 = vld [vmem:[#allocation7 + $0x790] sm:$0xff]
    %v409 = vld [vmem:[#allocation7 + $0x798] sm:$0xff]
    %v410 = vld [vmem:[#allocation7 + $0x7a0] sm:$0xff]
    %v411 = vld [vmem:[#allocation7 + $0x7a8] sm:$0xff]
    %v412 = vld [vmem:[#allocation7 + $0x7b0] sm:$0xff]
    %v413 = vld [vmem:[#allocation7 + $0x7b8] sm:$0xff]
    %v414 = vld [vmem:[#allocation7 + $0x7c0] sm:$0xff]
    %v415 = vld [vmem:[#allocation7 + $0x7c8] sm:$0xff]
    %v416 = vld [vmem:[#allocation7 + $0x7d0] sm:$0xff]
    %v417 = vld [vmem:[#allocation7 + $0x7d8] sm:$0xff]
    %v418 = vld [vmem:[#allocation7 + $0x7e0] sm:$0xff]
    %v419 = vld [vmem:[#allocation7 + $0x7e8] sm:$0xff]
    %v420 = vld [vmem:[#allocation7 + $0x7f0] sm:$0xff]
    %v421 = vld [vmem:[#allocation7 + $0x7f8] sm:$0xff]
    %v422 = vld [vmem:[#allocation7 + $0x800] sm:$0xff]
    %v423 = vld [vmem:[#allocation7 + $0x808] sm:$0xff]
    %v424 = vld [vmem:[#allocation7 + $0x810] sm:$0xff]
    %v425 = vld [vmem:[#allocation7 + $0x818] sm:$0xff]
    %v426 = vld [vmem:[#allocation7 + $0x820] sm:$0xff]
    %v427 = vld [vmem:[#allocation7 + $0x828] sm:$0xff]
    %v428 = vld [vmem:[#allocation7 + $0x830] sm:$0xff]
    %v429 = vld [vmem:[#allocation7 + $0x838] sm:$0xff]
    %v430 = vld [vmem:[#allocation7 + $0x840] sm:$0xff]
    %v431 = vld [vmem:[#allocation7 + $0x848] sm:$0xff]
    %v432 = vld [vmem:[#allocation7 + $0x850] sm:$0xff]
    %v433 = vld [vmem:[#allocation7 + $0x858] sm:$0xff]
    %v434 = vld [vmem:[#allocation7 + $0x860] sm:$0xff]
    %v435 = vld [vmem:[#allocation7 + $0x868] sm:$0xff]
    %v436 = vld [vmem:[#allocation7 + $0x870] sm:$0xff]
    %v437 = vld [vmem:[#allocation7 + $0x878] sm:$0xff]
    %v438 = vld [vmem:[#allocation7 + $0x880] sm:$0xff]
    %v439 = vld [vmem:[#allocation7 + $0x888] sm:$0xff]
    %v440 = vld [vmem:[#allocation7 + $0x890] sm:$0xff]
    %v441 = vld [vmem:[#allocation7 + $0x898] sm:$0xff]
    %v442 = vld [vmem:[#allocation7 + $0x8a0] sm:$0xff]
    %v443 = vld [vmem:[#allocation7 + $0x8a8] sm:$0xff]
    %v444 = vld [vmem:[#allocation7 + $0x8b0] sm:$0xff]
    %v445 = vld [vmem:[#allocation7 + $0x8b8] sm:$0xff]
    %v446 = vld [vmem:[#allocation7 + $0x8c0] sm:$0xff]
    %v447 = vld [vmem:[#allocation7 + $0x8c8] sm:$0xff]
    %v448 = vld [vmem:[#allocation7 + $0x8d0] sm:$0xff]
    %v449 = vld [vmem:[#allocation7 + $0x8d8] sm:$0xff]
    %v450 = vld [vmem:[#allocation7 + $0x8e0] sm:$0xff]
    %v451 = vld [vmem:[#allocation7 + $0x8e8] sm:$0xff]
    %v452 = vld [vmem:[#allocation7 + $0x8f0] sm:$0xff]
    %v453 = vld [vmem:[#allocation7 + $0x8f8] sm:$0xff]
    %v454 = vld [vmem:[#allocation7 + $0x900] sm:$0xff]
    %v455 = vld [vmem:[#allocation7 + $0x908] sm:$0xff]
    %v456 = vld [vmem:[#allocation7 + $0x910] sm:$0xff]
    %v457 = vld [vmem:[#allocation7 + $0x918] sm:$0xff]
    %v458 = vld [vmem:[#allocation7 + $0x920] sm:$0xff]
    %v459 = vld [vmem:[#allocation7 + $0x928] sm:$0xff]
    %v460 = vld [vmem:[#allocation7 + $0x930] sm:$0xff]
    %v461 = vld [vmem:[#allocation7 + $0x938] sm:$0xff]
    %v462 = vld [vmem:[#allocation7 + $0x940] sm:$0xff]
    %v463 = vld [vmem:[#allocation7 + $0x948] sm:$0xff]
    %v464 = vld [vmem:[#allocation7 + $0x950] sm:$0xff]
    %v465 = vld [vmem:[#allocation7 + $0x958] sm:$0xff]
    %v466 = vld [vmem:[#allocation7 + $0x960] sm:$0xff]
    %v467 = vld [vmem:[#allocation7 + $0x968] sm:$0xff]
    %v468 = vld [vmem:[#allocation7 + $0x970] sm:$0xff]
    %v469 = vld [vmem:[#allocation7 + $0x978] sm:$0xff]
    %v470 = vld [vmem:[#allocation7 + $0x980] sm:$0xff]
    %v471 = vld [vmem:[#allocation7 + $0x988] sm:$0xff]
    %v472 = vld [vmem:[#allocation7 + $0x990] sm:$0xff]
    %v473 = vld [vmem:[#allocation7 + $0x998] sm:$0xff]
    %v474 = vld [vmem:[#allocation7 + $0x9a0] sm:$0xff]
    %v475 = vld [vmem:[#allocation7 + $0x9a8] sm:$0xff]
    %v476 = vld [vmem:[#allocation7 + $0x9b0] sm:$0xff]
    %v477 = vld [vmem:[#allocation7 + $0x9b8] sm:$0xff]
    %v478 = vld [vmem:[#allocation7 + $0x9c0] sm:$0xff]
    %v479 = vld [vmem:[#allocation7 + $0x9c8] sm:$0xff]
    %v480 = vld [vmem:[#allocation7 + $0x9d0] sm:$0xff]
    %v481 = vld [vmem:[#allocation7 + $0x9d8] sm:$0xff]
    %v482 = vld [vmem:[#allocation7 + $0x9e0] sm:$0xff]
    %v483 = vld [vmem:[#allocation7 + $0x9e8] sm:$0xff]
    %v484 = vld [vmem:[#allocation7 + $0x9f0] sm:$0xff]
    %v485 = vld [vmem:[#allocation7 + $0x9f8] sm:$0xff]
    %v486 = vld [vmem:[#allocation8] sm:$0xf]
    %v488 = vlaneseq
    %v489 = vshrl.u32 %v488, 7
    %v490 = vsub.s32 0, %v489
    %v491 = vrot.slane %v486, %v490
    %v492 = vlaneseq
    %v493 = vshrl.u32 %v492, 7
    %v494 = vsub.s32 1, %v493
    %v495 = vrot.slane %v486, %v494
    %v496 = vlaneseq
    %v497 = vshrl.u32 %v496, 7
    %v498 = vsub.s32 2, %v497
    %v499 = vrot.slane %v486, %v498
    %v500 = vlaneseq
    %v501 = vshrl.u32 %v500, 7
    %v502 = vsub.s32 3, %v501
    %v503 = vrot.slane %v486, %v502
    %v828 = vunpack.c.l.b16 %v166
    %v829 = vunpack.c.h.b16 %v166
    %v830 = vunpack.c.l.b16 %v167
    %v831 = vunpack.c.h.b16 %v167
    %v832 = vunpack.c.l.b16 %v168
    %v833 = vunpack.c.h.b16 %v168
    %v834 = vunpack.c.l.b16 %v169
    %v835 = vunpack.c.h.b16 %v169
    %v836 = vunpack.c.l.b16 %v170
    %v837 = vunpack.c.h.b16 %v170
    %v838 = vunpack.c.l.b16 %v171
    %v839 = vunpack.c.h.b16 %v171
    %v840 = vunpack.c.l.b16 %v172
    %v841 = vunpack.c.h.b16 %v172
    %v842 = vunpack.c.l.b16 %v173
    %v843 = vunpack.c.h.b16 %v173
    %v844 = vunpack.c.l.b16 %v174
    %v845 = vunpack.c.h.b16 %v174
    %v846 = vunpack.c.l.b16 %v175
    %v847 = vunpack.c.h.b16 %v175
    %v848 = vunpack.c.l.b16 %v176
    %v849 = vunpack.c.h.b16 %v176
    %v850 = vunpack.c.l.b16 %v177
    %v851 = vunpack.c.h.b16 %v177
    %v852 = vunpack.c.l.b16 %v178
    %v853 = vunpack.c.h.b16 %v178
    %v854 = vunpack.c.l.b16 %v179
    %v855 = vunpack.c.h.b16 %v179
    %v856 = vunpack.c.l.b16 %v180
    %v857 = vunpack.c.h.b16 %v180
    %v858 = vunpack.c.l.b16 %v181
    %v859 = vunpack.c.h.b16 %v181
    %v860 = vunpack.c.l.b16 %v182
    %v861 = vunpack.c.h.b16 %v182
    %v862 = vunpack.c.l.b16 %v183
    %v863 = vunpack.c.h.b16 %v183
    %v864 = vunpack.c.l.b16 %v184
    %v865 = vunpack.c.h.b16 %v184
    %v866 = vunpack.c.l.b16 %v185
    %v867 = vunpack.c.h.b16 %v185
    %v868 = vunpack.c.l.b16 %v186
    %v869 = vunpack.c.h.b16 %v186
    %v870 = vunpack.c.l.b16 %v187
    %v871 = vunpack.c.h.b16 %v187
    %v872 = vunpack.c.l.b16 %v188
    %v873 = vunpack.c.h.b16 %v188
    %v874 = vunpack.c.l.b16 %v189
    %v875 = vunpack.c.h.b16 %v189
    %v876 = vunpack.c.l.b16 %v190
    %v877 = vunpack.c.h.b16 %v190
    %v878 = vunpack.c.l.b16 %v191
    %v879 = vunpack.c.h.b16 %v191
    %v880 = vunpack.c.l.b16 %v192
    %v881 = vunpack.c.h.b16 %v192
    %v882 = vunpack.c.l.b16 %v193
    %v883 = vunpack.c.h.b16 %v193
    %v884 = vunpack.c.l.b16 %v194
    %v885 = vunpack.c.h.b16 %v194
    %v886 = vunpack.c.l.b16 %v195
    %v887 = vunpack.c.h.b16 %v195
    %v888 = vunpack.c.l.b16 %v196
    %v889 = vunpack.c.h.b16 %v196
    %v890 = vunpack.c.l.b16 %v197
    %v891 = vunpack.c.h.b16 %v197
    %v892 = vunpack.c.l.b16 %v198
    %v893 = vunpack.c.h.b16 %v198
    %v894 = vunpack.c.l.b16 %v199
    %v895 = vunpack.c.h.b16 %v199
    %v896 = vunpack.c.l.b16 %v200
    %v897 = vunpack.c.h.b16 %v200
    %v898 = vunpack.c.l.b16 %v201
    %v899 = vunpack.c.h.b16 %v201
    %v900 = vunpack.c.l.b16 %v202
    %v901 = vunpack.c.h.b16 %v202
    %v902 = vunpack.c.l.b16 %v203
    %v903 = vunpack.c.h.b16 %v203
    %v904 = vunpack.c.l.b16 %v204
    %v905 = vunpack.c.h.b16 %v204
    %v906 = vunpack.c.l.b16 %v205
    %v907 = vunpack.c.h.b16 %v205
    %v908 = vunpack.c.l.b16 %v206
    %v909 = vunpack.c.h.b16 %v206
    %v910 = vunpack.c.l.b16 %v207
    %v911 = vunpack.c.h.b16 %v207
    %v912 = vunpack.c.l.b16 %v208
    %v913 = vunpack.c.h.b16 %v208
    %v914 = vunpack.c.l.b16 %v209
    %v915 = vunpack.c.h.b16 %v209
    %v916 = vunpack.c.l.b16 %v210
    %v917 = vunpack.c.h.b16 %v210
    %v918 = vunpack.c.l.b16 %v211
    %v919 = vunpack.c.h.b16 %v211
    %v920 = vunpack.c.l.b16 %v212
    %v921 = vunpack.c.h.b16 %v212
    %v922 = vunpack.c.l.b16 %v213
    %v923 = vunpack.c.h.b16 %v213
    %v924 = vunpack.c.l.b16 %v214
    %v925 = vunpack.c.h.b16 %v214
    %v926 = vunpack.c.l.b16 %v215
    %v927 = vunpack.c.h.b16 %v215
    %v928 = vunpack.c.l.b16 %v216
    %v929 = vunpack.c.h.b16 %v216
    %v930 = vunpack.c.l.b16 %v217
    %v931 = vunpack.c.h.b16 %v217
    %v932 = vunpack.c.l.b16 %v218
    %v933 = vunpack.c.h.b16 %v218
    %v934 = vunpack.c.l.b16 %v219
    %v935 = vunpack.c.h.b16 %v219
    %v936 = vunpack.c.l.b16 %v220
    %v937 = vunpack.c.h.b16 %v220
    %v938 = vunpack.c.l.b16 %v221
    %v939 = vunpack.c.h.b16 %v221
    %v940 = vunpack.c.l.b16 %v222
    %v941 = vunpack.c.h.b16 %v222
    %v942 = vunpack.c.l.b16 %v223
    %v943 = vunpack.c.h.b16 %v223
    %v944 = vunpack.c.l.b16 %v224
    %v945 = vunpack.c.h.b16 %v224
    %v946 = vunpack.c.l.b16 %v225
    %v947 = vunpack.c.h.b16 %v225
    %v948 = vunpack.c.l.b16 %v226
    %v949 = vunpack.c.h.b16 %v226
    %v950 = vunpack.c.l.b16 %v227
    %v951 = vunpack.c.h.b16 %v227
    %v952 = vunpack.c.l.b16 %v228
    %v953 = vunpack.c.h.b16 %v228
    %v954 = vunpack.c.l.b16 %v229
    %v955 = vunpack.c.h.b16 %v229
    %v956 = vunpack.c.l.b16 %v230
    %v957 = vunpack.c.h.b16 %v230
    %v958 = vunpack.c.l.b16 %v231
    %v959 = vunpack.c.h.b16 %v231
    %v960 = vunpack.c.l.b16 %v232
    %v961 = vunpack.c.h.b16 %v232
    %v962 = vunpack.c.l.b16 %v233
    %v963 = vunpack.c.h.b16 %v233
    %v964 = vunpack.c.l.b16 %v234
    %v965 = vunpack.c.h.b16 %v234
    %v966 = vunpack.c.l.b16 %v235
    %v967 = vunpack.c.h.b16 %v235
    %v968 = vunpack.c.l.b16 %v236
    %v969 = vunpack.c.h.b16 %v236
    %v970 = vunpack.c.l.b16 %v237
    %v971 = vunpack.c.h.b16 %v237
    %v972 = vunpack.c.l.b16 %v238
    %v973 = vunpack.c.h.b16 %v238
    %v974 = vunpack.c.l.b16 %v239
    %v975 = vunpack.c.h.b16 %v239
    %v976 = vunpack.c.l.b16 %v240
    %v977 = vunpack.c.h.b16 %v240
    %v978 = vunpack.c.l.b16 %v241
    %v979 = vunpack.c.h.b16 %v241
    %v980 = vunpack.c.l.b16 %v242
    %v981 = vunpack.c.h.b16 %v242
    %v982 = vunpack.c.l.b16 %v243
    %v983 = vunpack.c.h.b16 %v243
    %v984 = vunpack.c.l.b16 %v244
    %v985 = vunpack.c.h.b16 %v244
    %v986 = vunpack.c.l.b16 %v245
    %v987 = vunpack.c.h.b16 %v245
    %v988 = vunpack.c.l.b16 %v246
    %v989 = vunpack.c.h.b16 %v246
    %v990 = vunpack.c.l.b16 %v247
    %v991 = vunpack.c.h.b16 %v247
    %v992 = vunpack.c.l.b16 %v248
    %v993 = vunpack.c.h.b16 %v248
    %v994 = vunpack.c.l.b16 %v249
    %v995 = vunpack.c.h.b16 %v249
    %v996 = vunpack.c.l.b16 %v250
    %v997 = vunpack.c.h.b16 %v250
    %v998 = vunpack.c.l.b16 %v251
    %v999 = vunpack.c.h.b16 %v251
    %v1000 = vunpack.c.l.b16 %v252
    %v1001 = vunpack.c.h.b16 %v252
    %v1002 = vunpack.c.l.b16 %v253
    %v1003 = vunpack.c.h.b16 %v253
    %v1004 = vunpack.c.l.b16 %v254
    %v1005 = vunpack.c.h.b16 %v254
    %v1006 = vunpack.c.l.b16 %v255
    %v1007 = vunpack.c.h.b16 %v255
    %v1008 = vunpack.c.l.b16 %v256
    %v1009 = vunpack.c.h.b16 %v256
    %v1010 = vunpack.c.l.b16 %v257
    %v1011 = vunpack.c.h.b16 %v257
    %v1012 = vunpack.c.l.b16 %v258
    %v1013 = vunpack.c.h.b16 %v258
    %v1014 = vunpack.c.l.b16 %v259
    %v1015 = vunpack.c.h.b16 %v259
    %v1016 = vunpack.c.l.b16 %v260
    %v1017 = vunpack.c.h.b16 %v260
    %v1018 = vunpack.c.l.b16 %v261
    %v1019 = vunpack.c.h.b16 %v261
    %v1020 = vunpack.c.l.b16 %v262
    %v1021 = vunpack.c.h.b16 %v262
    %v1022 = vunpack.c.l.b16 %v263
    %v1023 = vunpack.c.h.b16 %v263
    %v1024 = vunpack.c.l.b16 %v264
    %v1025 = vunpack.c.h.b16 %v264
    %v1026 = vunpack.c.l.b16 %v265
    %v1027 = vunpack.c.h.b16 %v265
    %v1028 = vunpack.c.l.b16 %v266
    %v1029 = vunpack.c.h.b16 %v266
    %v1030 = vunpack.c.l.b16 %v267
    %v1031 = vunpack.c.h.b16 %v267
    %v1032 = vunpack.c.l.b16 %v268
    %v1033 = vunpack.c.h.b16 %v268
    %v1034 = vunpack.c.l.b16 %v269
    %v1035 = vunpack.c.h.b16 %v269
    %v1036 = vunpack.c.l.b16 %v270
    %v1037 = vunpack.c.h.b16 %v270
    %v1038 = vunpack.c.l.b16 %v271
    %v1039 = vunpack.c.h.b16 %v271
    %v1040 = vunpack.c.l.b16 %v272
    %v1041 = vunpack.c.h.b16 %v272
    %v1042 = vunpack.c.l.b16 %v273
    %v1043 = vunpack.c.h.b16 %v273
    %v1044 = vunpack.c.l.b16 %v274
    %v1045 = vunpack.c.h.b16 %v274
    %v1046 = vunpack.c.l.b16 %v275
    %v1047 = vunpack.c.h.b16 %v275
    %v1048 = vunpack.c.l.b16 %v276
    %v1049 = vunpack.c.h.b16 %v276
    %v1050 = vunpack.c.l.b16 %v277
    %v1051 = vunpack.c.h.b16 %v277
    %v1052 = vunpack.c.l.b16 %v278
    %v1053 = vunpack.c.h.b16 %v278
    %v1054 = vunpack.c.l.b16 %v279
    %v1055 = vunpack.c.h.b16 %v279
    %v1056 = vunpack.c.l.b16 %v280
    %v1057 = vunpack.c.h.b16 %v280
    %v1058 = vunpack.c.l.b16 %v281
    %v1059 = vunpack.c.h.b16 %v281
    %v1060 = vunpack.c.l.b16 %v282
    %v1061 = vunpack.c.h.b16 %v282
    %v1062 = vunpack.c.l.b16 %v283
    %v1063 = vunpack.c.h.b16 %v283
    %v1064 = vunpack.c.l.b16 %v284
    %v1065 = vunpack.c.h.b16 %v284
    %v1066 = vunpack.c.l.b16 %v285
    %v1067 = vunpack.c.h.b16 %v285
    %v1068 = vunpack.c.l.b16 %v286
    %v1069 = vunpack.c.h.b16 %v286
    %v1070 = vunpack.c.l.b16 %v287
    %v1071 = vunpack.c.h.b16 %v287
    %v1072 = vunpack.c.l.b16 %v288
    %v1073 = vunpack.c.h.b16 %v288
    %v1074 = vunpack.c.l.b16 %v289
    %v1075 = vunpack.c.h.b16 %v289
    %v1076 = vunpack.c.l.b16 %v290
    %v1077 = vunpack.c.h.b16 %v290
    %v1078 = vunpack.c.l.b16 %v291
    %v1079 = vunpack.c.h.b16 %v291
    %v1080 = vunpack.c.l.b16 %v292
    %v1081 = vunpack.c.h.b16 %v292
    %v1082 = vunpack.c.l.b16 %v293
    %v1083 = vunpack.c.h.b16 %v293
    %v1084 = vunpack.c.l.b16 %v294
    %v1085 = vunpack.c.h.b16 %v294
    %v1086 = vunpack.c.l.b16 %v295
    %v1087 = vunpack.c.h.b16 %v295
    %v1088 = vunpack.c.l.b16 %v296
    %v1089 = vunpack.c.h.b16 %v296
    %v1090 = vunpack.c.l.b16 %v297
    %v1091 = vunpack.c.h.b16 %v297
    %v1092 = vunpack.c.l.b16 %v298
    %v1093 = vunpack.c.h.b16 %v298
    %v1094 = vunpack.c.l.b16 %v299
    %v1095 = vunpack.c.h.b16 %v299
    %v1096 = vunpack.c.l.b16 %v300
    %v1097 = vunpack.c.h.b16 %v300
    %v1098 = vunpack.c.l.b16 %v301
    %v1099 = vunpack.c.h.b16 %v301
    %v1100 = vunpack.c.l.b16 %v302
    %v1101 = vunpack.c.h.b16 %v302
    %v1102 = vunpack.c.l.b16 %v303
    %v1103 = vunpack.c.h.b16 %v303
    %v1104 = vunpack.c.l.b16 %v304
    %v1105 = vunpack.c.h.b16 %v304
    %v1106 = vunpack.c.l.b16 %v305
    %v1107 = vunpack.c.h.b16 %v305
    %v1108 = vunpack.c.l.b16 %v306
    %v1109 = vunpack.c.h.b16 %v306
    %v1110 = vunpack.c.l.b16 %v307
    %v1111 = vunpack.c.h.b16 %v307
    %v1112 = vunpack.c.l.b16 %v308
    %v1113 = vunpack.c.h.b16 %v308
    %v1114 = vunpack.c.l.b16 %v309
    %v1115 = vunpack.c.h.b16 %v309
    %v1116 = vunpack.c.l.b16 %v310
    %v1117 = vunpack.c.h.b16 %v310
    %v1118 = vunpack.c.l.b16 %v311
    %v1119 = vunpack.c.h.b16 %v311
    %v1120 = vunpack.c.l.b16 %v312
    %v1121 = vunpack.c.h.b16 %v312
    %v1122 = vunpack.c.l.b16 %v313
    %v1123 = vunpack.c.h.b16 %v313
    %v1124 = vunpack.c.l.b16 %v314
    %v1125 = vunpack.c.h.b16 %v314
    %v1126 = vunpack.c.l.b16 %v315
    %v1127 = vunpack.c.h.b16 %v315
    %v1128 = vunpack.c.l.b16 %v316
    %v1129 = vunpack.c.h.b16 %v316
    %v1130 = vunpack.c.l.b16 %v317
    %v1131 = vunpack.c.h.b16 %v317
    %v1132 = vunpack.c.l.b16 %v318
    %v1133 = vunpack.c.h.b16 %v318
    %v1134 = vunpack.c.l.b16 %v319
    %v1135 = vunpack.c.h.b16 %v319
    %v1136 = vunpack.c.l.b16 %v320
    %v1137 = vunpack.c.h.b16 %v320
    %v1138 = vunpack.c.l.b16 %v321
    %v1139 = vunpack.c.h.b16 %v321
    %v1140 = vunpack.c.l.b16 %v322
    %v1141 = vunpack.c.h.b16 %v322
    %v1142 = vunpack.c.l.b16 %v323
    %v1143 = vunpack.c.h.b16 %v323
    %v1144 = vunpack.c.l.b16 %v324
    %v1145 = vunpack.c.h.b16 %v324
    %v1146 = vunpack.c.l.b16 %v325
    %v1147 = vunpack.c.h.b16 %v325
    %v1148 = vunpack.c.l.b16 %v326
    %v1149 = vunpack.c.h.b16 %v326
    %v1150 = vunpack.c.l.b16 %v327
    %v1151 = vunpack.c.h.b16 %v327
    %v1152 = vunpack.c.l.b16 %v328
    %v1153 = vunpack.c.h.b16 %v328
    %v1154 = vunpack.c.l.b16 %v329
    %v1155 = vunpack.c.h.b16 %v329
    %v1156 = vunpack.c.l.b16 %v330
    %v1157 = vunpack.c.h.b16 %v330
    %v1158 = vunpack.c.l.b16 %v331
    %v1159 = vunpack.c.h.b16 %v331
    %v1160 = vunpack.c.l.b16 %v332
    %v1161 = vunpack.c.h.b16 %v332
    %v1162 = vunpack.c.l.b16 %v333
    %v1163 = vunpack.c.h.b16 %v333
    %v1164 = vunpack.c.l.b16 %v334
    %v1165 = vunpack.c.h.b16 %v334
    %v1166 = vunpack.c.l.b16 %v335
    %v1167 = vunpack.c.h.b16 %v335
    %v1168 = vunpack.c.l.b16 %v336
    %v1169 = vunpack.c.h.b16 %v336
    %v1170 = vunpack.c.l.b16 %v337
    %v1171 = vunpack.c.h.b16 %v337
    %v1172 = vunpack.c.l.b16 %v338
    %v1173 = vunpack.c.h.b16 %v338
    %v1174 = vunpack.c.l.b16 %v339
    %v1175 = vunpack.c.h.b16 %v339
    %v1176 = vunpack.c.l.b16 %v340
    %v1177 = vunpack.c.h.b16 %v340
    %v1178 = vunpack.c.l.b16 %v341
    %v1179 = vunpack.c.h.b16 %v341
    %v1180 = vunpack.c.l.b16 %v342
    %v1181 = vunpack.c.h.b16 %v342
    %v1182 = vunpack.c.l.b16 %v343
    %v1183 = vunpack.c.h.b16 %v343
    %v1184 = vunpack.c.l.b16 %v344
    %v1185 = vunpack.c.h.b16 %v344
    %v1186 = vunpack.c.l.b16 %v345
    %v1187 = vunpack.c.h.b16 %v345
    %v1188 = vunpack.c.l.b16 %v346
    %v1189 = vunpack.c.h.b16 %v346
    %v1190 = vunpack.c.l.b16 %v347
    %v1191 = vunpack.c.h.b16 %v347
    %v1192 = vunpack.c.l.b16 %v348
    %v1193 = vunpack.c.h.b16 %v348
    %v1194 = vunpack.c.l.b16 %v349
    %v1195 = vunpack.c.h.b16 %v349
    %v1196 = vunpack.c.l.b16 %v350
    %v1197 = vunpack.c.h.b16 %v350
    %v1198 = vunpack.c.l.b16 %v351
    %v1199 = vunpack.c.h.b16 %v351
    %v1200 = vunpack.c.l.b16 %v352
    %v1201 = vunpack.c.h.b16 %v352
    %v1202 = vunpack.c.l.b16 %v353
    %v1203 = vunpack.c.h.b16 %v353
    %v1204 = vunpack.c.l.b16 %v354
    %v1205 = vunpack.c.h.b16 %v354
    %v1206 = vunpack.c.l.b16 %v355
    %v1207 = vunpack.c.h.b16 %v355
    %v1208 = vunpack.c.l.b16 %v356
    %v1209 = vunpack.c.h.b16 %v356
    %v1210 = vunpack.c.l.b16 %v357
    %v1211 = vunpack.c.h.b16 %v357
    %v1212 = vunpack.c.l.b16 %v358
    %v1213 = vunpack.c.h.b16 %v358
    %v1214 = vunpack.c.l.b16 %v359
    %v1215 = vunpack.c.h.b16 %v359
    %v1216 = vunpack.c.l.b16 %v360
    %v1217 = vunpack.c.h.b16 %v360
    %v1218 = vunpack.c.l.b16 %v361
    %v1219 = vunpack.c.h.b16 %v361
    %v1220 = vunpack.c.l.b16 %v362
    %v1221 = vunpack.c.h.b16 %v362
    %v1222 = vunpack.c.l.b16 %v363
    %v1223 = vunpack.c.h.b16 %v363
    %v1224 = vunpack.c.l.b16 %v364
    %v1225 = vunpack.c.h.b16 %v364
    %v1226 = vunpack.c.l.b16 %v365
    %v1227 = vunpack.c.h.b16 %v365
    %v1228 = vunpack.c.l.b16 %v366
    %v1229 = vunpack.c.h.b16 %v366
    %v1230 = vunpack.c.l.b16 %v367
    %v1231 = vunpack.c.h.b16 %v367
    %v1232 = vunpack.c.l.b16 %v368
    %v1233 = vunpack.c.h.b16 %v368
    %v1234 = vunpack.c.l.b16 %v369
    %v1235 = vunpack.c.h.b16 %v369
    %v1236 = vunpack.c.l.b16 %v370
    %v1237 = vunpack.c.h.b16 %v370
    %v1238 = vunpack.c.l.b16 %v371
    %v1239 = vunpack.c.h.b16 %v371
    %v1240 = vunpack.c.l.b16 %v372
    %v1241 = vunpack.c.h.b16 %v372
    %v1242 = vunpack.c.l.b16 %v373
    %v1243 = vunpack.c.h.b16 %v373
    %v1244 = vunpack.c.l.b16 %v374
    %v1245 = vunpack.c.h.b16 %v374
    %v1246 = vunpack.c.l.b16 %v375
    %v1247 = vunpack.c.h.b16 %v375
    %v1248 = vunpack.c.l.b16 %v376
    %v1249 = vunpack.c.h.b16 %v376
    %v1250 = vunpack.c.l.b16 %v377
    %v1251 = vunpack.c.h.b16 %v377
    %v1252 = vunpack.c.l.b16 %v378
    %v1253 = vunpack.c.h.b16 %v378
    %v1254 = vunpack.c.l.b16 %v379
    %v1255 = vunpack.c.h.b16 %v379
    %v1256 = vunpack.c.l.b16 %v380
    %v1257 = vunpack.c.h.b16 %v380
    %v1258 = vunpack.c.l.b16 %v381
    %v1259 = vunpack.c.h.b16 %v381
    %v1260 = vunpack.c.l.b16 %v382
    %v1261 = vunpack.c.h.b16 %v382
    %v1262 = vunpack.c.l.b16 %v383
    %v1263 = vunpack.c.h.b16 %v383
    %v1264 = vunpack.c.l.b16 %v384
    %v1265 = vunpack.c.h.b16 %v384
    %v1266 = vunpack.c.l.b16 %v385
    %v1267 = vunpack.c.h.b16 %v385
    %v1268 = vunpack.c.l.b16 %v386
    %v1269 = vunpack.c.h.b16 %v386
    %v1270 = vunpack.c.l.b16 %v387
    %v1271 = vunpack.c.h.b16 %v387
    %v1272 = vunpack.c.l.b16 %v388
    %v1273 = vunpack.c.h.b16 %v388
    %v1274 = vunpack.c.l.b16 %v389
    %v1275 = vunpack.c.h.b16 %v389
    %v1276 = vunpack.c.l.b16 %v390
    %v1277 = vunpack.c.h.b16 %v390
    %v1278 = vunpack.c.l.b16 %v391
    %v1279 = vunpack.c.h.b16 %v391
    %v1280 = vunpack.c.l.b16 %v392
    %v1281 = vunpack.c.h.b16 %v392
    %v1282 = vunpack.c.l.b16 %v393
    %v1283 = vunpack.c.h.b16 %v393
    %v1284 = vunpack.c.l.b16 %v394
    %v1285 = vunpack.c.h.b16 %v394
    %v1286 = vunpack.c.l.b16 %v395
    %v1287 = vunpack.c.h.b16 %v395
    %v1288 = vunpack.c.l.b16 %v396
    %v1289 = vunpack.c.h.b16 %v396
    %v1290 = vunpack.c.l.b16 %v397
    %v1291 = vunpack.c.h.b16 %v397
    %v1292 = vunpack.c.l.b16 %v398
    %v1293 = vunpack.c.h.b16 %v398
    %v1294 = vunpack.c.l.b16 %v399
    %v1295 = vunpack.c.h.b16 %v399
    %v1296 = vunpack.c.l.b16 %v400
    %v1297 = vunpack.c.h.b16 %v400
    %v1298 = vunpack.c.l.b16 %v401
    %v1299 = vunpack.c.h.b16 %v401
    %v1300 = vunpack.c.l.b16 %v402
    %v1301 = vunpack.c.h.b16 %v402
    %v1302 = vunpack.c.l.b16 %v403
    %v1303 = vunpack.c.h.b16 %v403
    %v1304 = vunpack.c.l.b16 %v404
    %v1305 = vunpack.c.h.b16 %v404
    %v1306 = vunpack.c.l.b16 %v405
    %v1307 = vunpack.c.h.b16 %v405
    %v1308 = vunpack.c.l.b16 %v406
    %v1309 = vunpack.c.h.b16 %v406
    %v1310 = vunpack.c.l.b16 %v407
    %v1311 = vunpack.c.h.b16 %v407
    %v1312 = vunpack.c.l.b16 %v408
    %v1313 = vunpack.c.h.b16 %v408
    %v1314 = vunpack.c.l.b16 %v409
    %v1315 = vunpack.c.h.b16 %v409
    %v1316 = vunpack.c.l.b16 %v410
    %v1317 = vunpack.c.h.b16 %v410
    %v1318 = vunpack.c.l.b16 %v411
    %v1319 = vunpack.c.h.b16 %v411
    %v1320 = vunpack.c.l.b16 %v412
    %v1321 = vunpack.c.h.b16 %v412
    %v1322 = vunpack.c.l.b16 %v413
    %v1323 = vunpack.c.h.b16 %v413
    %v1324 = vunpack.c.l.b16 %v414
    %v1325 = vunpack.c.h.b16 %v414
    %v1326 = vunpack.c.l.b16 %v415
    %v1327 = vunpack.c.h.b16 %v415
    %v1328 = vunpack.c.l.b16 %v416
    %v1329 = vunpack.c.h.b16 %v416
    %v1330 = vunpack.c.l.b16 %v417
    %v1331 = vunpack.c.h.b16 %v417
    %v1332 = vunpack.c.l.b16 %v418
    %v1333 = vunpack.c.h.b16 %v418
    %v1334 = vunpack.c.l.b16 %v419
    %v1335 = vunpack.c.h.b16 %v419
    %v1336 = vunpack.c.l.b16 %v420
    %v1337 = vunpack.c.h.b16 %v420
    %v1338 = vunpack.c.l.b16 %v421
    %v1339 = vunpack.c.h.b16 %v421
    %v1340 = vunpack.c.l.b16 %v422
    %v1341 = vunpack.c.h.b16 %v422
    %v1342 = vunpack.c.l.b16 %v423
    %v1343 = vunpack.c.h.b16 %v423
    %v1344 = vunpack.c.l.b16 %v424
    %v1345 = vunpack.c.h.b16 %v424
    %v1346 = vunpack.c.l.b16 %v425
    %v1347 = vunpack.c.h.b16 %v425
    %v1348 = vunpack.c.l.b16 %v426
    %v1349 = vunpack.c.h.b16 %v426
    %v1350 = vunpack.c.l.b16 %v427
    %v1351 = vunpack.c.h.b16 %v427
    %v1352 = vunpack.c.l.b16 %v428
    %v1353 = vunpack.c.h.b16 %v428
    %v1354 = vunpack.c.l.b16 %v429
    %v1355 = vunpack.c.h.b16 %v429
    %v1356 = vunpack.c.l.b16 %v430
    %v1357 = vunpack.c.h.b16 %v430
    %v1358 = vunpack.c.l.b16 %v431
    %v1359 = vunpack.c.h.b16 %v431
    %v1360 = vunpack.c.l.b16 %v432
    %v1361 = vunpack.c.h.b16 %v432
    %v1362 = vunpack.c.l.b16 %v433
    %v1363 = vunpack.c.h.b16 %v433
    %v1364 = vunpack.c.l.b16 %v434
    %v1365 = vunpack.c.h.b16 %v434
    %v1366 = vunpack.c.l.b16 %v435
    %v1367 = vunpack.c.h.b16 %v435
    %v1368 = vunpack.c.l.b16 %v436
    %v1369 = vunpack.c.h.b16 %v436
    %v1370 = vunpack.c.l.b16 %v437
    %v1371 = vunpack.c.h.b16 %v437
    %v1372 = vunpack.c.l.b16 %v438
    %v1373 = vunpack.c.h.b16 %v438
    %v1374 = vunpack.c.l.b16 %v439
    %v1375 = vunpack.c.h.b16 %v439
    %v1376 = vunpack.c.l.b16 %v440
    %v1377 = vunpack.c.h.b16 %v440
    %v1378 = vunpack.c.l.b16 %v441
    %v1379 = vunpack.c.h.b16 %v441
    %v1380 = vunpack.c.l.b16 %v442
    %v1381 = vunpack.c.h.b16 %v442
    %v1382 = vunpack.c.l.b16 %v443
    %v1383 = vunpack.c.h.b16 %v443
    %v1384 = vunpack.c.l.b16 %v444
    %v1385 = vunpack.c.h.b16 %v444
    %v1386 = vunpack.c.l.b16 %v445
    %v1387 = vunpack.c.h.b16 %v445
    %v1388 = vunpack.c.l.b16 %v446
    %v1389 = vunpack.c.h.b16 %v446
    %v1390 = vunpack.c.l.b16 %v447
    %v1391 = vunpack.c.h.b16 %v447
    %v1392 = vunpack.c.l.b16 %v448
    %v1393 = vunpack.c.h.b16 %v448
    %v1394 = vunpack.c.l.b16 %v449
    %v1395 = vunpack.c.h.b16 %v449
    %v1396 = vunpack.c.l.b16 %v450
    %v1397 = vunpack.c.h.b16 %v450
    %v1398 = vunpack.c.l.b16 %v451
    %v1399 = vunpack.c.h.b16 %v451
    %v1400 = vunpack.c.l.b16 %v452
    %v1401 = vunpack.c.h.b16 %v452
    %v1402 = vunpack.c.l.b16 %v453
    %v1403 = vunpack.c.h.b16 %v453
    %v1404 = vunpack.c.l.b16 %v454
    %v1405 = vunpack.c.h.b16 %v454
    %v1406 = vunpack.c.l.b16 %v455
    %v1407 = vunpack.c.h.b16 %v455
    %v1408 = vunpack.c.l.b16 %v456
    %v1409 = vunpack.c.h.b16 %v456
    %v1410 = vunpack.c.l.b16 %v457
    %v1411 = vunpack.c.h.b16 %v457
    %v1412 = vunpack.c.l.b16 %v458
    %v1413 = vunpack.c.h.b16 %v458
    %v1414 = vunpack.c.l.b16 %v459
    %v1415 = vunpack.c.h.b16 %v459
    %v1416 = vunpack.c.l.b16 %v460
    %v1417 = vunpack.c.h.b16 %v460
    %v1418 = vunpack.c.l.b16 %v461
    %v1419 = vunpack.c.h.b16 %v461
    %v1420 = vunpack.c.l.b16 %v462
    %v1421 = vunpack.c.h.b16 %v462
    %v1422 = vunpack.c.l.b16 %v463
    %v1423 = vunpack.c.h.b16 %v463
    %v1424 = vunpack.c.l.b16 %v464
    %v1425 = vunpack.c.h.b16 %v464
    %v1426 = vunpack.c.l.b16 %v465
    %v1427 = vunpack.c.h.b16 %v465
    %v1428 = vunpack.c.l.b16 %v466
    %v1429 = vunpack.c.h.b16 %v466
    %v1430 = vunpack.c.l.b16 %v467
    %v1431 = vunpack.c.h.b16 %v467
    %v1432 = vunpack.c.l.b16 %v468
    %v1433 = vunpack.c.h.b16 %v468
    %v1434 = vunpack.c.l.b16 %v469
    %v1435 = vunpack.c.h.b16 %v469
    %v1436 = vunpack.c.l.b16 %v470
    %v1437 = vunpack.c.h.b16 %v470
    %v1438 = vunpack.c.l.b16 %v471
    %v1439 = vunpack.c.h.b16 %v471
    %v1440 = vunpack.c.l.b16 %v472
    %v1441 = vunpack.c.h.b16 %v472
    %v1442 = vunpack.c.l.b16 %v473
    %v1443 = vunpack.c.h.b16 %v473
    %v1444 = vunpack.c.l.b16 %v474
    %v1445 = vunpack.c.h.b16 %v474
    %v1446 = vunpack.c.l.b16 %v475
    %v1447 = vunpack.c.h.b16 %v475
    %v1448 = vunpack.c.l.b16 %v476
    %v1449 = vunpack.c.h.b16 %v476
    %v1450 = vunpack.c.l.b16 %v477
    %v1451 = vunpack.c.h.b16 %v477
    %v1452 = vunpack.c.l.b16 %v478
    %v1453 = vunpack.c.h.b16 %v478
    %v1454 = vunpack.c.l.b16 %v479
    %v1455 = vunpack.c.h.b16 %v479
    %v1456 = vunpack.c.l.b16 %v480
    %v1457 = vunpack.c.h.b16 %v480
    %v1458 = vunpack.c.l.b16 %v481
    %v1459 = vunpack.c.h.b16 %v481
    %v1460 = vunpack.c.l.b16 %v482
    %v1461 = vunpack.c.h.b16 %v482
    %v1462 = vunpack.c.l.b16 %v483
    %v1463 = vunpack.c.h.b16 %v483
    %v1464 = vunpack.c.l.b16 %v484
    %v1465 = vunpack.c.h.b16 %v484
    %v1466 = vunpack.c.l.b16 %v485
    %v1467 = vunpack.c.h.b16 %v485
    %v1468 = vpack.c.b16 %v832, %v828
    %v1469 = vpack.c.b16 %v833, %v829
    %v1470 = vpack.c.b16 %v834, %v830
    %v1471 = vpack.c.b16 %v835, %v831
    %v1472 = vpack.c.b16 %v840, %v836
    %v1473 = vpack.c.b16 %v841, %v837
    %v1474 = vpack.c.b16 %v842, %v838
    %v1475 = vpack.c.b16 %v843, %v839
    %v1476 = vpack.c.b16 %v848, %v844
    %v1477 = vpack.c.b16 %v849, %v845
    %v1478 = vpack.c.b16 %v850, %v846
    %v1479 = vpack.c.b16 %v851, %v847
    %v1480 = vpack.c.b16 %v856, %v852
    %v1481 = vpack.c.b16 %v857, %v853
    %v1482 = vpack.c.b16 %v858, %v854
    %v1483 = vpack.c.b16 %v859, %v855
    %v1484 = vpack.c.b16 %v864, %v860
    %v1485 = vpack.c.b16 %v865, %v861
    %v1486 = vpack.c.b16 %v866, %v862
    %v1487 = vpack.c.b16 %v867, %v863
    %v1488 = vpack.c.b16 %v872, %v868
    %v1489 = vpack.c.b16 %v873, %v869
    %v1490 = vpack.c.b16 %v874, %v870
    %v1491 = vpack.c.b16 %v875, %v871
    %v1492 = vpack.c.b16 %v880, %v876
    %v1493 = vpack.c.b16 %v881, %v877
    %v1494 = vpack.c.b16 %v882, %v878
    %v1495 = vpack.c.b16 %v883, %v879
    %v1496 = vpack.c.b16 %v888, %v884
    %v1497 = vpack.c.b16 %v889, %v885
    %v1498 = vpack.c.b16 %v890, %v886
    %v1499 = vpack.c.b16 %v891, %v887
    %v1500 = vpack.c.b16 %v896, %v892
    %v1501 = vpack.c.b16 %v897, %v893
    %v1502 = vpack.c.b16 %v898, %v894
    %v1503 = vpack.c.b16 %v899, %v895
    %v1504 = vpack.c.b16 %v904, %v900
    %v1505 = vpack.c.b16 %v905, %v901
    %v1506 = vpack.c.b16 %v906, %v902
    %v1507 = vpack.c.b16 %v907, %v903
    %v1508 = vpack.c.b16 %v912, %v908
    %v1509 = vpack.c.b16 %v913, %v909
    %v1510 = vpack.c.b16 %v914, %v910
    %v1511 = vpack.c.b16 %v915, %v911
    %v1512 = vpack.c.b16 %v920, %v916
    %v1513 = vpack.c.b16 %v921, %v917
    %v1514 = vpack.c.b16 %v922, %v918
    %v1515 = vpack.c.b16 %v923, %v919
    %v1516 = vpack.c.b16 %v928, %v924
    %v1517 = vpack.c.b16 %v929, %v925
    %v1518 = vpack.c.b16 %v930, %v926
    %v1519 = vpack.c.b16 %v931, %v927
    %v1520 = vpack.c.b16 %v936, %v932
    %v1521 = vpack.c.b16 %v937, %v933
    %v1522 = vpack.c.b16 %v938, %v934
    %v1523 = vpack.c.b16 %v939, %v935
    %v1524 = vpack.c.b16 %v944, %v940
    %v1525 = vpack.c.b16 %v945, %v941
    %v1526 = vpack.c.b16 %v946, %v942
    %v1527 = vpack.c.b16 %v947, %v943
    %v1528 = vpack.c.b16 %v952, %v948
    %v1529 = vpack.c.b16 %v953, %v949
    %v1530 = vpack.c.b16 %v954, %v950
    %v1531 = vpack.c.b16 %v955, %v951
    %v1532 = vpack.c.b16 %v960, %v956
    %v1533 = vpack.c.b16 %v961, %v957
    %v1534 = vpack.c.b16 %v962, %v958
    %v1535 = vpack.c.b16 %v963, %v959
    %v1536 = vpack.c.b16 %v968, %v964
    %v1537 = vpack.c.b16 %v969, %v965
    %v1538 = vpack.c.b16 %v970, %v966
    %v1539 = vpack.c.b16 %v971, %v967
    %v1540 = vpack.c.b16 %v976, %v972
    %v1541 = vpack.c.b16 %v977, %v973
    %v1542 = vpack.c.b16 %v978, %v974
    %v1543 = vpack.c.b16 %v979, %v975
    %v1544 = vpack.c.b16 %v984, %v980
    %v1545 = vpack.c.b16 %v985, %v981
    %v1546 = vpack.c.b16 %v986, %v982
    %v1547 = vpack.c.b16 %v987, %v983
    %v1548 = vpack.c.b16 %v992, %v988
    %v1549 = vpack.c.b16 %v993, %v989
    %v1550 = vpack.c.b16 %v994, %v990
    %v1551 = vpack.c.b16 %v995, %v991
    %v1552 = vpack.c.b16 %v1000, %v996
    %v1553 = vpack.c.b16 %v1001, %v997
    %v1554 = vpack.c.b16 %v1002, %v998
    %v1555 = vpack.c.b16 %v1003, %v999
    %v1556 = vpack.c.b16 %v1008, %v1004
    %v1557 = vpack.c.b16 %v1009, %v1005
    %v1558 = vpack.c.b16 %v1010, %v1006
    %v1559 = vpack.c.b16 %v1011, %v1007
    %v1560 = vpack.c.b16 %v1016, %v1012
    %v1561 = vpack.c.b16 %v1017, %v1013
    %v1562 = vpack.c.b16 %v1018, %v1014
    %v1563 = vpack.c.b16 %v1019, %v1015
    %v1564 = vpack.c.b16 %v1024, %v1020
    %v1565 = vpack.c.b16 %v1025, %v1021
    %v1566 = vpack.c.b16 %v1026, %v1022
    %v1567 = vpack.c.b16 %v1027, %v1023
    %v1568 = vpack.c.b16 %v1032, %v1028
    %v1569 = vpack.c.b16 %v1033, %v1029
    %v1570 = vpack.c.b16 %v1034, %v1030
    %v1571 = vpack.c.b16 %v1035, %v1031
    %v1572 = vpack.c.b16 %v1040, %v1036
    %v1573 = vpack.c.b16 %v1041, %v1037
    %v1574 = vpack.c.b16 %v1042, %v1038
    %v1575 = vpack.c.b16 %v1043, %v1039
    %v1576 = vpack.c.b16 %v1048, %v1044
    %v1577 = vpack.c.b16 %v1049, %v1045
    %v1578 = vpack.c.b16 %v1050, %v1046
    %v1579 = vpack.c.b16 %v1051, %v1047
    %v1580 = vpack.c.b16 %v1056, %v1052
    %v1581 = vpack.c.b16 %v1057, %v1053
    %v1582 = vpack.c.b16 %v1058, %v1054
    %v1583 = vpack.c.b16 %v1059, %v1055
    %v1584 = vpack.c.b16 %v1064, %v1060
    %v1585 = vpack.c.b16 %v1065, %v1061
    %v1586 = vpack.c.b16 %v1066, %v1062
    %v1587 = vpack.c.b16 %v1067, %v1063
    %v1588 = vpack.c.b16 %v1072, %v1068
    %v1589 = vpack.c.b16 %v1073, %v1069
    %v1590 = vpack.c.b16 %v1074, %v1070
    %v1591 = vpack.c.b16 %v1075, %v1071
    %v1592 = vpack.c.b16 %v1080, %v1076
    %v1593 = vpack.c.b16 %v1081, %v1077
    %v1594 = vpack.c.b16 %v1082, %v1078
    %v1595 = vpack.c.b16 %v1083, %v1079
    %v1596 = vpack.c.b16 %v1088, %v1084
    %v1597 = vpack.c.b16 %v1089, %v1085
    %v1598 = vpack.c.b16 %v1090, %v1086
    %v1599 = vpack.c.b16 %v1091, %v1087
    %v1600 = vpack.c.b16 %v1096, %v1092
    %v1601 = vpack.c.b16 %v1097, %v1093
    %v1602 = vpack.c.b16 %v1098, %v1094
    %v1603 = vpack.c.b16 %v1099, %v1095
    %v1604 = vpack.c.b16 %v1104, %v1100
    %v1605 = vpack.c.b16 %v1105, %v1101
    %v1606 = vpack.c.b16 %v1106, %v1102
    %v1607 = vpack.c.b16 %v1107, %v1103
    %v1608 = vpack.c.b16 %v1112, %v1108
    %v1609 = vpack.c.b16 %v1113, %v1109
    %v1610 = vpack.c.b16 %v1114, %v1110
    %v1611 = vpack.c.b16 %v1115, %v1111
    %v1612 = vpack.c.b16 %v1120, %v1116
    %v1613 = vpack.c.b16 %v1121, %v1117
    %v1614 = vpack.c.b16 %v1122, %v1118
    %v1615 = vpack.c.b16 %v1123, %v1119
    %v1616 = vpack.c.b16 %v1128, %v1124
    %v1617 = vpack.c.b16 %v1129, %v1125
    %v1618 = vpack.c.b16 %v1130, %v1126
    %v1619 = vpack.c.b16 %v1131, %v1127
    %v1620 = vpack.c.b16 %v1136, %v1132
    %v1621 = vpack.c.b16 %v1137, %v1133
    %v1622 = vpack.c.b16 %v1138, %v1134
    %v1623 = vpack.c.b16 %v1139, %v1135
    %v1624 = vpack.c.b16 %v1144, %v1140
    %v1625 = vpack.c.b16 %v1145, %v1141
    %v1626 = vpack.c.b16 %v1146, %v1142
    %v1627 = vpack.c.b16 %v1147, %v1143
    %v1628 = vpack.c.b16 %v1152, %v1148
    %v1629 = vpack.c.b16 %v1153, %v1149
    %v1630 = vpack.c.b16 %v1154, %v1150
    %v1631 = vpack.c.b16 %v1155, %v1151
    %v1632 = vpack.c.b16 %v1160, %v1156
    %v1633 = vpack.c.b16 %v1161, %v1157
    %v1634 = vpack.c.b16 %v1162, %v1158
    %v1635 = vpack.c.b16 %v1163, %v1159
    %v1636 = vpack.c.b16 %v1168, %v1164
    %v1637 = vpack.c.b16 %v1169, %v1165
    %v1638 = vpack.c.b16 %v1170, %v1166
    %v1639 = vpack.c.b16 %v1171, %v1167
    %v1640 = vpack.c.b16 %v1176, %v1172
    %v1641 = vpack.c.b16 %v1177, %v1173
    %v1642 = vpack.c.b16 %v1178, %v1174
    %v1643 = vpack.c.b16 %v1179, %v1175
    %v1644 = vpack.c.b16 %v1184, %v1180
    %v1645 = vpack.c.b16 %v1185, %v1181
    %v1646 = vpack.c.b16 %v1186, %v1182
    %v1647 = vpack.c.b16 %v1187, %v1183
    %v1648 = vpack.c.b16 %v1192, %v1188
    %v1649 = vpack.c.b16 %v1193, %v1189
    %v1650 = vpack.c.b16 %v1194, %v1190
    %v1651 = vpack.c.b16 %v1195, %v1191
    %v1652 = vpack.c.b16 %v1200, %v1196
    %v1653 = vpack.c.b16 %v1201, %v1197
    %v1654 = vpack.c.b16 %v1202, %v1198
    %v1655 = vpack.c.b16 %v1203, %v1199
    %v1656 = vpack.c.b16 %v1208, %v1204
    %v1657 = vpack.c.b16 %v1209, %v1205
    %v1658 = vpack.c.b16 %v1210, %v1206
    %v1659 = vpack.c.b16 %v1211, %v1207
    %v1660 = vpack.c.b16 %v1216, %v1212
    %v1661 = vpack.c.b16 %v1217, %v1213
    %v1662 = vpack.c.b16 %v1218, %v1214
    %v1663 = vpack.c.b16 %v1219, %v1215
    %v1664 = vpack.c.b16 %v1224, %v1220
    %v1665 = vpack.c.b16 %v1225, %v1221
    %v1666 = vpack.c.b16 %v1226, %v1222
    %v1667 = vpack.c.b16 %v1227, %v1223
    %v1668 = vpack.c.b16 %v1232, %v1228
    %v1669 = vpack.c.b16 %v1233, %v1229
    %v1670 = vpack.c.b16 %v1234, %v1230
    %v1671 = vpack.c.b16 %v1235, %v1231
    %v1672 = vpack.c.b16 %v1240, %v1236
    %v1673 = vpack.c.b16 %v1241, %v1237
    %v1674 = vpack.c.b16 %v1242, %v1238
    %v1675 = vpack.c.b16 %v1243, %v1239
    %v1676 = vpack.c.b16 %v1248, %v1244
    %v1677 = vpack.c.b16 %v1249, %v1245
    %v1678 = vpack.c.b16 %v1250, %v1246
    %v1679 = vpack.c.b16 %v1251, %v1247
    %v1680 = vpack.c.b16 %v1256, %v1252
    %v1681 = vpack.c.b16 %v1257, %v1253
    %v1682 = vpack.c.b16 %v1258, %v1254
    %v1683 = vpack.c.b16 %v1259, %v1255
    %v1684 = vpack.c.b16 %v1264, %v1260
    %v1685 = vpack.c.b16 %v1265, %v1261
    %v1686 = vpack.c.b16 %v1266, %v1262
    %v1687 = vpack.c.b16 %v1267, %v1263
    %v1688 = vpack.c.b16 %v1272, %v1268
    %v1689 = vpack.c.b16 %v1273, %v1269
    %v1690 = vpack.c.b16 %v1274, %v1270
    %v1691 = vpack.c.b16 %v1275, %v1271
    %v1692 = vpack.c.b16 %v1280, %v1276
    %v1693 = vpack.c.b16 %v1281, %v1277
    %v1694 = vpack.c.b16 %v1282, %v1278
    %v1695 = vpack.c.b16 %v1283, %v1279
    %v1696 = vpack.c.b16 %v1288, %v1284
    %v1697 = vpack.c.b16 %v1289, %v1285
    %v1698 = vpack.c.b16 %v1290, %v1286
    %v1699 = vpack.c.b16 %v1291, %v1287
    %v1700 = vpack.c.b16 %v1296, %v1292
    %v1701 = vpack.c.b16 %v1297, %v1293
    %v1702 = vpack.c.b16 %v1298, %v1294
    %v1703 = vpack.c.b16 %v1299, %v1295
    %v1704 = vpack.c.b16 %v1304, %v1300
    %v1705 = vpack.c.b16 %v1305, %v1301
    %v1706 = vpack.c.b16 %v1306, %v1302
    %v1707 = vpack.c.b16 %v1307, %v1303
    %v1708 = vpack.c.b16 %v1312, %v1308
    %v1709 = vpack.c.b16 %v1313, %v1309
    %v1710 = vpack.c.b16 %v1314, %v1310
    %v1711 = vpack.c.b16 %v1315, %v1311
    %v1712 = vpack.c.b16 %v1320, %v1316
    %v1713 = vpack.c.b16 %v1321, %v1317
    %v1714 = vpack.c.b16 %v1322, %v1318
    %v1715 = vpack.c.b16 %v1323, %v1319
    %v1716 = vpack.c.b16 %v1328, %v1324
    %v1717 = vpack.c.b16 %v1329, %v1325
    %v1718 = vpack.c.b16 %v1330, %v1326
    %v1719 = vpack.c.b16 %v1331, %v1327
    %v1720 = vpack.c.b16 %v1336, %v1332
    %v1721 = vpack.c.b16 %v1337, %v1333
    %v1722 = vpack.c.b16 %v1338, %v1334
    %v1723 = vpack.c.b16 %v1339, %v1335
    %v1724 = vpack.c.b16 %v1344, %v1340
    %v1725 = vpack.c.b16 %v1345, %v1341
    %v1726 = vpack.c.b16 %v1346, %v1342
    %v1727 = vpack.c.b16 %v1347, %v1343
    %v1728 = vpack.c.b16 %v1352, %v1348
    %v1729 = vpack.c.b16 %v1353, %v1349
    %v1730 = vpack.c.b16 %v1354, %v1350
    %v1731 = vpack.c.b16 %v1355, %v1351
    %v1732 = vpack.c.b16 %v1360, %v1356
    %v1733 = vpack.c.b16 %v1361, %v1357
    %v1734 = vpack.c.b16 %v1362, %v1358
    %v1735 = vpack.c.b16 %v1363, %v1359
    %v1736 = vpack.c.b16 %v1368, %v1364
    %v1737 = vpack.c.b16 %v1369, %v1365
    %v1738 = vpack.c.b16 %v1370, %v1366
    %v1739 = vpack.c.b16 %v1371, %v1367
    %v1740 = vpack.c.b16 %v1376, %v1372
    %v1741 = vpack.c.b16 %v1377, %v1373
    %v1742 = vpack.c.b16 %v1378, %v1374
    %v1743 = vpack.c.b16 %v1379, %v1375
    %v1744 = vpack.c.b16 %v1384, %v1380
    %v1745 = vpack.c.b16 %v1385, %v1381
    %v1746 = vpack.c.b16 %v1386, %v1382
    %v1747 = vpack.c.b16 %v1387, %v1383
    %v1748 = vpack.c.b16 %v1392, %v1388
    %v1749 = vpack.c.b16 %v1393, %v1389
    %v1750 = vpack.c.b16 %v1394, %v1390
    %v1751 = vpack.c.b16 %v1395, %v1391
    %v1752 = vpack.c.b16 %v1400, %v1396
    %v1753 = vpack.c.b16 %v1401, %v1397
    %v1754 = vpack.c.b16 %v1402, %v1398
    %v1755 = vpack.c.b16 %v1403, %v1399
    %v1756 = vpack.c.b16 %v1408, %v1404
    %v1757 = vpack.c.b16 %v1409, %v1405
    %v1758 = vpack.c.b16 %v1410, %v1406
    %v1759 = vpack.c.b16 %v1411, %v1407
    %v1760 = vpack.c.b16 %v1416, %v1412
    %v1761 = vpack.c.b16 %v1417, %v1413
    %v1762 = vpack.c.b16 %v1418, %v1414
    %v1763 = vpack.c.b16 %v1419, %v1415
    %v1764 = vpack.c.b16 %v1424, %v1420
    %v1765 = vpack.c.b16 %v1425, %v1421
    %v1766 = vpack.c.b16 %v1426, %v1422
    %v1767 = vpack.c.b16 %v1427, %v1423
    %v1768 = vpack.c.b16 %v1432, %v1428
    %v1769 = vpack.c.b16 %v1433, %v1429
    %v1770 = vpack.c.b16 %v1434, %v1430
    %v1771 = vpack.c.b16 %v1435, %v1431
    %v1772 = vpack.c.b16 %v1440, %v1436
    %v1773 = vpack.c.b16 %v1441, %v1437
    %v1774 = vpack.c.b16 %v1442, %v1438
    %v1775 = vpack.c.b16 %v1443, %v1439
    %v1776 = vpack.c.b16 %v1448, %v1444
    %v1777 = vpack.c.b16 %v1449, %v1445
    %v1778 = vpack.c.b16 %v1450, %v1446
    %v1779 = vpack.c.b16 %v1451, %v1447
    %v1780 = vpack.c.b16 %v1456, %v1452
    %v1781 = vpack.c.b16 %v1457, %v1453
    %v1782 = vpack.c.b16 %v1458, %v1454
    %v1783 = vpack.c.b16 %v1459, %v1455
    %v1784 = vpack.c.b16 %v1464, %v1460
    %v1785 = vpack.c.b16 %v1465, %v1461
    %v1786 = vpack.c.b16 %v1466, %v1462
    %v1787 = vpack.c.b16 %v1467, %v1463
    %2108 = vmatprep.subr.bf16.mxu0 %v1497
    %2109 = vmatpush1.bf16.msra.mxu0 %v1496
    %2110 = vmatprep.subr.bf16.mxu0 %v1493
    %2111 = vmatpush1.bf16.msra.mxu0 %v1492
    %2112 = vmatprep.subr.bf16.mxu0 %v1489
    %2113 = vmatpush1.bf16.msra.mxu0 %v1488
    %2114 = vmatprep.subr.bf16.mxu0 %v1485
    %2115 = vmatpush1.bf16.msra.mxu0 %v1484
    %2116 = vmatprep.subr.bf16.mxu0 %v1481
    %2117 = vmatpush1.bf16.msra.mxu0 %v1480
    %2118 = vmatprep.subr.bf16.mxu0 %v1477
    %2119 = vmatpush1.bf16.msra.mxu0 %v1476
    %2120 = vmatprep.subr.bf16.mxu0 %v1473
    %2121 = vmatpush1.bf16.msra.mxu0 %v1472
    %2122 = vmatprep.subr.bf16.mxu0 %v1469
    %2123 = vmatpush1.bf16.msra.mxu0 %v1468
    %2124 = vmatprep.subr.bf16.mxu0 %v1529
    %2125 = vmatpush2.bf16.msra.mxu0 %v1528
    %2126 = vmatprep.subr.bf16.mxu0 %v1525
    %2127 = vmatpush2.bf16.msra.mxu0 %v1524
    %2128 = vmatprep.subr.bf16.mxu0 %v1521
    %2129 = vmatpush2.bf16.msra.mxu0 %v1520
    %2130 = vmatprep.subr.bf16.mxu0 %v1517
    %2131 = vmatpush2.bf16.msra.mxu0 %v1516
    %2132 = vmatprep.subr.bf16.mxu0 %v1513
    %2133 = vmatpush2.bf16.msra.mxu0 %v1512
    %2134 = vmatprep.subr.bf16.mxu0 %v1509
    %2135 = vmatpush2.bf16.msra.mxu0 %v1508
    %2136 = vmatprep.subr.bf16.mxu0 %v1505
    %2137 = vmatpush2.bf16.msra.mxu0 %v1504
    %2138 = vmatprep.subr.bf16.mxu0 %v1501
    %2139 = vmatpush2.bf16.msra.mxu0 %v1500
    %2140 = vmatprep.mubr.bf16.mxu0 %v157
    %2141 = vmatmul.mubr.bf16.gmra.mxu0 %v156
    %v2142 = vpop.f32.mrf.mxu0
    %v2143 = vadd.f32 %v491, %v2142
    %v2144 = vpop.f32.mrf.mxu0
    %v2145 = vadd.f32 %v495, %v2144
    %v2146 = vpop.f32.mrf.mxu0
    %v2147 = vpop.f32.mrf.mxu0
    %2148 = vdwg.mxu0
    %2149 = vmatprep.subr.bf16.mxu0 %v1561
    %2150 = vmatpush1.bf16.msra.mxu0 %v1560
    %2151 = vmatprep.subr.bf16.mxu0 %v1557
    %2152 = vmatpush1.bf16.msra.mxu0 %v1556
    %2153 = vmatprep.subr.bf16.mxu0 %v1553
    %2154 = vmatpush1.bf16.msra.mxu0 %v1552
    %2155 = vmatprep.subr.bf16.mxu0 %v1549
    %2156 = vmatpush1.bf16.msra.mxu0 %v1548
    %2157 = vmatprep.subr.bf16.mxu0 %v1545
    %2158 = vmatpush1.bf16.msra.mxu0 %v1544
    %2159 = vmatprep.subr.bf16.mxu0 %v1541
    %2160 = vmatpush1.bf16.msra.mxu0 %v1540
    %2161 = vmatprep.subr.bf16.mxu0 %v1537
    %2162 = vmatpush1.bf16.msra.mxu0 %v1536
    %2163 = vmatprep.subr.bf16.mxu0 %v1533
    %2164 = vmatpush1.bf16.msra.mxu0 %v1532
    %2165 = vmatprep.subr.bf16.mxu0 %v1593
    %2166 = vmatpush2.bf16.msra.mxu0 %v1592
    %2167 = vmatprep.subr.bf16.mxu0 %v1589
    %2168 = vmatpush2.bf16.msra.mxu0 %v1588
    %2169 = vmatprep.subr.bf16.mxu0 %v1585
    %2170 = vmatpush2.bf16.msra.mxu0 %v1584
    %2171 = vmatprep.subr.bf16.mxu0 %v1581
    %2172 = vmatpush2.bf16.msra.mxu0 %v1580
    %2173 = vmatprep.subr.bf16.mxu0 %v1577
    %2174 = vmatpush2.bf16.msra.mxu0 %v1576
    %2175 = vmatprep.subr.bf16.mxu0 %v1573
    %2176 = vmatpush2.bf16.msra.mxu0 %v1572
    %2177 = vmatprep.subr.bf16.mxu0 %v1569
    %2178 = vmatpush2.bf16.msra.mxu0 %v1568
    %2179 = vmatprep.subr.bf16.mxu0 %v1565
    %2180 = vmatpush2.bf16.msra.mxu0 %v1564
    %2181 = vmatprep.mubr.bf16.mxu0 %v159
    %2182 = vmatmul.mubr.bf16.gmra.mxu0 %v158
    %v2183 = vpop.f32.mrf.mxu0
    %v2184 = vadd.f32 %v2143, %v2183
    %v2185 = vpop.f32.mrf.mxu0
    %v2186 = vadd.f32 %v2145, %v2185
    %v2187 = vpop.f32.mrf.mxu0
    %v2188 = vpop.f32.mrf.mxu0
    %2189 = vdwg.mxu0
    %2190 = vmatprep.subr.bf16.mxu0 %v1625
    %2191 = vmatpush1.bf16.msra.mxu0 %v1624
    %2192 = vmatprep.subr.bf16.mxu0 %v1621
    %2193 = vmatpush1.bf16.msra.mxu0 %v1620
    %2194 = vmatprep.subr.bf16.mxu0 %v1617
    %2195 = vmatpush1.bf16.msra.mxu0 %v1616
    %2196 = vmatprep.subr.bf16.mxu0 %v1613
    %2197 = vmatpush1.bf16.msra.mxu0 %v1612
    %2198 = vmatprep.subr.bf16.mxu0 %v1609
    %2199 = vmatpush1.bf16.msra.mxu0 %v1608
    %2200 = vmatprep.subr.bf16.mxu0 %v1605
    %2201 = vmatpush1.bf16.msra.mxu0 %v1604
    %2202 = vmatprep.subr.bf16.mxu0 %v1601
    %2203 = vmatpush1.bf16.msra.mxu0 %v1600
    %2204 = vmatprep.subr.bf16.mxu0 %v1597
    %2205 = vmatpush1.bf16.msra.mxu0 %v1596
    %2206 = vmatprep.subr.bf16.mxu0 %v1657
    %2207 = vmatpush2.bf16.msra.mxu0 %v1656
    %2208 = vmatprep.subr.bf16.mxu0 %v1653
    %2209 = vmatpush2.bf16.msra.mxu0 %v1652
    %2210 = vmatprep.subr.bf16.mxu0 %v1649
    %2211 = vmatpush2.bf16.msra.mxu0 %v1648
    %2212 = vmatprep.subr.bf16.mxu0 %v1645
    %2213 = vmatpush2.bf16.msra.mxu0 %v1644
    %2214 = vmatprep.subr.bf16.mxu0 %v1641
    %2215 = vmatpush2.bf16.msra.mxu0 %v1640
    %2216 = vmatprep.subr.bf16.mxu0 %v1637
    %2217 = vmatpush2.bf16.msra.mxu0 %v1636
    %2218 = vmatprep.subr.bf16.mxu0 %v1633
    %2219 = vmatpush2.bf16.msra.mxu0 %v1632
    %2220 = vmatprep.subr.bf16.mxu0 %v1629
    %2221 = vmatpush2.bf16.msra.mxu0 %v1628
    %2222 = vmatprep.mubr.bf16.mxu0 %v161
    %2223 = vmatmul.mubr.bf16.gmra.mxu0 %v160
    %v2224 = vpop.f32.mrf.mxu0
    %v2225 = vadd.f32 %v2184, %v2224
    %v2226 = vpop.f32.mrf.mxu0
    %v2227 = vadd.f32 %v2186, %v2226
    %v2228 = vpop.f32.mrf.mxu0
    %v2229 = vpop.f32.mrf.mxu0
    %2230 = vdwg.mxu0
    %2231 = vmatprep.subr.bf16.mxu0 %v1689
    %2232 = vmatpush1.bf16.msra.mxu0 %v1688
    %2233 = vmatprep.subr.bf16.mxu0 %v1685
    %2234 = vmatpush1.bf16.msra.mxu0 %v1684
    %2235 = vmatprep.subr.bf16.mxu0 %v1681
    %2236 = vmatpush1.bf16.msra.mxu0 %v1680
    %2237 = vmatprep.subr.bf16.mxu0 %v1677
    %2238 = vmatpush1.bf16.msra.mxu0 %v1676
    %2239 = vmatprep.subr.bf16.mxu0 %v1673
    %2240 = vmatpush1.bf16.msra.mxu0 %v1672
    %2241 = vmatprep.subr.bf16.mxu0 %v1669
    %2242 = vmatpush1.bf16.msra.mxu0 %v1668
    %2243 = vmatprep.subr.bf16.mxu0 %v1665
    %2244 = vmatpush1.bf16.msra.mxu0 %v1664
    %2245 = vmatprep.subr.bf16.mxu0 %v1661
    %2246 = vmatpush1.bf16.msra.mxu0 %v1660
    %2247 = vmatprep.subr.bf16.mxu0 %v1721
    %2248 = vmatpush2.bf16.msra.mxu0 %v1720
    %2249 = vmatprep.subr.bf16.mxu0 %v1717
    %2250 = vmatpush2.bf16.msra.mxu0 %v1716
    %2251 = vmatprep.subr.bf16.mxu0 %v1713
    %2252 = vmatpush2.bf16.msra.mxu0 %v1712
    %2253 = vmatprep.subr.bf16.mxu0 %v1709
    %2254 = vmatpush2.bf16.msra.mxu0 %v1708
    %2255 = vmatprep.subr.bf16.mxu0 %v1705
    %2256 = vmatpush2.bf16.msra.mxu0 %v1704
    %2257 = vmatprep.subr.bf16.mxu0 %v1701
    %2258 = vmatpush2.bf16.msra.mxu0 %v1700
    %2259 = vmatprep.subr.bf16.mxu0 %v1697
    %2260 = vmatpush2.bf16.msra.mxu0 %v1696
    %2261 = vmatprep.subr.bf16.mxu0 %v1693
    %2262 = vmatpush2.bf16.msra.mxu0 %v1692
    %2263 = vmatprep.mubr.bf16.mxu0 %v163
    %2264 = vmatmul.mubr.bf16.gmra.mxu0 %v162
    %v2265 = vpop.f32.mrf.mxu0
    %v2266 = vadd.f32 %v2225, %v2265
    %v2267 = vpop.f32.mrf.mxu0
    %v2268 = vadd.f32 %v2227, %v2267
    %v2269 = vpop.f32.mrf.mxu0
    %v2270 = vpop.f32.mrf.mxu0
    %2271 = vdwg.mxu0
    %2272 = vmatprep.subr.bf16.mxu0 %v1753
    %2273 = vmatpush1.bf16.msra.mxu0 %v1752
    %2274 = vmatprep.subr.bf16.mxu0 %v1749
    %2275 = vmatpush1.bf16.msra.mxu0 %v1748
    %2276 = vmatprep.subr.bf16.mxu0 %v1745
    %2277 = vmatpush1.bf16.msra.mxu0 %v1744
    %2278 = vmatprep.subr.bf16.mxu0 %v1741
    %2279 = vmatpush1.bf16.msra.mxu0 %v1740
    %2280 = vmatprep.subr.bf16.mxu0 %v1737
    %2281 = vmatpush1.bf16.msra.mxu0 %v1736
    %2282 = vmatprep.subr.bf16.mxu0 %v1733
    %2283 = vmatpush1.bf16.msra.mxu0 %v1732
    %2284 = vmatprep.subr.bf16.mxu0 %v1729
    %2285 = vmatpush1.bf16.msra.mxu0 %v1728
    %2286 = vmatprep.subr.bf16.mxu0 %v1725
    %2287 = vmatpush1.bf16.msra.mxu0 %v1724
    %2288 = vmatprep.subr.bf16.mxu0 %v1785
    %2289 = vmatpush2.bf16.msra.mxu0 %v1784
    %2290 = vmatprep.subr.bf16.mxu0 %v1781
    %2291 = vmatpush2.bf16.msra.mxu0 %v1780
    %2292 = vmatprep.subr.bf16.mxu0 %v1777
    %2293 = vmatpush2.bf16.msra.mxu0 %v1776
    %2294 = vmatprep.subr.bf16.mxu0 %v1773
    %2295 = vmatpush2.bf16.msra.mxu0 %v1772
    %2296 = vmatprep.subr.bf16.mxu0 %v1769
    %2297 = vmatpush2.bf16.msra.mxu0 %v1768
    %2298 = vmatprep.subr.bf16.mxu0 %v1765
    %2299 = vmatpush2.bf16.msra.mxu0 %v1764
    %2300 = vmatprep.subr.bf16.mxu0 %v1761
    %2301 = vmatpush2.bf16.msra.mxu0 %v1760
    %2302 = vmatprep.subr.bf16.mxu0 %v1757
    %2303 = vmatpush2.bf16.msra.mxu0 %v1756
    %2304 = vmatprep.mubr.bf16.mxu0 %v165
    %2305 = vmatmul.mubr.bf16.gmra.mxu0 %v164
    %v2306 = vpop.f32.mrf.mxu0
    %v2307 = vadd.f32 %v2266, %v2306
    %v2308 = vpop.f32.mrf.mxu0
    %v2309 = vadd.f32 %v2268, %v2308
    %v2310 = vpop.f32.mrf.mxu0
    %v2311 = vpop.f32.mrf.mxu0
    %2312 = vdwg.mxu0
    %2313 = vmatprep.subr.bf16.mxu0 %v1499
    %2314 = vmatpush1.bf16.msra.mxu0 %v1498
    %2315 = vmatprep.subr.bf16.mxu0 %v1495
    %2316 = vmatpush1.bf16.msra.mxu0 %v1494
    %2317 = vmatprep.subr.bf16.mxu0 %v1491
    %2318 = vmatpush1.bf16.msra.mxu0 %v1490
    %2319 = vmatprep.subr.bf16.mxu0 %v1487
    %2320 = vmatpush1.bf16.msra.mxu0 %v1486
    %2321 = vmatprep.subr.bf16.mxu0 %v1483
    %2322 = vmatpush1.bf16.msra.mxu0 %v1482
    %2323 = vmatprep.subr.bf16.mxu0 %v1479
    %2324 = vmatpush1.bf16.msra.mxu0 %v1478
    %2325 = vmatprep.subr.bf16.mxu0 %v1475
    %2326 = vmatpush1.bf16.msra.mxu0 %v1474
    %2327 = vmatprep.subr.bf16.mxu0 %v1471
    %2328 = vmatpush1.bf16.msra.mxu0 %v1470
    %2329 = vmatprep.subr.bf16.mxu0 %v1531
    %2330 = vmatpush2.bf16.msra.mxu0 %v1530
    %2331 = vmatprep.subr.bf16.mxu0 %v1527
    %2332 = vmatpush2.bf16.msra.mxu0 %v1526
    %2333 = vmatprep.subr.bf16.mxu0 %v1523
    %2334 = vmatpush2.bf16.msra.mxu0 %v1522
    %2335 = vmatprep.subr.bf16.mxu0 %v1519
    %2336 = vmatpush2.bf16.msra.mxu0 %v1518
    %2337 = vmatprep.subr.bf16.mxu0 %v1515
    %2338 = vmatpush2.bf16.msra.mxu0 %v1514
    %2339 = vmatprep.subr.bf16.mxu0 %v1511
    %2340 = vmatpush2.bf16.msra.mxu0 %v1510
    %2341 = vmatprep.subr.bf16.mxu0 %v1507
    %2342 = vmatpush2.bf16.msra.mxu0 %v1506
    %2343 = vmatprep.subr.bf16.mxu0 %v1503
    %2344 = vmatpush2.bf16.msra.mxu0 %v1502
    %2345 = vmatprep.mubr.bf16.mxu0 %v157
    %2346 = vmatmul.mubr.bf16.gmra.mxu0 %v156
    %v2347 = vpop.f32.mrf.mxu0
    %v2348 = vadd.f32 %v499, %v2347
    %v2349 = vpop.f32.mrf.mxu0
    %v2350 = vadd.f32 %v503, %v2349
    %v2351 = vpop.f32.mrf.mxu0
    %v2352 = vpop.f32.mrf.mxu0
    %2353 = vdwg.mxu0
    %2354 = vmatprep.subr.bf16.mxu0 %v1563
    %2355 = vmatpush1.bf16.msra.mxu0 %v1562
    %2356 = vmatprep.subr.bf16.mxu0 %v1559
    %2357 = vmatpush1.bf16.msra.mxu0 %v1558
    %2358 = vmatprep.subr.bf16.mxu0 %v1555
    %2359 = vmatpush1.bf16.msra.mxu0 %v1554
    %2360 = vmatprep.subr.bf16.mxu0 %v1551
    %2361 = vmatpush1.bf16.msra.mxu0 %v1550
    %2362 = vmatprep.subr.bf16.mxu0 %v1547
    %2363 = vmatpush1.bf16.msra.mxu0 %v1546
    %2364 = vmatprep.subr.bf16.mxu0 %v1543
    %2365 = vmatpush1.bf16.msra.mxu0 %v1542
    %2366 = vmatprep.subr.bf16.mxu0 %v1539
    %2367 = vmatpush1.bf16.msra.mxu0 %v1538
    %2368 = vmatprep.subr.bf16.mxu0 %v1535
    %2369 = vmatpush1.bf16.msra.mxu0 %v1534
    %2370 = vmatprep.subr.bf16.mxu0 %v1595
    %2371 = vmatpush2.bf16.msra.mxu0 %v1594
    %2372 = vmatprep.subr.bf16.mxu0 %v1591
    %2373 = vmatpush2.bf16.msra.mxu0 %v1590
    %2374 = vmatprep.subr.bf16.mxu0 %v1587
    %2375 = vmatpush2.bf16.msra.mxu0 %v1586
    %2376 = vmatprep.subr.bf16.mxu0 %v1583
    %2377 = vmatpush2.bf16.msra.mxu0 %v1582
    %2378 = vmatprep.subr.bf16.mxu0 %v1579
    %2379 = vmatpush2.bf16.msra.mxu0 %v1578
    %2380 = vmatprep.subr.bf16.mxu0 %v1575
    %2381 = vmatpush2.bf16.msra.mxu0 %v1574
    %2382 = vmatprep.subr.bf16.mxu0 %v1571
    %2383 = vmatpush2.bf16.msra.mxu0 %v1570
    %2384 = vmatprep.subr.bf16.mxu0 %v1567
    %2385 = vmatpush2.bf16.msra.mxu0 %v1566
    %2386 = vmatprep.mubr.bf16.mxu0 %v159
    %2387 = vmatmul.mubr.bf16.gmra.mxu0 %v158
    %v2388 = vpop.f32.mrf.mxu0
    %v2389 = vadd.f32 %v2348, %v2388
    %v2390 = vpop.f32.mrf.mxu0
    %v2391 = vadd.f32 %v2350, %v2390
    %v2392 = vpop.f32.mrf.mxu0
    %v2393 = vpop.f32.mrf.mxu0
    %2394 = vdwg.mxu0
    %2395 = vmatprep.subr.bf16.mxu0 %v1627
    %2396 = vmatpush1.bf16.msra.mxu0 %v1626
    %2397 = vmatprep.subr.bf16.mxu0 %v1623
    %2398 = vmatpush1.bf16.msra.mxu0 %v1622
    %2399 = vmatprep.subr.bf16.mxu0 %v1619
    %2400 = vmatpush1.bf16.msra.mxu0 %v1618
    %2401 = vmatprep.subr.bf16.mxu0 %v1615
    %2402 = vmatpush1.bf16.msra.mxu0 %v1614
    %2403 = vmatprep.subr.bf16.mxu0 %v1611
    %2404 = vmatpush1.bf16.msra.mxu0 %v1610
    %2405 = vmatprep.subr.bf16.mxu0 %v1607
    %2406 = vmatpush1.bf16.msra.mxu0 %v1606
    %2407 = vmatprep.subr.bf16.mxu0 %v1603
    %2408 = vmatpush1.bf16.msra.mxu0 %v1602
    %2409 = vmatprep.subr.bf16.mxu0 %v1599
    %2410 = vmatpush1.bf16.msra.mxu0 %v1598
    %2411 = vmatprep.subr.bf16.mxu0 %v1659
    %2412 = vmatpush2.bf16.msra.mxu0 %v1658
    %2413 = vmatprep.subr.bf16.mxu0 %v1655
    %2414 = vmatpush2.bf16.msra.mxu0 %v1654
    %2415 = vmatprep.subr.bf16.mxu0 %v1651
    %2416 = vmatpush2.bf16.msra.mxu0 %v1650
    %2417 = vmatprep.subr.bf16.mxu0 %v1647
    %2418 = vmatpush2.bf16.msra.mxu0 %v1646
    %2419 = vmatprep.subr.bf16.mxu0 %v1643
    %2420 = vmatpush2.bf16.msra.mxu0 %v1642
    %2421 = vmatprep.subr.bf16.mxu0 %v1639
    %2422 = vmatpush2.bf16.msra.mxu0 %v1638
    %2423 = vmatprep.subr.bf16.mxu0 %v1635
    %2424 = vmatpush2.bf16.msra.mxu0 %v1634
    %2425 = vmatprep.subr.bf16.mxu0 %v1631
    %2426 = vmatpush2.bf16.msra.mxu0 %v1630
    %2427 = vmatprep.mubr.bf16.mxu0 %v161
    %2428 = vmatmul.mubr.bf16.gmra.mxu0 %v160
    %v2429 = vpop.f32.mrf.mxu0
    %v2430 = vadd.f32 %v2389, %v2429
    %v2431 = vpop.f32.mrf.mxu0
    %v2432 = vadd.f32 %v2391, %v2431
    %v2433 = vpop.f32.mrf.mxu0
    %v2434 = vpop.f32.mrf.mxu0
    %2435 = vdwg.mxu0
    %2436 = vmatprep.subr.bf16.mxu0 %v1691
    %2437 = vmatpush1.bf16.msra.mxu0 %v1690
    %2438 = vmatprep.subr.bf16.mxu0 %v1687
    %2439 = vmatpush1.bf16.msra.mxu0 %v1686
    %2440 = vmatprep.subr.bf16.mxu0 %v1683
    %2441 = vmatpush1.bf16.msra.mxu0 %v1682
    %2442 = vmatprep.subr.bf16.mxu0 %v1679
    %2443 = vmatpush1.bf16.msra.mxu0 %v1678
    %2444 = vmatprep.subr.bf16.mxu0 %v1675
    %2445 = vmatpush1.bf16.msra.mxu0 %v1674
    %2446 = vmatprep.subr.bf16.mxu0 %v1671
    %2447 = vmatpush1.bf16.msra.mxu0 %v1670
    %2448 = vmatprep.subr.bf16.mxu0 %v1667
    %2449 = vmatpush1.bf16.msra.mxu0 %v1666
    %2450 = vmatprep.subr.bf16.mxu0 %v1663
    %2451 = vmatpush1.bf16.msra.mxu0 %v1662
    %2452 = vmatprep.subr.bf16.mxu0 %v1723
    %2453 = vmatpush2.bf16.msra.mxu0 %v1722
    %2454 = vmatprep.subr.bf16.mxu0 %v1719
    %2455 = vmatpush2.bf16.msra.mxu0 %v1718
    %2456 = vmatprep.subr.bf16.mxu0 %v1715
    %2457 = vmatpush2.bf16.msra.mxu0 %v1714
    %2458 = vmatprep.subr.bf16.mxu0 %v1711
    %2459 = vmatpush2.bf16.msra.mxu0 %v1710
    %2460 = vmatprep.subr.bf16.mxu0 %v1707
    %2461 = vmatpush2.bf16.msra.mxu0 %v1706
    %2462 = vmatprep.subr.bf16.mxu0 %v1703
    %2463 = vmatpush2.bf16.msra.mxu0 %v1702
    %2464 = vmatprep.subr.bf16.mxu0 %v1699
    %2465 = vmatpush2.bf16.msra.mxu0 %v1698
    %2466 = vmatprep.subr.bf16.mxu0 %v1695
    %2467 = vmatpush2.bf16.msra.mxu0 %v1694
    %2468 = vmatprep.mubr.bf16.mxu0 %v163
    %2469 = vmatmul.mubr.bf16.gmra.mxu0 %v162
    %v2470 = vpop.f32.mrf.mxu0
    %v2471 = vadd.f32 %v2430, %v2470
    %v2472 = vpop.f32.mrf.mxu0
    %v2473 = vadd.f32 %v2432, %v2472
    %v2474 = vpop.f32.mrf.mxu0
    %v2475 = vpop.f32.mrf.mxu0
    %2476 = vdwg.mxu0
    %2477 = vmatprep.subr.bf16.mxu0 %v1755
    %2478 = vmatpush1.bf16.msra.mxu0 %v1754
    %2479 = vmatprep.subr.bf16.mxu0 %v1751
    %2480 = vmatpush1.bf16.msra.mxu0 %v1750
    %2481 = vmatprep.subr.bf16.mxu0 %v1747
    %2482 = vmatpush1.bf16.msra.mxu0 %v1746
    %2483 = vmatprep.subr.bf16.mxu0 %v1743
    %2484 = vmatpush1.bf16.msra.mxu0 %v1742
    %2485 = vmatprep.subr.bf16.mxu0 %v1739
    %2486 = vmatpush1.bf16.msra.mxu0 %v1738
    %2487 = vmatprep.subr.bf16.mxu0 %v1735
    %2488 = vmatpush1.bf16.msra.mxu0 %v1734
    %2489 = vmatprep.subr.bf16.mxu0 %v1731
    %2490 = vmatpush1.bf16.msra.mxu0 %v1730
    %2491 = vmatprep.subr.bf16.mxu0 %v1727
    %2492 = vmatpush1.bf16.msra.mxu0 %v1726
    %2493 = vmatprep.subr.bf16.mxu0 %v1787
    %2494 = vmatpush2.bf16.msra.mxu0 %v1786
    %2495 = vmatprep.subr.bf16.mxu0 %v1783
    %2496 = vmatpush2.bf16.msra.mxu0 %v1782
    %2497 = vmatprep.subr.bf16.mxu0 %v1779
    %2498 = vmatpush2.bf16.msra.mxu0 %v1778
    %2499 = vmatprep.subr.bf16.mxu0 %v1775
    %2500 = vmatpush2.bf16.msra.mxu0 %v1774
    %2501 = vmatprep.subr.bf16.mxu0 %v1771
    %2502 = vmatpush2.bf16.msra.mxu0 %v1770
    %2503 = vmatprep.subr.bf16.mxu0 %v1767
    %2504 = vmatpush2.bf16.msra.mxu0 %v1766
    %2505 = vmatprep.subr.bf16.mxu0 %v1763
    %2506 = vmatpush2.bf16.msra.mxu0 %v1762
    %2507 = vmatprep.subr.bf16.mxu0 %v1759
    %2508 = vmatpush2.bf16.msra.mxu0 %v1758
    %2509 = vmatprep.mubr.bf16.mxu0 %v165
    %2510 = vmatmul.mubr.bf16.gmra.mxu0 %v164
    %v2511 = vpop.f32.mrf.mxu0
    %v2512 = vadd.f32 %v2471, %v2511
    %v2513 = vpop.f32.mrf.mxu0
    %v2514 = vadd.f32 %v2473, %v2513
    %v2515 = vpop.f32.mrf.mxu0
    %v2516 = vpop.f32.mrf.mxu0
    %2517 = vdwg.mxu0
    %v2518 = vmax.f32 %v2307, 0.0
    %v2519 = vmax.f32 %v2309, 0.0
    %v2520 = vmax.f32 %v2512, 0.0
    %v2521 = vmax.f32 %v2514, 0.0
    %v2522 = vmul.f32 %v2518, %v2518
    %v2523 = vmul.f32 %v2519, %v2519
    %v2524 = vmul.f32 %v2520, %v2520
    %v2525 = vmul.f32 %v2521, %v2521
    %v2526 = vadd.f32 %v2522, %v2523
    %v2527 = vadd.f32 %v2526, %v2524
    %v2528 = vadd.f32 %v2527, %v2525
    %2529 = vadd.xlane.f32.xlu0 %v2528
    %v2530 = vpop.xlane.xlu0 %2529
    %v2531 = vmax.f32 %v2530, 1e-24
    %v2532 = vrsqrt.pop %v2531
    %v2533 = vmul.f32 %v2518, %v2532
    %v2534 = vmul.f32 %v2519, %v2532
    %v2535 = vmul.f32 %v2520, %v2532
    %v2536 = vmul.f32 %v2521, %v2532
    %v2537 = vld [vmem:[#allocation5] sm:$0xff]
    %v2538 = vld [vmem:[#allocation5 + $0x8] sm:$0xff]
    %v2539 = vld [vmem:[#allocation5 + $0x10] sm:$0xff]
    %v2540 = vld [vmem:[#allocation5 + $0x18] sm:$0xff]
    %v2541 = vmul.f32 %v2537, %v2537
    %v2542 = vmul.f32 %v2538, %v2538
    %v2543 = vmul.f32 %v2539, %v2539
    %v2544 = vmul.f32 %v2540, %v2540
    %v2545 = vadd.f32 %v2541, %v2542
    %v2546 = vadd.f32 %v2545, %v2543
    %v2547 = vadd.f32 %v2546, %v2544
    %2548 = vadd.xlane.f32.xlu0 %v2547
    %v2549 = vpop.xlane.xlu0 %2548
    %v2550 = vmax.f32 %v2549, 1e-24
    %v2551 = vrsqrt.pop %v2550
    %v2552 = vmul.f32 %v2537, %v2551
    %v2553 = vmul.f32 %v2538, %v2551
    %v2554 = vmul.f32 %v2539, %v2551
    %v2555 = vmul.f32 %v2540, %v2551
    %v2556 = vpack.c.bf16 %v2533, %v2533
    %v2557 = vpack.c.bf16 %v2534, %v2534
    %v2558 = vpack.c.bf16 %v2535, %v2535
    %v2559 = vpack.c.bf16 %v2536, %v2536
    %v2560 = vld [vmem:[#allocation10] sm:$0xff]
    %v2561 = vld [vmem:[#allocation10 + $0x8] sm:$0xff]
    %v2562 = vld [vmem:[#allocation10 + $0x10] sm:$0xff]
    %v2563 = vld [vmem:[#allocation10 + $0x18] sm:$0xff]
    %v2564 = vld [vmem:[#allocation10 + $0x20] sm:$0xff]
    %v2565 = vld [vmem:[#allocation10 + $0x28] sm:$0xff]
    %v2566 = vld [vmem:[#allocation10 + $0x30] sm:$0xff]
    %v2567 = vld [vmem:[#allocation10 + $0x38] sm:$0xff]
    %v2568 = vld [vmem:[#allocation10 + $0x40] sm:$0xff]
    %v2569 = vld [vmem:[#allocation10 + $0x48] sm:$0xff]
    %v2570 = vld [vmem:[#allocation10 + $0x50] sm:$0xff]
    %v2571 = vld [vmem:[#allocation10 + $0x58] sm:$0xff]
    %v2572 = vld [vmem:[#allocation10 + $0x60] sm:$0xff]
    %v2573 = vld [vmem:[#allocation10 + $0x68] sm:$0xff]
    %v2574 = vld [vmem:[#allocation10 + $0x70] sm:$0xff]
    %v2575 = vld [vmem:[#allocation10 + $0x78] sm:$0xff]
    %v2576 = vld [vmem:[#allocation10 + $0x80] sm:$0xff]
    %v2577 = vld [vmem:[#allocation10 + $0x88] sm:$0xff]
    %v2578 = vld [vmem:[#allocation10 + $0x90] sm:$0xff]
    %v2579 = vld [vmem:[#allocation10 + $0x98] sm:$0xff]
    %v2580 = vld [vmem:[#allocation10 + $0xa0] sm:$0xff]
    %v2581 = vld [vmem:[#allocation10 + $0xa8] sm:$0xff]
    %v2582 = vld [vmem:[#allocation10 + $0xb0] sm:$0xff]
    %v2583 = vld [vmem:[#allocation10 + $0xb8] sm:$0xff]
    %v2584 = vld [vmem:[#allocation10 + $0xc0] sm:$0xff]
    %v2585 = vld [vmem:[#allocation10 + $0xc8] sm:$0xff]
    %v2586 = vld [vmem:[#allocation10 + $0xd0] sm:$0xff]
    %v2587 = vld [vmem:[#allocation10 + $0xd8] sm:$0xff]
    %v2588 = vld [vmem:[#allocation10 + $0xe0] sm:$0xff]
    %v2589 = vld [vmem:[#allocation10 + $0xe8] sm:$0xff]
    %v2590 = vld [vmem:[#allocation10 + $0xf0] sm:$0xff]
    %v2591 = vld [vmem:[#allocation10 + $0xf8] sm:$0xff]
    %v2592 = vld [vmem:[#allocation10 + $0x100] sm:$0xff]
    %v2593 = vld [vmem:[#allocation10 + $0x108] sm:$0xff]
    %v2594 = vld [vmem:[#allocation10 + $0x110] sm:$0xff]
    %v2595 = vld [vmem:[#allocation10 + $0x118] sm:$0xff]
    %v2596 = vld [vmem:[#allocation10 + $0x120] sm:$0xff]
    %v2597 = vld [vmem:[#allocation10 + $0x128] sm:$0xff]
    %v2598 = vld [vmem:[#allocation10 + $0x130] sm:$0xff]
    %v2599 = vld [vmem:[#allocation10 + $0x138] sm:$0xff]
    %v2600 = vld [vmem:[#allocation10 + $0x140] sm:$0xff]
    %v2601 = vld [vmem:[#allocation10 + $0x148] sm:$0xff]
    %v2602 = vld [vmem:[#allocation10 + $0x150] sm:$0xff]
    %v2603 = vld [vmem:[#allocation10 + $0x158] sm:$0xff]
    %v2604 = vld [vmem:[#allocation10 + $0x160] sm:$0xff]
    %v2605 = vld [vmem:[#allocation10 + $0x168] sm:$0xff]
    %v2606 = vld [vmem:[#allocation10 + $0x170] sm:$0xff]
    %v2607 = vld [vmem:[#allocation10 + $0x178] sm:$0xff]
    %v2608 = vld [vmem:[#allocation10 + $0x180] sm:$0xff]
    %v2609 = vld [vmem:[#allocation10 + $0x188] sm:$0xff]
    %v2610 = vld [vmem:[#allocation10 + $0x190] sm:$0xff]
    %v2611 = vld [vmem:[#allocation10 + $0x198] sm:$0xff]
    %v2612 = vld [vmem:[#allocation10 + $0x1a0] sm:$0xff]
    %v2613 = vld [vmem:[#allocation10 + $0x1a8] sm:$0xff]
    %v2614 = vld [vmem:[#allocation10 + $0x1b0] sm:$0xff]
    %v2615 = vld [vmem:[#allocation10 + $0x1b8] sm:$0xff]
    %v2616 = vld [vmem:[#allocation10 + $0x1c0] sm:$0xff]
    %v2617 = vld [vmem:[#allocation10 + $0x1c8] sm:$0xff]
    %v2618 = vld [vmem:[#allocation10 + $0x1d0] sm:$0xff]
    %v2619 = vld [vmem:[#allocation10 + $0x1d8] sm:$0xff]
    %v2620 = vld [vmem:[#allocation10 + $0x1e0] sm:$0xff]
    %v2621 = vld [vmem:[#allocation10 + $0x1e8] sm:$0xff]
    %v2622 = vld [vmem:[#allocation10 + $0x1f0] sm:$0xff]
    %v2623 = vld [vmem:[#allocation10 + $0x1f8] sm:$0xff]
    %v2624 = vld [vmem:[#allocation10 + $0x200] sm:$0xff]
    %v2625 = vld [vmem:[#allocation10 + $0x208] sm:$0xff]
    %v2626 = vld [vmem:[#allocation10 + $0x210] sm:$0xff]
    %v2627 = vld [vmem:[#allocation10 + $0x218] sm:$0xff]
    %v2628 = vld [vmem:[#allocation10 + $0x220] sm:$0xff]
    %v2629 = vld [vmem:[#allocation10 + $0x228] sm:$0xff]
    %v2630 = vld [vmem:[#allocation10 + $0x230] sm:$0xff]
    %v2631 = vld [vmem:[#allocation10 + $0x238] sm:$0xff]
    %v2632 = vld [vmem:[#allocation10 + $0x240] sm:$0xff]
    %v2633 = vld [vmem:[#allocation10 + $0x248] sm:$0xff]
    %v2634 = vld [vmem:[#allocation10 + $0x250] sm:$0xff]
    %v2635 = vld [vmem:[#allocation10 + $0x258] sm:$0xff]
    %v2636 = vld [vmem:[#allocation10 + $0x260] sm:$0xff]
    %v2637 = vld [vmem:[#allocation10 + $0x268] sm:$0xff]
    %v2638 = vld [vmem:[#allocation10 + $0x270] sm:$0xff]
    %v2639 = vld [vmem:[#allocation10 + $0x278] sm:$0xff]
    %v2640 = vld [vmem:[#allocation10 + $0x280] sm:$0xff]
    %v2641 = vld [vmem:[#allocation10 + $0x288] sm:$0xff]
    %v2642 = vld [vmem:[#allocation10 + $0x290] sm:$0xff]
    %v2643 = vld [vmem:[#allocation10 + $0x298] sm:$0xff]
    %v2644 = vld [vmem:[#allocation10 + $0x2a0] sm:$0xff]
    %v2645 = vld [vmem:[#allocation10 + $0x2a8] sm:$0xff]
    %v2646 = vld [vmem:[#allocation10 + $0x2b0] sm:$0xff]
    %v2647 = vld [vmem:[#allocation10 + $0x2b8] sm:$0xff]
    %v2648 = vld [vmem:[#allocation10 + $0x2c0] sm:$0xff]
    %v2649 = vld [vmem:[#allocation10 + $0x2c8] sm:$0xff]
    %v2650 = vld [vmem:[#allocation10 + $0x2d0] sm:$0xff]
    %v2651 = vld [vmem:[#allocation10 + $0x2d8] sm:$0xff]
    %v2652 = vld [vmem:[#allocation10 + $0x2e0] sm:$0xff]
    %v2653 = vld [vmem:[#allocation10 + $0x2e8] sm:$0xff]
    %v2654 = vld [vmem:[#allocation10 + $0x2f0] sm:$0xff]
    %v2655 = vld [vmem:[#allocation10 + $0x2f8] sm:$0xff]
    %v2656 = vld [vmem:[#allocation10 + $0x300] sm:$0xff]
    %v2657 = vld [vmem:[#allocation10 + $0x308] sm:$0xff]
    %v2658 = vld [vmem:[#allocation10 + $0x310] sm:$0xff]
    %v2659 = vld [vmem:[#allocation10 + $0x318] sm:$0xff]
    %v2660 = vld [vmem:[#allocation10 + $0x320] sm:$0xff]
    %v2661 = vld [vmem:[#allocation10 + $0x328] sm:$0xff]
    %v2662 = vld [vmem:[#allocation10 + $0x330] sm:$0xff]
    %v2663 = vld [vmem:[#allocation10 + $0x338] sm:$0xff]
    %v2664 = vld [vmem:[#allocation10 + $0x340] sm:$0xff]
    %v2665 = vld [vmem:[#allocation10 + $0x348] sm:$0xff]
    %v2666 = vld [vmem:[#allocation10 + $0x350] sm:$0xff]
    %v2667 = vld [vmem:[#allocation10 + $0x358] sm:$0xff]
    %v2668 = vld [vmem:[#allocation10 + $0x360] sm:$0xff]
    %v2669 = vld [vmem:[#allocation10 + $0x368] sm:$0xff]
    %v2670 = vld [vmem:[#allocation10 + $0x370] sm:$0xff]
    %v2671 = vld [vmem:[#allocation10 + $0x378] sm:$0xff]
    %v2672 = vld [vmem:[#allocation10 + $0x380] sm:$0xff]
    %v2673 = vld [vmem:[#allocation10 + $0x388] sm:$0xff]
    %v2674 = vld [vmem:[#allocation10 + $0x390] sm:$0xff]
    %v2675 = vld [vmem:[#allocation10 + $0x398] sm:$0xff]
    %v2676 = vld [vmem:[#allocation10 + $0x3a0] sm:$0xff]
    %v2677 = vld [vmem:[#allocation10 + $0x3a8] sm:$0xff]
    %v2678 = vld [vmem:[#allocation10 + $0x3b0] sm:$0xff]
    %v2679 = vld [vmem:[#allocation10 + $0x3b8] sm:$0xff]
    %v2680 = vld [vmem:[#allocation10 + $0x3c0] sm:$0xff]
    %v2681 = vld [vmem:[#allocation10 + $0x3c8] sm:$0xff]
    %v2682 = vld [vmem:[#allocation10 + $0x3d0] sm:$0xff]
    %v2683 = vld [vmem:[#allocation10 + $0x3d8] sm:$0xff]
    %v2684 = vld [vmem:[#allocation10 + $0x3e0] sm:$0xff]
    %v2685 = vld [vmem:[#allocation10 + $0x3e8] sm:$0xff]
    %v2686 = vld [vmem:[#allocation10 + $0x3f0] sm:$0xff]
    %v2687 = vld [vmem:[#allocation10 + $0x3f8] sm:$0xff]
    %v2688 = vpack.c.bf16 %v2552, %v2552
    %v2689 = vpack.c.bf16 %v2553, %v2553
    %v2690 = vpack.c.bf16 %v2554, %v2554
    %v2691 = vpack.c.bf16 %v2555, %v2555
    %v2692 = vld [vmem:[#allocation11] sm:$0xff]
    %v2693 = vld [vmem:[#allocation11 + $0x8] sm:$0xff]
    %v2694 = vld [vmem:[#allocation11 + $0x10] sm:$0xff]
    %v2695 = vld [vmem:[#allocation11 + $0x18] sm:$0xff]
    %v2696 = vld [vmem:[#allocation11 + $0x20] sm:$0xff]
    %v2697 = vld [vmem:[#allocation11 + $0x28] sm:$0xff]
    %v2698 = vld [vmem:[#allocation11 + $0x30] sm:$0xff]
    %v2699 = vld [vmem:[#allocation11 + $0x38] sm:$0xff]
    %v2700 = vld [vmem:[#allocation11 + $0x40] sm:$0xff]
    %v2701 = vld [vmem:[#allocation11 + $0x48] sm:$0xff]
    %v2702 = vld [vmem:[#allocation11 + $0x50] sm:$0xff]
    %v2703 = vld [vmem:[#allocation11 + $0x58] sm:$0xff]
    %v2704 = vld [vmem:[#allocation11 + $0x60] sm:$0xff]
    %v2705 = vld [vmem:[#allocation11 + $0x68] sm:$0xff]
    %v2706 = vld [vmem:[#allocation11 + $0x70] sm:$0xff]
    %v2707 = vld [vmem:[#allocation11 + $0x78] sm:$0xff]
    %v2708 = vld [vmem:[#allocation11 + $0x80] sm:$0xff]
    %v2709 = vld [vmem:[#allocation11 + $0x88] sm:$0xff]
    %v2710 = vld [vmem:[#allocation11 + $0x90] sm:$0xff]
    %v2711 = vld [vmem:[#allocation11 + $0x98] sm:$0xff]
    %v2712 = vld [vmem:[#allocation11 + $0xa0] sm:$0xff]
    %v2713 = vld [vmem:[#allocation11 + $0xa8] sm:$0xff]
    %v2714 = vld [vmem:[#allocation11 + $0xb0] sm:$0xff]
    %v2715 = vld [vmem:[#allocation11 + $0xb8] sm:$0xff]
    %v2716 = vld [vmem:[#allocation11 + $0xc0] sm:$0xff]
    %v2717 = vld [vmem:[#allocation11 + $0xc8] sm:$0xff]
    %v2718 = vld [vmem:[#allocation11 + $0xd0] sm:$0xff]
    %v2719 = vld [vmem:[#allocation11 + $0xd8] sm:$0xff]
    %v2720 = vld [vmem:[#allocation11 + $0xe0] sm:$0xff]
    %v2721 = vld [vmem:[#allocation11 + $0xe8] sm:$0xff]
    %v2722 = vld [vmem:[#allocation11 + $0xf0] sm:$0xff]
    %v2723 = vld [vmem:[#allocation11 + $0xf8] sm:$0xff]
    %v2724 = vld [vmem:[#allocation11 + $0x100] sm:$0xff]
    %v2725 = vld [vmem:[#allocation11 + $0x108] sm:$0xff]
    %v2726 = vld [vmem:[#allocation11 + $0x110] sm:$0xff]
    %v2727 = vld [vmem:[#allocation11 + $0x118] sm:$0xff]
    %v2728 = vld [vmem:[#allocation11 + $0x120] sm:$0xff]
    %v2729 = vld [vmem:[#allocation11 + $0x128] sm:$0xff]
    %v2730 = vld [vmem:[#allocation11 + $0x130] sm:$0xff]
    %v2731 = vld [vmem:[#allocation11 + $0x138] sm:$0xff]
    %v2732 = vld [vmem:[#allocation11 + $0x140] sm:$0xff]
    %v2733 = vld [vmem:[#allocation11 + $0x148] sm:$0xff]
    %v2734 = vld [vmem:[#allocation11 + $0x150] sm:$0xff]
    %v2735 = vld [vmem:[#allocation11 + $0x158] sm:$0xff]
    %v2736 = vld [vmem:[#allocation11 + $0x160] sm:$0xff]
    %v2737 = vld [vmem:[#allocation11 + $0x168] sm:$0xff]
    %v2738 = vld [vmem:[#allocation11 + $0x170] sm:$0xff]
    %v2739 = vld [vmem:[#allocation11 + $0x178] sm:$0xff]
    %v2740 = vld [vmem:[#allocation11 + $0x180] sm:$0xff]
    %v2741 = vld [vmem:[#allocation11 + $0x188] sm:$0xff]
    %v2742 = vld [vmem:[#allocation11 + $0x190] sm:$0xff]
    %v2743 = vld [vmem:[#allocation11 + $0x198] sm:$0xff]
    %v2744 = vld [vmem:[#allocation11 + $0x1a0] sm:$0xff]
    %v2745 = vld [vmem:[#allocation11 + $0x1a8] sm:$0xff]
    %v2746 = vld [vmem:[#allocation11 + $0x1b0] sm:$0xff]
    %v2747 = vld [vmem:[#allocation11 + $0x1b8] sm:$0xff]
    %v2748 = vld [vmem:[#allocation11 + $0x1c0] sm:$0xff]
    %v2749 = vld [vmem:[#allocation11 + $0x1c8] sm:$0xff]
    %v2750 = vld [vmem:[#allocation11 + $0x1d0] sm:$0xff]
    %v2751 = vld [vmem:[#allocation11 + $0x1d8] sm:$0xff]
    %v2752 = vld [vmem:[#allocation11 + $0x1e0] sm:$0xff]
    %v2753 = vld [vmem:[#allocation11 + $0x1e8] sm:$0xff]
    %v2754 = vld [vmem:[#allocation11 + $0x1f0] sm:$0xff]
    %v2755 = vld [vmem:[#allocation11 + $0x1f8] sm:$0xff]
    %v2756 = vld [vmem:[#allocation11 + $0x200] sm:$0xff]
    %v2757 = vld [vmem:[#allocation11 + $0x208] sm:$0xff]
    %v2758 = vld [vmem:[#allocation11 + $0x210] sm:$0xff]
    %v2759 = vld [vmem:[#allocation11 + $0x218] sm:$0xff]
    %v2760 = vld [vmem:[#allocation11 + $0x220] sm:$0xff]
    %v2761 = vld [vmem:[#allocation11 + $0x228] sm:$0xff]
    %v2762 = vld [vmem:[#allocation11 + $0x230] sm:$0xff]
    %v2763 = vld [vmem:[#allocation11 + $0x238] sm:$0xff]
    %v2764 = vld [vmem:[#allocation11 + $0x240] sm:$0xff]
    %v2765 = vld [vmem:[#allocation11 + $0x248] sm:$0xff]
    %v2766 = vld [vmem:[#allocation11 + $0x250] sm:$0xff]
    %v2767 = vld [vmem:[#allocation11 + $0x258] sm:$0xff]
    %v2768 = vld [vmem:[#allocation11 + $0x260] sm:$0xff]
    %v2769 = vld [vmem:[#allocation11 + $0x268] sm:$0xff]
    %v2770 = vld [vmem:[#allocation11 + $0x270] sm:$0xff]
    %v2771 = vld [vmem:[#allocation11 + $0x278] sm:$0xff]
    %v2772 = vld [vmem:[#allocation11 + $0x280] sm:$0xff]
    %v2773 = vld [vmem:[#allocation11 + $0x288] sm:$0xff]
    %v2774 = vld [vmem:[#allocation11 + $0x290] sm:$0xff]
    %v2775 = vld [vmem:[#allocation11 + $0x298] sm:$0xff]
    %v2776 = vld [vmem:[#allocation11 + $0x2a0] sm:$0xff]
    %v2777 = vld [vmem:[#allocation11 + $0x2a8] sm:$0xff]
    %v2778 = vld [vmem:[#allocation11 + $0x2b0] sm:$0xff]
    %v2779 = vld [vmem:[#allocation11 + $0x2b8] sm:$0xff]
    %v2780 = vld [vmem:[#allocation11 + $0x2c0] sm:$0xff]
    %v2781 = vld [vmem:[#allocation11 + $0x2c8] sm:$0xff]
    %v2782 = vld [vmem:[#allocation11 + $0x2d0] sm:$0xff]
    %v2783 = vld [vmem:[#allocation11 + $0x2d8] sm:$0xff]
    %v2784 = vld [vmem:[#allocation11 + $0x2e0] sm:$0xff]
    %v2785 = vld [vmem:[#allocation11 + $0x2e8] sm:$0xff]
    %v2786 = vld [vmem:[#allocation11 + $0x2f0] sm:$0xff]
    %v2787 = vld [vmem:[#allocation11 + $0x2f8] sm:$0xff]
    %v2788 = vld [vmem:[#allocation11 + $0x300] sm:$0xff]
    %v2789 = vld [vmem:[#allocation11 + $0x308] sm:$0xff]
    %v2790 = vld [vmem:[#allocation11 + $0x310] sm:$0xff]
    %v2791 = vld [vmem:[#allocation11 + $0x318] sm:$0xff]
    %v2792 = vld [vmem:[#allocation11 + $0x320] sm:$0xff]
    %v2793 = vld [vmem:[#allocation11 + $0x328] sm:$0xff]
    %v2794 = vld [vmem:[#allocation11 + $0x330] sm:$0xff]
    %v2795 = vld [vmem:[#allocation11 + $0x338] sm:$0xff]
    %v2796 = vld [vmem:[#allocation11 + $0x340] sm:$0xff]
    %v2797 = vld [vmem:[#allocation11 + $0x348] sm:$0xff]
    %v2798 = vld [vmem:[#allocation11 + $0x350] sm:$0xff]
    %v2799 = vld [vmem:[#allocation11 + $0x358] sm:$0xff]
    %v2800 = vld [vmem:[#allocation11 + $0x360] sm:$0xff]
    %v2801 = vld [vmem:[#allocation11 + $0x368] sm:$0xff]
    %v2802 = vld [vmem:[#allocation11 + $0x370] sm:$0xff]
    %v2803 = vld [vmem:[#allocation11 + $0x378] sm:$0xff]
    %v2804 = vld [vmem:[#allocation11 + $0x380] sm:$0xff]
    %v2805 = vld [vmem:[#allocation11 + $0x388] sm:$0xff]
    %v2806 = vld [vmem:[#allocation11 + $0x390] sm:$0xff]
    %v2807 = vld [vmem:[#allocation11 + $0x398] sm:$0xff]
    %v2808 = vld [vmem:[#allocation11 + $0x3a0] sm:$0xff]
    %v2809 = vld [vmem:[#allocation11 + $0x3a8] sm:$0xff]
    %v2810 = vld [vmem:[#allocation11 + $0x3b0] sm:$0xff]
    %v2811 = vld [vmem:[#allocation11 + $0x3b8] sm:$0xff]
    %v2812 = vld [vmem:[#allocation11 + $0x3c0] sm:$0xff]
    %v2813 = vld [vmem:[#allocation11 + $0x3c8] sm:$0xff]
    %v2814 = vld [vmem:[#allocation11 + $0x3d0] sm:$0xff]
    %v2815 = vld [vmem:[#allocation11 + $0x3d8] sm:$0xff]
    %v2816 = vld [vmem:[#allocation11 + $0x3e0] sm:$0xff]
    %v2817 = vld [vmem:[#allocation11 + $0x3e8] sm:$0xff]
    %v2818 = vld [vmem:[#allocation11 + $0x3f0] sm:$0xff]
    %v2819 = vld [vmem:[#allocation11 + $0x3f8] sm:$0xff]
    %v2948 = vunpack.c.l.b16 %v2692
    %v2949 = vunpack.c.h.b16 %v2692
    %v2950 = vunpack.c.l.b16 %v2693
    %v2951 = vunpack.c.h.b16 %v2693
    %v2952 = vunpack.c.l.b16 %v2694
    %v2953 = vunpack.c.h.b16 %v2694
    %v2954 = vunpack.c.l.b16 %v2695
    %v2955 = vunpack.c.h.b16 %v2695
    %v2956 = vunpack.c.l.b16 %v2696
    %v2957 = vunpack.c.h.b16 %v2696
    %v2958 = vunpack.c.l.b16 %v2697
    %v2959 = vunpack.c.h.b16 %v2697
    %v2960 = vunpack.c.l.b16 %v2698
    %v2961 = vunpack.c.h.b16 %v2698
    %v2962 = vunpack.c.l.b16 %v2699
    %v2963 = vunpack.c.h.b16 %v2699
    %v2964 = vunpack.c.l.b16 %v2700
    %v2965 = vunpack.c.h.b16 %v2700
    %v2966 = vunpack.c.l.b16 %v2701
    %v2967 = vunpack.c.h.b16 %v2701
    %v2968 = vunpack.c.l.b16 %v2702
    %v2969 = vunpack.c.h.b16 %v2702
    %v2970 = vunpack.c.l.b16 %v2703
    %v2971 = vunpack.c.h.b16 %v2703
    %v2972 = vunpack.c.l.b16 %v2704
    %v2973 = vunpack.c.h.b16 %v2704
    %v2974 = vunpack.c.l.b16 %v2705
    %v2975 = vunpack.c.h.b16 %v2705
    %v2976 = vunpack.c.l.b16 %v2706
    %v2977 = vunpack.c.h.b16 %v2706
    %v2978 = vunpack.c.l.b16 %v2707
    %v2979 = vunpack.c.h.b16 %v2707
    %v2980 = vunpack.c.l.b16 %v2708
    %v2981 = vunpack.c.h.b16 %v2708
    %v2982 = vunpack.c.l.b16 %v2709
    %v2983 = vunpack.c.h.b16 %v2709
    %v2984 = vunpack.c.l.b16 %v2710
    %v2985 = vunpack.c.h.b16 %v2710
    %v2986 = vunpack.c.l.b16 %v2711
    %v2987 = vunpack.c.h.b16 %v2711
    %v2988 = vunpack.c.l.b16 %v2712
    %v2989 = vunpack.c.h.b16 %v2712
    %v2990 = vunpack.c.l.b16 %v2713
    %v2991 = vunpack.c.h.b16 %v2713
    %v2992 = vunpack.c.l.b16 %v2714
    %v2993 = vunpack.c.h.b16 %v2714
    %v2994 = vunpack.c.l.b16 %v2715
    %v2995 = vunpack.c.h.b16 %v2715
    %v2996 = vunpack.c.l.b16 %v2716
    %v2997 = vunpack.c.h.b16 %v2716
    %v2998 = vunpack.c.l.b16 %v2717
    %v2999 = vunpack.c.h.b16 %v2717
    %v3000 = vunpack.c.l.b16 %v2718
    %v3001 = vunpack.c.h.b16 %v2718
    %v3002 = vunpack.c.l.b16 %v2719
    %v3003 = vunpack.c.h.b16 %v2719
    %v3004 = vunpack.c.l.b16 %v2720
    %v3005 = vunpack.c.h.b16 %v2720
    %v3006 = vunpack.c.l.b16 %v2721
    %v3007 = vunpack.c.h.b16 %v2721
    %v3008 = vunpack.c.l.b16 %v2722
    %v3009 = vunpack.c.h.b16 %v2722
    %v3010 = vunpack.c.l.b16 %v2723
    %v3011 = vunpack.c.h.b16 %v2723
    %v3012 = vunpack.c.l.b16 %v2724
    %v3013 = vunpack.c.h.b16 %v2724
    %v3014 = vunpack.c.l.b16 %v2725
    %v3015 = vunpack.c.h.b16 %v2725
    %v3016 = vunpack.c.l.b16 %v2726
    %v3017 = vunpack.c.h.b16 %v2726
    %v3018 = vunpack.c.l.b16 %v2727
    %v3019 = vunpack.c.h.b16 %v2727
    %v3020 = vunpack.c.l.b16 %v2728
    %v3021 = vunpack.c.h.b16 %v2728
    %v3022 = vunpack.c.l.b16 %v2729
    %v3023 = vunpack.c.h.b16 %v2729
    %v3024 = vunpack.c.l.b16 %v2730
    %v3025 = vunpack.c.h.b16 %v2730
    %v3026 = vunpack.c.l.b16 %v2731
    %v3027 = vunpack.c.h.b16 %v2731
    %v3028 = vunpack.c.l.b16 %v2732
    %v3029 = vunpack.c.h.b16 %v2732
    %v3030 = vunpack.c.l.b16 %v2733
    %v3031 = vunpack.c.h.b16 %v2733
    %v3032 = vunpack.c.l.b16 %v2734
    %v3033 = vunpack.c.h.b16 %v2734
    %v3034 = vunpack.c.l.b16 %v2735
    %v3035 = vunpack.c.h.b16 %v2735
    %v3036 = vunpack.c.l.b16 %v2736
    %v3037 = vunpack.c.h.b16 %v2736
    %v3038 = vunpack.c.l.b16 %v2737
    %v3039 = vunpack.c.h.b16 %v2737
    %v3040 = vunpack.c.l.b16 %v2738
    %v3041 = vunpack.c.h.b16 %v2738
    %v3042 = vunpack.c.l.b16 %v2739
    %v3043 = vunpack.c.h.b16 %v2739
    %v3044 = vunpack.c.l.b16 %v2740
    %v3045 = vunpack.c.h.b16 %v2740
    %v3046 = vunpack.c.l.b16 %v2741
    %v3047 = vunpack.c.h.b16 %v2741
    %v3048 = vunpack.c.l.b16 %v2742
    %v3049 = vunpack.c.h.b16 %v2742
    %v3050 = vunpack.c.l.b16 %v2743
    %v3051 = vunpack.c.h.b16 %v2743
    %v3052 = vunpack.c.l.b16 %v2744
    %v3053 = vunpack.c.h.b16 %v2744
    %v3054 = vunpack.c.l.b16 %v2745
    %v3055 = vunpack.c.h.b16 %v2745
    %v3056 = vunpack.c.l.b16 %v2746
    %v3057 = vunpack.c.h.b16 %v2746
    %v3058 = vunpack.c.l.b16 %v2747
    %v3059 = vunpack.c.h.b16 %v2747
    %v3060 = vunpack.c.l.b16 %v2748
    %v3061 = vunpack.c.h.b16 %v2748
    %v3062 = vunpack.c.l.b16 %v2749
    %v3063 = vunpack.c.h.b16 %v2749
    %v3064 = vunpack.c.l.b16 %v2750
    %v3065 = vunpack.c.h.b16 %v2750
    %v3066 = vunpack.c.l.b16 %v2751
    %v3067 = vunpack.c.h.b16 %v2751
    %v3068 = vunpack.c.l.b16 %v2752
    %v3069 = vunpack.c.h.b16 %v2752
    %v3070 = vunpack.c.l.b16 %v2753
    %v3071 = vunpack.c.h.b16 %v2753
    %v3072 = vunpack.c.l.b16 %v2754
    %v3073 = vunpack.c.h.b16 %v2754
    %v3074 = vunpack.c.l.b16 %v2755
    %v3075 = vunpack.c.h.b16 %v2755
    %v3076 = vunpack.c.l.b16 %v2756
    %v3077 = vunpack.c.h.b16 %v2756
    %v3078 = vunpack.c.l.b16 %v2757
    %v3079 = vunpack.c.h.b16 %v2757
    %v3080 = vunpack.c.l.b16 %v2758
    %v3081 = vunpack.c.h.b16 %v2758
    %v3082 = vunpack.c.l.b16 %v2759
    %v3083 = vunpack.c.h.b16 %v2759
    %v3084 = vunpack.c.l.b16 %v2760
    %v3085 = vunpack.c.h.b16 %v2760
    %v3086 = vunpack.c.l.b16 %v2761
    %v3087 = vunpack.c.h.b16 %v2761
    %v3088 = vunpack.c.l.b16 %v2762
    %v3089 = vunpack.c.h.b16 %v2762
    %v3090 = vunpack.c.l.b16 %v2763
    %v3091 = vunpack.c.h.b16 %v2763
    %v3092 = vunpack.c.l.b16 %v2764
    %v3093 = vunpack.c.h.b16 %v2764
    %v3094 = vunpack.c.l.b16 %v2765
    %v3095 = vunpack.c.h.b16 %v2765
    %v3096 = vunpack.c.l.b16 %v2766
    %v3097 = vunpack.c.h.b16 %v2766
    %v3098 = vunpack.c.l.b16 %v2767
    %v3099 = vunpack.c.h.b16 %v2767
    %v3100 = vunpack.c.l.b16 %v2768
    %v3101 = vunpack.c.h.b16 %v2768
    %v3102 = vunpack.c.l.b16 %v2769
    %v3103 = vunpack.c.h.b16 %v2769
    %v3104 = vunpack.c.l.b16 %v2770
    %v3105 = vunpack.c.h.b16 %v2770
    %v3106 = vunpack.c.l.b16 %v2771
    %v3107 = vunpack.c.h.b16 %v2771
    %v3108 = vunpack.c.l.b16 %v2772
    %v3109 = vunpack.c.h.b16 %v2772
    %v3110 = vunpack.c.l.b16 %v2773
    %v3111 = vunpack.c.h.b16 %v2773
    %v3112 = vunpack.c.l.b16 %v2774
    %v3113 = vunpack.c.h.b16 %v2774
    %v3114 = vunpack.c.l.b16 %v2775
    %v3115 = vunpack.c.h.b16 %v2775
    %v3116 = vunpack.c.l.b16 %v2776
    %v3117 = vunpack.c.h.b16 %v2776
    %v3118 = vunpack.c.l.b16 %v2777
    %v3119 = vunpack.c.h.b16 %v2777
    %v3120 = vunpack.c.l.b16 %v2778
    %v3121 = vunpack.c.h.b16 %v2778
    %v3122 = vunpack.c.l.b16 %v2779
    %v3123 = vunpack.c.h.b16 %v2779
    %v3124 = vunpack.c.l.b16 %v2780
    %v3125 = vunpack.c.h.b16 %v2780
    %v3126 = vunpack.c.l.b16 %v2781
    %v3127 = vunpack.c.h.b16 %v2781
    %v3128 = vunpack.c.l.b16 %v2782
    %v3129 = vunpack.c.h.b16 %v2782
    %v3130 = vunpack.c.l.b16 %v2783
    %v3131 = vunpack.c.h.b16 %v2783
    %v3132 = vunpack.c.l.b16 %v2784
    %v3133 = vunpack.c.h.b16 %v2784
    %v3134 = vunpack.c.l.b16 %v2785
    %v3135 = vunpack.c.h.b16 %v2785
    %v3136 = vunpack.c.l.b16 %v2786
    %v3137 = vunpack.c.h.b16 %v2786
    %v3138 = vunpack.c.l.b16 %v2787
    %v3139 = vunpack.c.h.b16 %v2787
    %v3140 = vunpack.c.l.b16 %v2788
    %v3141 = vunpack.c.h.b16 %v2788
    %v3142 = vunpack.c.l.b16 %v2789
    %v3143 = vunpack.c.h.b16 %v2789
    %v3144 = vunpack.c.l.b16 %v2790
    %v3145 = vunpack.c.h.b16 %v2790
    %v3146 = vunpack.c.l.b16 %v2791
    %v3147 = vunpack.c.h.b16 %v2791
    %v3148 = vunpack.c.l.b16 %v2792
    %v3149 = vunpack.c.h.b16 %v2792
    %v3150 = vunpack.c.l.b16 %v2793
    %v3151 = vunpack.c.h.b16 %v2793
    %v3152 = vunpack.c.l.b16 %v2794
    %v3153 = vunpack.c.h.b16 %v2794
    %v3154 = vunpack.c.l.b16 %v2795
    %v3155 = vunpack.c.h.b16 %v2795
    %v3156 = vunpack.c.l.b16 %v2796
    %v3157 = vunpack.c.h.b16 %v2796
    %v3158 = vunpack.c.l.b16 %v2797
    %v3159 = vunpack.c.h.b16 %v2797
    %v3160 = vunpack.c.l.b16 %v2798
    %v3161 = vunpack.c.h.b16 %v2798
    %v3162 = vunpack.c.l.b16 %v2799
    %v3163 = vunpack.c.h.b16 %v2799
    %v3164 = vunpack.c.l.b16 %v2800
    %v3165 = vunpack.c.h.b16 %v2800
    %v3166 = vunpack.c.l.b16 %v2801
    %v3167 = vunpack.c.h.b16 %v2801
    %v3168 = vunpack.c.l.b16 %v2802
    %v3169 = vunpack.c.h.b16 %v2802
    %v3170 = vunpack.c.l.b16 %v2803
    %v3171 = vunpack.c.h.b16 %v2803
    %v3172 = vunpack.c.l.b16 %v2804
    %v3173 = vunpack.c.h.b16 %v2804
    %v3174 = vunpack.c.l.b16 %v2805
    %v3175 = vunpack.c.h.b16 %v2805
    %v3176 = vunpack.c.l.b16 %v2806
    %v3177 = vunpack.c.h.b16 %v2806
    %v3178 = vunpack.c.l.b16 %v2807
    %v3179 = vunpack.c.h.b16 %v2807
    %v3180 = vunpack.c.l.b16 %v2808
    %v3181 = vunpack.c.h.b16 %v2808
    %v3182 = vunpack.c.l.b16 %v2809
    %v3183 = vunpack.c.h.b16 %v2809
    %v3184 = vunpack.c.l.b16 %v2810
    %v3185 = vunpack.c.h.b16 %v2810
    %v3186 = vunpack.c.l.b16 %v2811
    %v3187 = vunpack.c.h.b16 %v2811
    %v3188 = vunpack.c.l.b16 %v2812
    %v3189 = vunpack.c.h.b16 %v2812
    %v3190 = vunpack.c.l.b16 %v2813
    %v3191 = vunpack.c.h.b16 %v2813
    %v3192 = vunpack.c.l.b16 %v2814
    %v3193 = vunpack.c.h.b16 %v2814
    %v3194 = vunpack.c.l.b16 %v2815
    %v3195 = vunpack.c.h.b16 %v2815
    %v3196 = vunpack.c.l.b16 %v2816
    %v3197 = vunpack.c.h.b16 %v2816
    %v3198 = vunpack.c.l.b16 %v2817
    %v3199 = vunpack.c.h.b16 %v2817
    %v3200 = vunpack.c.l.b16 %v2818
    %v3201 = vunpack.c.h.b16 %v2818
    %v3202 = vunpack.c.l.b16 %v2819
    %v3203 = vunpack.c.h.b16 %v2819
    %v3204 = vpack.c.b16 %v2952, %v2948
    %v3205 = vpack.c.b16 %v2953, %v2949
    %v3206 = vpack.c.b16 %v2954, %v2950
    %v3207 = vpack.c.b16 %v2955, %v2951
    %v3208 = vpack.c.b16 %v2960, %v2956
    %v3209 = vpack.c.b16 %v2961, %v2957
    %v3210 = vpack.c.b16 %v2962, %v2958
    %v3211 = vpack.c.b16 %v2963, %v2959
    %v3212 = vpack.c.b16 %v2968, %v2964
    %v3213 = vpack.c.b16 %v2969, %v2965
    %v3214 = vpack.c.b16 %v2970, %v2966
    %v3215 = vpack.c.b16 %v2971, %v2967
    %v3216 = vpack.c.b16 %v2976, %v2972
    %v3217 = vpack.c.b16 %v2977, %v2973
    %v3218 = vpack.c.b16 %v2978, %v2974
    %v3219 = vpack.c.b16 %v2979, %v2975
    %v3220 = vpack.c.b16 %v2984, %v2980
    %v3221 = vpack.c.b16 %v2985, %v2981
    %v3222 = vpack.c.b16 %v2986, %v2982
    %v3223 = vpack.c.b16 %v2987, %v2983
    %v3224 = vpack.c.b16 %v2992, %v2988
    %v3225 = vpack.c.b16 %v2993, %v2989
    %v3226 = vpack.c.b16 %v2994, %v2990
    %v3227 = vpack.c.b16 %v2995, %v2991
    %v3228 = vpack.c.b16 %v3000, %v2996
    %v3229 = vpack.c.b16 %v3001, %v2997
    %v3230 = vpack.c.b16 %v3002, %v2998
    %v3231 = vpack.c.b16 %v3003, %v2999
    %v3232 = vpack.c.b16 %v3008, %v3004
    %v3233 = vpack.c.b16 %v3009, %v3005
    %v3234 = vpack.c.b16 %v3010, %v3006
    %v3235 = vpack.c.b16 %v3011, %v3007
    %v3236 = vpack.c.b16 %v3016, %v3012
    %v3237 = vpack.c.b16 %v3017, %v3013
    %v3238 = vpack.c.b16 %v3018, %v3014
    %v3239 = vpack.c.b16 %v3019, %v3015
    %v3240 = vpack.c.b16 %v3024, %v3020
    %v3241 = vpack.c.b16 %v3025, %v3021
    %v3242 = vpack.c.b16 %v3026, %v3022
    %v3243 = vpack.c.b16 %v3027, %v3023
    %v3244 = vpack.c.b16 %v3032, %v3028
    %v3245 = vpack.c.b16 %v3033, %v3029
    %v3246 = vpack.c.b16 %v3034, %v3030
    %v3247 = vpack.c.b16 %v3035, %v3031
    %v3248 = vpack.c.b16 %v3040, %v3036
    %v3249 = vpack.c.b16 %v3041, %v3037
    %v3250 = vpack.c.b16 %v3042, %v3038
    %v3251 = vpack.c.b16 %v3043, %v3039
    %v3252 = vpack.c.b16 %v3048, %v3044
    %v3253 = vpack.c.b16 %v3049, %v3045
    %v3254 = vpack.c.b16 %v3050, %v3046
    %v3255 = vpack.c.b16 %v3051, %v3047
    %v3256 = vpack.c.b16 %v3056, %v3052
    %v3257 = vpack.c.b16 %v3057, %v3053
    %v3258 = vpack.c.b16 %v3058, %v3054
    %v3259 = vpack.c.b16 %v3059, %v3055
    %v3260 = vpack.c.b16 %v3064, %v3060
    %v3261 = vpack.c.b16 %v3065, %v3061
    %v3262 = vpack.c.b16 %v3066, %v3062
    %v3263 = vpack.c.b16 %v3067, %v3063
    %v3264 = vpack.c.b16 %v3072, %v3068
    %v3265 = vpack.c.b16 %v3073, %v3069
    %v3266 = vpack.c.b16 %v3074, %v3070
    %v3267 = vpack.c.b16 %v3075, %v3071
    %v3268 = vpack.c.b16 %v3080, %v3076
    %v3269 = vpack.c.b16 %v3081, %v3077
    %v3270 = vpack.c.b16 %v3082, %v3078
    %v3271 = vpack.c.b16 %v3083, %v3079
    %v3272 = vpack.c.b16 %v3088, %v3084
    %v3273 = vpack.c.b16 %v3089, %v3085
    %v3274 = vpack.c.b16 %v3090, %v3086
    %v3275 = vpack.c.b16 %v3091, %v3087
    %v3276 = vpack.c.b16 %v3096, %v3092
    %v3277 = vpack.c.b16 %v3097, %v3093
    %v3278 = vpack.c.b16 %v3098, %v3094
    %v3279 = vpack.c.b16 %v3099, %v3095
    %v3280 = vpack.c.b16 %v3104, %v3100
    %v3281 = vpack.c.b16 %v3105, %v3101
    %v3282 = vpack.c.b16 %v3106, %v3102
    %v3283 = vpack.c.b16 %v3107, %v3103
    %v3284 = vpack.c.b16 %v3112, %v3108
    %v3285 = vpack.c.b16 %v3113, %v3109
    %v3286 = vpack.c.b16 %v3114, %v3110
    %v3287 = vpack.c.b16 %v3115, %v3111
    %v3288 = vpack.c.b16 %v3120, %v3116
    %v3289 = vpack.c.b16 %v3121, %v3117
    %v3290 = vpack.c.b16 %v3122, %v3118
    %v3291 = vpack.c.b16 %v3123, %v3119
    %v3292 = vpack.c.b16 %v3128, %v3124
    %v3293 = vpack.c.b16 %v3129, %v3125
    %v3294 = vpack.c.b16 %v3130, %v3126
    %v3295 = vpack.c.b16 %v3131, %v3127
    %v3296 = vpack.c.b16 %v3136, %v3132
    %v3297 = vpack.c.b16 %v3137, %v3133
    %v3298 = vpack.c.b16 %v3138, %v3134
    %v3299 = vpack.c.b16 %v3139, %v3135
    %v3300 = vpack.c.b16 %v3144, %v3140
    %v3301 = vpack.c.b16 %v3145, %v3141
    %v3302 = vpack.c.b16 %v3146, %v3142
    %v3303 = vpack.c.b16 %v3147, %v3143
    %v3304 = vpack.c.b16 %v3152, %v3148
    %v3305 = vpack.c.b16 %v3153, %v3149
    %v3306 = vpack.c.b16 %v3154, %v3150
    %v3307 = vpack.c.b16 %v3155, %v3151
    %v3308 = vpack.c.b16 %v3160, %v3156
    %v3309 = vpack.c.b16 %v3161, %v3157
    %v3310 = vpack.c.b16 %v3162, %v3158
    %v3311 = vpack.c.b16 %v3163, %v3159
    %v3312 = vpack.c.b16 %v3168, %v3164
    %v3313 = vpack.c.b16 %v3169, %v3165
    %v3314 = vpack.c.b16 %v3170, %v3166
    %v3315 = vpack.c.b16 %v3171, %v3167
    %v3316 = vpack.c.b16 %v3176, %v3172
    %v3317 = vpack.c.b16 %v3177, %v3173
    %v3318 = vpack.c.b16 %v3178, %v3174
    %v3319 = vpack.c.b16 %v3179, %v3175
    %v3320 = vpack.c.b16 %v3184, %v3180
    %v3321 = vpack.c.b16 %v3185, %v3181
    %v3322 = vpack.c.b16 %v3186, %v3182
    %v3323 = vpack.c.b16 %v3187, %v3183
    %v3324 = vpack.c.b16 %v3192, %v3188
    %v3325 = vpack.c.b16 %v3193, %v3189
    %v3326 = vpack.c.b16 %v3194, %v3190
    %v3327 = vpack.c.b16 %v3195, %v3191
    %v3328 = vpack.c.b16 %v3200, %v3196
    %v3329 = vpack.c.b16 %v3201, %v3197
    %v3330 = vpack.c.b16 %v3202, %v3198
    %v3331 = vpack.c.b16 %v3203, %v3199
    %3460 = vmatprep.subr.bf16.mxu0 %v3233
    %3461 = vmatpush1.bf16.msra.mxu0 %v3232
    %3462 = vmatprep.subr.bf16.mxu0 %v3229
    %3463 = vmatpush1.bf16.msra.mxu0 %v3228
    %3464 = vmatprep.subr.bf16.mxu0 %v3225
    %3465 = vmatpush1.bf16.msra.mxu0 %v3224
    %3466 = vmatprep.subr.bf16.mxu0 %v3221
    %3467 = vmatpush1.bf16.msra.mxu0 %v3220
    %3468 = vmatprep.subr.bf16.mxu0 %v3217
    %3469 = vmatpush1.bf16.msra.mxu0 %v3216
    %3470 = vmatprep.subr.bf16.mxu0 %v3213
    %3471 = vmatpush1.bf16.msra.mxu0 %v3212
    %3472 = vmatprep.subr.bf16.mxu0 %v3209
    %3473 = vmatpush1.bf16.msra.mxu0 %v3208
    %3474 = vmatprep.subr.bf16.mxu0 %v3205
    %3475 = vmatpush1.bf16.msra.mxu0 %v3204
    %3476 = vmatprep.subr.bf16.mxu0 %v3265
    %3477 = vmatpush2.bf16.msra.mxu0 %v3264
    %3478 = vmatprep.subr.bf16.mxu0 %v3261
    %3479 = vmatpush2.bf16.msra.mxu0 %v3260
    %3480 = vmatprep.subr.bf16.mxu0 %v3257
    %3481 = vmatpush2.bf16.msra.mxu0 %v3256
    %3482 = vmatprep.subr.bf16.mxu0 %v3253
    %3483 = vmatpush2.bf16.msra.mxu0 %v3252
    %3484 = vmatprep.subr.bf16.mxu0 %v3249
    %3485 = vmatpush2.bf16.msra.mxu0 %v3248
    %3486 = vmatprep.subr.bf16.mxu0 %v3245
    %3487 = vmatpush2.bf16.msra.mxu0 %v3244
    %3488 = vmatprep.subr.bf16.mxu0 %v3241
    %3489 = vmatpush2.bf16.msra.mxu0 %v3240
    %3490 = vmatprep.subr.bf16.mxu0 %v3237
    %3491 = vmatpush2.bf16.msra.mxu0 %v3236
    %3492 = vmatprep.mubr.bf16.mxu0 %v2689
    %3493 = vmatmul.mubr.bf16.gmra.mxu0 %v2688
    %v3494 = vpop.f32.mrf.mxu0
    %v3495 = vadd.f32 0.0, %v3494
    %v3496 = vpop.f32.mrf.mxu0
    %v3497 = vadd.f32 0.0, %v3496
    %v3498 = vpop.f32.mrf.mxu0
    %v3499 = vpop.f32.mrf.mxu0
    %3500 = vdwg.mxu0
    %3501 = vmatprep.subr.bf16.mxu0 %v3297
    %3502 = vmatpush1.bf16.msra.mxu0 %v3296
    %3503 = vmatprep.subr.bf16.mxu0 %v3293
    %3504 = vmatpush1.bf16.msra.mxu0 %v3292
    %3505 = vmatprep.subr.bf16.mxu0 %v3289
    %3506 = vmatpush1.bf16.msra.mxu0 %v3288
    %3507 = vmatprep.subr.bf16.mxu0 %v3285
    %3508 = vmatpush1.bf16.msra.mxu0 %v3284
    %3509 = vmatprep.subr.bf16.mxu0 %v3281
    %3510 = vmatpush1.bf16.msra.mxu0 %v3280
    %3511 = vmatprep.subr.bf16.mxu0 %v3277
    %3512 = vmatpush1.bf16.msra.mxu0 %v3276
    %3513 = vmatprep.subr.bf16.mxu0 %v3273
    %3514 = vmatpush1.bf16.msra.mxu0 %v3272
    %3515 = vmatprep.subr.bf16.mxu0 %v3269
    %3516 = vmatpush1.bf16.msra.mxu0 %v3268
    %3517 = vmatprep.subr.bf16.mxu0 %v3329
    %3518 = vmatpush2.bf16.msra.mxu0 %v3328
    %3519 = vmatprep.subr.bf16.mxu0 %v3325
    %3520 = vmatpush2.bf16.msra.mxu0 %v3324
    %3521 = vmatprep.subr.bf16.mxu0 %v3321
    %3522 = vmatpush2.bf16.msra.mxu0 %v3320
    %3523 = vmatprep.subr.bf16.mxu0 %v3317
    %3524 = vmatpush2.bf16.msra.mxu0 %v3316
    %3525 = vmatprep.subr.bf16.mxu0 %v3313
    %3526 = vmatpush2.bf16.msra.mxu0 %v3312
    %3527 = vmatprep.subr.bf16.mxu0 %v3309
    %3528 = vmatpush2.bf16.msra.mxu0 %v3308
    %3529 = vmatprep.subr.bf16.mxu0 %v3305
    %3530 = vmatpush2.bf16.msra.mxu0 %v3304
    %3531 = vmatprep.subr.bf16.mxu0 %v3301
    %3532 = vmatpush2.bf16.msra.mxu0 %v3300
    %3533 = vmatprep.mubr.bf16.mxu0 %v2691
    %3534 = vmatmul.mubr.bf16.gmra.mxu0 %v2690
    %v3535 = vpop.f32.mrf.mxu0
    %v3536 = vadd.f32 %v3495, %v3535
    %v3537 = vpop.f32.mrf.mxu0
    %v3538 = vadd.f32 %v3497, %v3537
    %v3539 = vpop.f32.mrf.mxu0
    %v3540 = vpop.f32.mrf.mxu0
    %3541 = vdwg.mxu0
    %3542 = vmatprep.subr.bf16.mxu0 %v3235
    %3543 = vmatpush1.bf16.msra.mxu0 %v3234
    %3544 = vmatprep.subr.bf16.mxu0 %v3231
    %3545 = vmatpush1.bf16.msra.mxu0 %v3230
    %3546 = vmatprep.subr.bf16.mxu0 %v3227
    %3547 = vmatpush1.bf16.msra.mxu0 %v3226
    %3548 = vmatprep.subr.bf16.mxu0 %v3223
    %3549 = vmatpush1.bf16.msra.mxu0 %v3222
    %3550 = vmatprep.subr.bf16.mxu0 %v3219
    %3551 = vmatpush1.bf16.msra.mxu0 %v3218
    %3552 = vmatprep.subr.bf16.mxu0 %v3215
    %3553 = vmatpush1.bf16.msra.mxu0 %v3214
    %3554 = vmatprep.subr.bf16.mxu0 %v3211
    %3555 = vmatpush1.bf16.msra.mxu0 %v3210
    %3556 = vmatprep.subr.bf16.mxu0 %v3207
    %3557 = vmatpush1.bf16.msra.mxu0 %v3206
    %3558 = vmatprep.subr.bf16.mxu0 %v3267
    %3559 = vmatpush2.bf16.msra.mxu0 %v3266
    %3560 = vmatprep.subr.bf16.mxu0 %v3263
    %3561 = vmatpush2.bf16.msra.mxu0 %v3262
    %3562 = vmatprep.subr.bf16.mxu0 %v3259
    %3563 = vmatpush2.bf16.msra.mxu0 %v3258
    %3564 = vmatprep.subr.bf16.mxu0 %v3255
    %3565 = vmatpush2.bf16.msra.mxu0 %v3254
    %3566 = vmatprep.subr.bf16.mxu0 %v3251
    %3567 = vmatpush2.bf16.msra.mxu0 %v3250
    %3568 = vmatprep.subr.bf16.mxu0 %v3247
    %3569 = vmatpush2.bf16.msra.mxu0 %v3246
    %3570 = vmatprep.subr.bf16.mxu0 %v3243
    %3571 = vmatpush2.bf16.msra.mxu0 %v3242
    %3572 = vmatprep.subr.bf16.mxu0 %v3239
    %3573 = vmatpush2.bf16.msra.mxu0 %v3238
    %3574 = vmatprep.mubr.bf16.mxu0 %v2689
    %3575 = vmatmul.mubr.bf16.gmra.mxu0 %v2688
    %v3576 = vpop.f32.mrf.mxu0
    %v3577 = vadd.f32 0.0, %v3576
    %v3578 = vpop.f32.mrf.mxu0
    %v3579 = vadd.f32 0.0, %v3578
    %v3580 = vpop.f32.mrf.mxu0
    %v3581 = vpop.f32.mrf.mxu0
    %3582 = vdwg.mxu0
    %3583 = vmatprep.subr.bf16.mxu0 %v3299
    %3584 = vmatpush1.bf16.msra.mxu0 %v3298
    %3585 = vmatprep.subr.bf16.mxu0 %v3295
    %3586 = vmatpush1.bf16.msra.mxu0 %v3294
    %3587 = vmatprep.subr.bf16.mxu0 %v3291
    %3588 = vmatpush1.bf16.msra.mxu0 %v3290
    %3589 = vmatprep.subr.bf16.mxu0 %v3287
    %3590 = vmatpush1.bf16.msra.mxu0 %v3286
    %3591 = vmatprep.subr.bf16.mxu0 %v3283
    %3592 = vmatpush1.bf16.msra.mxu0 %v3282
    %3593 = vmatprep.subr.bf16.mxu0 %v3279
    %3594 = vmatpush1.bf16.msra.mxu0 %v3278
    %3595 = vmatprep.subr.bf16.mxu0 %v3275
    %3596 = vmatpush1.bf16.msra.mxu0 %v3274
    %3597 = vmatprep.subr.bf16.mxu0 %v3271
    %3598 = vmatpush1.bf16.msra.mxu0 %v3270
    %3599 = vmatprep.subr.bf16.mxu0 %v3331
    %3600 = vmatpush2.bf16.msra.mxu0 %v3330
    %3601 = vmatprep.subr.bf16.mxu0 %v3327
    %3602 = vmatpush2.bf16.msra.mxu0 %v3326
    %3603 = vmatprep.subr.bf16.mxu0 %v3323
    %3604 = vmatpush2.bf16.msra.mxu0 %v3322
    %3605 = vmatprep.subr.bf16.mxu0 %v3319
    %3606 = vmatpush2.bf16.msra.mxu0 %v3318
    %3607 = vmatprep.subr.bf16.mxu0 %v3315
    %3608 = vmatpush2.bf16.msra.mxu0 %v3314
    %3609 = vmatprep.subr.bf16.mxu0 %v3311
    %3610 = vmatpush2.bf16.msra.mxu0 %v3310
    %3611 = vmatprep.subr.bf16.mxu0 %v3307
    %3612 = vmatpush2.bf16.msra.mxu0 %v3306
    %3613 = vmatprep.subr.bf16.mxu0 %v3303
    %3614 = vmatpush2.bf16.msra.mxu0 %v3302
    %3615 = vmatprep.mubr.bf16.mxu0 %v2691
    %3616 = vmatmul.mubr.bf16.gmra.mxu0 %v2690
    %v3617 = vpop.f32.mrf.mxu0
    %v3618 = vadd.f32 %v3577, %v3617
    %v3619 = vpop.f32.mrf.mxu0
    %v3620 = vadd.f32 %v3579, %v3619
    %v3621 = vpop.f32.mrf.mxu0
    %v3622 = vpop.f32.mrf.mxu0
    %3623 = vdwg.mxu0
    %v3752 = vunpack.c.l.b16 %v2560
    %v3753 = vunpack.c.h.b16 %v2560
    %v3754 = vunpack.c.l.b16 %v2561
    %v3755 = vunpack.c.h.b16 %v2561
    %v3756 = vunpack.c.l.b16 %v2562
    %v3757 = vunpack.c.h.b16 %v2562
    %v3758 = vunpack.c.l.b16 %v2563
    %v3759 = vunpack.c.h.b16 %v2563
    %v3760 = vunpack.c.l.b16 %v2564
    %v3761 = vunpack.c.h.b16 %v2564
    %v3762 = vunpack.c.l.b16 %v2565
    %v3763 = vunpack.c.h.b16 %v2565
    %v3764 = vunpack.c.l.b16 %v2566
    %v3765 = vunpack.c.h.b16 %v2566
    %v3766 = vunpack.c.l.b16 %v2567
    %v3767 = vunpack.c.h.b16 %v2567
    %v3768 = vunpack.c.l.b16 %v2568
    %v3769 = vunpack.c.h.b16 %v2568
    %v3770 = vunpack.c.l.b16 %v2569
    %v3771 = vunpack.c.h.b16 %v2569
    %v3772 = vunpack.c.l.b16 %v2570
    %v3773 = vunpack.c.h.b16 %v2570
    %v3774 = vunpack.c.l.b16 %v2571
    %v3775 = vunpack.c.h.b16 %v2571
    %v3776 = vunpack.c.l.b16 %v2572
    %v3777 = vunpack.c.h.b16 %v2572
    %v3778 = vunpack.c.l.b16 %v2573
    %v3779 = vunpack.c.h.b16 %v2573
    %v3780 = vunpack.c.l.b16 %v2574
    %v3781 = vunpack.c.h.b16 %v2574
    %v3782 = vunpack.c.l.b16 %v2575
    %v3783 = vunpack.c.h.b16 %v2575
    %v3784 = vunpack.c.l.b16 %v2576
    %v3785 = vunpack.c.h.b16 %v2576
    %v3786 = vunpack.c.l.b16 %v2577
    %v3787 = vunpack.c.h.b16 %v2577
    %v3788 = vunpack.c.l.b16 %v2578
    %v3789 = vunpack.c.h.b16 %v2578
    %v3790 = vunpack.c.l.b16 %v2579
    %v3791 = vunpack.c.h.b16 %v2579
    %v3792 = vunpack.c.l.b16 %v2580
    %v3793 = vunpack.c.h.b16 %v2580
    %v3794 = vunpack.c.l.b16 %v2581
    %v3795 = vunpack.c.h.b16 %v2581
    %v3796 = vunpack.c.l.b16 %v2582
    %v3797 = vunpack.c.h.b16 %v2582
    %v3798 = vunpack.c.l.b16 %v2583
    %v3799 = vunpack.c.h.b16 %v2583
    %v3800 = vunpack.c.l.b16 %v2584
    %v3801 = vunpack.c.h.b16 %v2584
    %v3802 = vunpack.c.l.b16 %v2585
    %v3803 = vunpack.c.h.b16 %v2585
    %v3804 = vunpack.c.l.b16 %v2586
    %v3805 = vunpack.c.h.b16 %v2586
    %v3806 = vunpack.c.l.b16 %v2587
    %v3807 = vunpack.c.h.b16 %v2587
    %v3808 = vunpack.c.l.b16 %v2588
    %v3809 = vunpack.c.h.b16 %v2588
    %v3810 = vunpack.c.l.b16 %v2589
    %v3811 = vunpack.c.h.b16 %v2589
    %v3812 = vunpack.c.l.b16 %v2590
    %v3813 = vunpack.c.h.b16 %v2590
    %v3814 = vunpack.c.l.b16 %v2591
    %v3815 = vunpack.c.h.b16 %v2591
    %v3816 = vunpack.c.l.b16 %v2592
    %v3817 = vunpack.c.h.b16 %v2592
    %v3818 = vunpack.c.l.b16 %v2593
    %v3819 = vunpack.c.h.b16 %v2593
    %v3820 = vunpack.c.l.b16 %v2594
    %v3821 = vunpack.c.h.b16 %v2594
    %v3822 = vunpack.c.l.b16 %v2595
    %v3823 = vunpack.c.h.b16 %v2595
    %v3824 = vunpack.c.l.b16 %v2596
    %v3825 = vunpack.c.h.b16 %v2596
    %v3826 = vunpack.c.l.b16 %v2597
    %v3827 = vunpack.c.h.b16 %v2597
    %v3828 = vunpack.c.l.b16 %v2598
    %v3829 = vunpack.c.h.b16 %v2598
    %v3830 = vunpack.c.l.b16 %v2599
    %v3831 = vunpack.c.h.b16 %v2599
    %v3832 = vunpack.c.l.b16 %v2600
    %v3833 = vunpack.c.h.b16 %v2600
    %v3834 = vunpack.c.l.b16 %v2601
    %v3835 = vunpack.c.h.b16 %v2601
    %v3836 = vunpack.c.l.b16 %v2602
    %v3837 = vunpack.c.h.b16 %v2602
    %v3838 = vunpack.c.l.b16 %v2603
    %v3839 = vunpack.c.h.b16 %v2603
    %v3840 = vunpack.c.l.b16 %v2604
    %v3841 = vunpack.c.h.b16 %v2604
    %v3842 = vunpack.c.l.b16 %v2605
    %v3843 = vunpack.c.h.b16 %v2605
    %v3844 = vunpack.c.l.b16 %v2606
    %v3845 = vunpack.c.h.b16 %v2606
    %v3846 = vunpack.c.l.b16 %v2607
    %v3847 = vunpack.c.h.b16 %v2607
    %v3848 = vunpack.c.l.b16 %v2608
    %v3849 = vunpack.c.h.b16 %v2608
    %v3850 = vunpack.c.l.b16 %v2609
    %v3851 = vunpack.c.h.b16 %v2609
    %v3852 = vunpack.c.l.b16 %v2610
    %v3853 = vunpack.c.h.b16 %v2610
    %v3854 = vunpack.c.l.b16 %v2611
    %v3855 = vunpack.c.h.b16 %v2611
    %v3856 = vunpack.c.l.b16 %v2612
    %v3857 = vunpack.c.h.b16 %v2612
    %v3858 = vunpack.c.l.b16 %v2613
    %v3859 = vunpack.c.h.b16 %v2613
    %v3860 = vunpack.c.l.b16 %v2614
    %v3861 = vunpack.c.h.b16 %v2614
    %v3862 = vunpack.c.l.b16 %v2615
    %v3863 = vunpack.c.h.b16 %v2615
    %v3864 = vunpack.c.l.b16 %v2616
    %v3865 = vunpack.c.h.b16 %v2616
    %v3866 = vunpack.c.l.b16 %v2617
    %v3867 = vunpack.c.h.b16 %v2617
    %v3868 = vunpack.c.l.b16 %v2618
    %v3869 = vunpack.c.h.b16 %v2618
    %v3870 = vunpack.c.l.b16 %v2619
    %v3871 = vunpack.c.h.b16 %v2619
    %v3872 = vunpack.c.l.b16 %v2620
    %v3873 = vunpack.c.h.b16 %v2620
    %v3874 = vunpack.c.l.b16 %v2621
    %v3875 = vunpack.c.h.b16 %v2621
    %v3876 = vunpack.c.l.b16 %v2622
    %v3877 = vunpack.c.h.b16 %v2622
    %v3878 = vunpack.c.l.b16 %v2623
    %v3879 = vunpack.c.h.b16 %v2623
    %v3880 = vunpack.c.l.b16 %v2624
    %v3881 = vunpack.c.h.b16 %v2624
    %v3882 = vunpack.c.l.b16 %v2625
    %v3883 = vunpack.c.h.b16 %v2625
    %v3884 = vunpack.c.l.b16 %v2626
    %v3885 = vunpack.c.h.b16 %v2626
    %v3886 = vunpack.c.l.b16 %v2627
    %v3887 = vunpack.c.h.b16 %v2627
    %v3888 = vunpack.c.l.b16 %v2628
    %v3889 = vunpack.c.h.b16 %v2628
    %v3890 = vunpack.c.l.b16 %v2629
    %v3891 = vunpack.c.h.b16 %v2629
    %v3892 = vunpack.c.l.b16 %v2630
    %v3893 = vunpack.c.h.b16 %v2630
    %v3894 = vunpack.c.l.b16 %v2631
    %v3895 = vunpack.c.h.b16 %v2631
    %v3896 = vunpack.c.l.b16 %v2632
    %v3897 = vunpack.c.h.b16 %v2632
    %v3898 = vunpack.c.l.b16 %v2633
    %v3899 = vunpack.c.h.b16 %v2633
    %v3900 = vunpack.c.l.b16 %v2634
    %v3901 = vunpack.c.h.b16 %v2634
    %v3902 = vunpack.c.l.b16 %v2635
    %v3903 = vunpack.c.h.b16 %v2635
    %v3904 = vunpack.c.l.b16 %v2636
    %v3905 = vunpack.c.h.b16 %v2636
    %v3906 = vunpack.c.l.b16 %v2637
    %v3907 = vunpack.c.h.b16 %v2637
    %v3908 = vunpack.c.l.b16 %v2638
    %v3909 = vunpack.c.h.b16 %v2638
    %v3910 = vunpack.c.l.b16 %v2639
    %v3911 = vunpack.c.h.b16 %v2639
    %v3912 = vunpack.c.l.b16 %v2640
    %v3913 = vunpack.c.h.b16 %v2640
    %v3914 = vunpack.c.l.b16 %v2641
    %v3915 = vunpack.c.h.b16 %v2641
    %v3916 = vunpack.c.l.b16 %v2642
    %v3917 = vunpack.c.h.b16 %v2642
    %v3918 = vunpack.c.l.b16 %v2643
    %v3919 = vunpack.c.h.b16 %v2643
    %v3920 = vunpack.c.l.b16 %v2644
    %v3921 = vunpack.c.h.b16 %v2644
    %v3922 = vunpack.c.l.b16 %v2645
    %v3923 = vunpack.c.h.b16 %v2645
    %v3924 = vunpack.c.l.b16 %v2646
    %v3925 = vunpack.c.h.b16 %v2646
    %v3926 = vunpack.c.l.b16 %v2647
    %v3927 = vunpack.c.h.b16 %v2647
    %v3928 = vunpack.c.l.b16 %v2648
    %v3929 = vunpack.c.h.b16 %v2648
    %v3930 = vunpack.c.l.b16 %v2649
    %v3931 = vunpack.c.h.b16 %v2649
    %v3932 = vunpack.c.l.b16 %v2650
    %v3933 = vunpack.c.h.b16 %v2650
    %v3934 = vunpack.c.l.b16 %v2651
    %v3935 = vunpack.c.h.b16 %v2651
    %v3936 = vunpack.c.l.b16 %v2652
    %v3937 = vunpack.c.h.b16 %v2652
    %v3938 = vunpack.c.l.b16 %v2653
    %v3939 = vunpack.c.h.b16 %v2653
    %v3940 = vunpack.c.l.b16 %v2654
    %v3941 = vunpack.c.h.b16 %v2654
    %v3942 = vunpack.c.l.b16 %v2655
    %v3943 = vunpack.c.h.b16 %v2655
    %v3944 = vunpack.c.l.b16 %v2656
    %v3945 = vunpack.c.h.b16 %v2656
    %v3946 = vunpack.c.l.b16 %v2657
    %v3947 = vunpack.c.h.b16 %v2657
    %v3948 = vunpack.c.l.b16 %v2658
    %v3949 = vunpack.c.h.b16 %v2658
    %v3950 = vunpack.c.l.b16 %v2659
    %v3951 = vunpack.c.h.b16 %v2659
    %v3952 = vunpack.c.l.b16 %v2660
    %v3953 = vunpack.c.h.b16 %v2660
    %v3954 = vunpack.c.l.b16 %v2661
    %v3955 = vunpack.c.h.b16 %v2661
    %v3956 = vunpack.c.l.b16 %v2662
    %v3957 = vunpack.c.h.b16 %v2662
    %v3958 = vunpack.c.l.b16 %v2663
    %v3959 = vunpack.c.h.b16 %v2663
    %v3960 = vunpack.c.l.b16 %v2664
    %v3961 = vunpack.c.h.b16 %v2664
    %v3962 = vunpack.c.l.b16 %v2665
    %v3963 = vunpack.c.h.b16 %v2665
    %v3964 = vunpack.c.l.b16 %v2666
    %v3965 = vunpack.c.h.b16 %v2666
    %v3966 = vunpack.c.l.b16 %v2667
    %v3967 = vunpack.c.h.b16 %v2667
    %v3968 = vunpack.c.l.b16 %v2668
    %v3969 = vunpack.c.h.b16 %v2668
    %v3970 = vunpack.c.l.b16 %v2669
    %v3971 = vunpack.c.h.b16 %v2669
    %v3972 = vunpack.c.l.b16 %v2670
    %v3973 = vunpack.c.h.b16 %v2670
    %v3974 = vunpack.c.l.b16 %v2671
    %v3975 = vunpack.c.h.b16 %v2671
    %v3976 = vunpack.c.l.b16 %v2672
    %v3977 = vunpack.c.h.b16 %v2672
    %v3978 = vunpack.c.l.b16 %v2673
    %v3979 = vunpack.c.h.b16 %v2673
    %v3980 = vunpack.c.l.b16 %v2674
    %v3981 = vunpack.c.h.b16 %v2674
    %v3982 = vunpack.c.l.b16 %v2675
    %v3983 = vunpack.c.h.b16 %v2675
    %v3984 = vunpack.c.l.b16 %v2676
    %v3985 = vunpack.c.h.b16 %v2676
    %v3986 = vunpack.c.l.b16 %v2677
    %v3987 = vunpack.c.h.b16 %v2677
    %v3988 = vunpack.c.l.b16 %v2678
    %v3989 = vunpack.c.h.b16 %v2678
    %v3990 = vunpack.c.l.b16 %v2679
    %v3991 = vunpack.c.h.b16 %v2679
    %v3992 = vunpack.c.l.b16 %v2680
    %v3993 = vunpack.c.h.b16 %v2680
    %v3994 = vunpack.c.l.b16 %v2681
    %v3995 = vunpack.c.h.b16 %v2681
    %v3996 = vunpack.c.l.b16 %v2682
    %v3997 = vunpack.c.h.b16 %v2682
    %v3998 = vunpack.c.l.b16 %v2683
    %v3999 = vunpack.c.h.b16 %v2683
    %v4000 = vunpack.c.l.b16 %v2684
    %v4001 = vunpack.c.h.b16 %v2684
    %v4002 = vunpack.c.l.b16 %v2685
    %v4003 = vunpack.c.h.b16 %v2685
    %v4004 = vunpack.c.l.b16 %v2686
    %v4005 = vunpack.c.h.b16 %v2686
    %v4006 = vunpack.c.l.b16 %v2687
    %v4007 = vunpack.c.h.b16 %v2687
    %v4008 = vpack.c.b16 %v3756, %v3752
    %v4009 = vpack.c.b16 %v3757, %v3753
    %v4010 = vpack.c.b16 %v3758, %v3754
    %v4011 = vpack.c.b16 %v3759, %v3755
    %v4012 = vpack.c.b16 %v3764, %v3760
    %v4013 = vpack.c.b16 %v3765, %v3761
    %v4014 = vpack.c.b16 %v3766, %v3762
    %v4015 = vpack.c.b16 %v3767, %v3763
    %v4016 = vpack.c.b16 %v3772, %v3768
    %v4017 = vpack.c.b16 %v3773, %v3769
    %v4018 = vpack.c.b16 %v3774, %v3770
    %v4019 = vpack.c.b16 %v3775, %v3771
    %v4020 = vpack.c.b16 %v3780, %v3776
    %v4021 = vpack.c.b16 %v3781, %v3777
    %v4022 = vpack.c.b16 %v3782, %v3778
    %v4023 = vpack.c.b16 %v3783, %v3779
    %v4024 = vpack.c.b16 %v3788, %v3784
    %v4025 = vpack.c.b16 %v3789, %v3785
    %v4026 = vpack.c.b16 %v3790, %v3786
    %v4027 = vpack.c.b16 %v3791, %v3787
    %v4028 = vpack.c.b16 %v3796, %v3792
    %v4029 = vpack.c.b16 %v3797, %v3793
    %v4030 = vpack.c.b16 %v3798, %v3794
    %v4031 = vpack.c.b16 %v3799, %v3795
    %v4032 = vpack.c.b16 %v3804, %v3800
    %v4033 = vpack.c.b16 %v3805, %v3801
    %v4034 = vpack.c.b16 %v3806, %v3802
    %v4035 = vpack.c.b16 %v3807, %v3803
    %v4036 = vpack.c.b16 %v3812, %v3808
    %v4037 = vpack.c.b16 %v3813, %v3809
    %v4038 = vpack.c.b16 %v3814, %v3810
    %v4039 = vpack.c.b16 %v3815, %v3811
    %v4040 = vpack.c.b16 %v3820, %v3816
    %v4041 = vpack.c.b16 %v3821, %v3817
    %v4042 = vpack.c.b16 %v3822, %v3818
    %v4043 = vpack.c.b16 %v3823, %v3819
    %v4044 = vpack.c.b16 %v3828, %v3824
    %v4045 = vpack.c.b16 %v3829, %v3825
    %v4046 = vpack.c.b16 %v3830, %v3826
    %v4047 = vpack.c.b16 %v3831, %v3827
    %v4048 = vpack.c.b16 %v3836, %v3832
    %v4049 = vpack.c.b16 %v3837, %v3833
    %v4050 = vpack.c.b16 %v3838, %v3834
    %v4051 = vpack.c.b16 %v3839, %v3835
    %v4052 = vpack.c.b16 %v3844, %v3840
    %v4053 = vpack.c.b16 %v3845, %v3841
    %v4054 = vpack.c.b16 %v3846, %v3842
    %v4055 = vpack.c.b16 %v3847, %v3843
    %v4056 = vpack.c.b16 %v3852, %v3848
    %v4057 = vpack.c.b16 %v3853, %v3849
    %v4058 = vpack.c.b16 %v3854, %v3850
    %v4059 = vpack.c.b16 %v3855, %v3851
    %v4060 = vpack.c.b16 %v3860, %v3856
    %v4061 = vpack.c.b16 %v3861, %v3857
    %v4062 = vpack.c.b16 %v3862, %v3858
    %v4063 = vpack.c.b16 %v3863, %v3859
    %v4064 = vpack.c.b16 %v3868, %v3864
    %v4065 = vpack.c.b16 %v3869, %v3865
    %v4066 = vpack.c.b16 %v3870, %v3866
    %v4067 = vpack.c.b16 %v3871, %v3867
    %v4068 = vpack.c.b16 %v3876, %v3872
    %v4069 = vpack.c.b16 %v3877, %v3873
    %v4070 = vpack.c.b16 %v3878, %v3874
    %v4071 = vpack.c.b16 %v3879, %v3875
    %v4072 = vpack.c.b16 %v3884, %v3880
    %v4073 = vpack.c.b16 %v3885, %v3881
    %v4074 = vpack.c.b16 %v3886, %v3882
    %v4075 = vpack.c.b16 %v3887, %v3883
    %v4076 = vpack.c.b16 %v3892, %v3888
    %v4077 = vpack.c.b16 %v3893, %v3889
    %v4078 = vpack.c.b16 %v3894, %v3890
    %v4079 = vpack.c.b16 %v3895, %v3891
    %v4080 = vpack.c.b16 %v3900, %v3896
    %v4081 = vpack.c.b16 %v3901, %v3897
    %v4082 = vpack.c.b16 %v3902, %v3898
    %v4083 = vpack.c.b16 %v3903, %v3899
    %v4084 = vpack.c.b16 %v3908, %v3904
    %v4085 = vpack.c.b16 %v3909, %v3905
    %v4086 = vpack.c.b16 %v3910, %v3906
    %v4087 = vpack.c.b16 %v3911, %v3907
    %v4088 = vpack.c.b16 %v3916, %v3912
    %v4089 = vpack.c.b16 %v3917, %v3913
    %v4090 = vpack.c.b16 %v3918, %v3914
    %v4091 = vpack.c.b16 %v3919, %v3915
    %v4092 = vpack.c.b16 %v3924, %v3920
    %v4093 = vpack.c.b16 %v3925, %v3921
    %v4094 = vpack.c.b16 %v3926, %v3922
    %v4095 = vpack.c.b16 %v3927, %v3923
    %v4096 = vpack.c.b16 %v3932, %v3928
    %v4097 = vpack.c.b16 %v3933, %v3929
    %v4098 = vpack.c.b16 %v3934, %v3930
    %v4099 = vpack.c.b16 %v3935, %v3931
    %v4100 = vpack.c.b16 %v3940, %v3936
    %v4101 = vpack.c.b16 %v3941, %v3937
    %v4102 = vpack.c.b16 %v3942, %v3938
    %v4103 = vpack.c.b16 %v3943, %v3939
    %v4104 = vpack.c.b16 %v3948, %v3944
    %v4105 = vpack.c.b16 %v3949, %v3945
    %v4106 = vpack.c.b16 %v3950, %v3946
    %v4107 = vpack.c.b16 %v3951, %v3947
    %v4108 = vpack.c.b16 %v3956, %v3952
    %v4109 = vpack.c.b16 %v3957, %v3953
    %v4110 = vpack.c.b16 %v3958, %v3954
    %v4111 = vpack.c.b16 %v3959, %v3955
    %v4112 = vpack.c.b16 %v3964, %v3960
    %v4113 = vpack.c.b16 %v3965, %v3961
    %v4114 = vpack.c.b16 %v3966, %v3962
    %v4115 = vpack.c.b16 %v3967, %v3963
    %v4116 = vpack.c.b16 %v3972, %v3968
    %v4117 = vpack.c.b16 %v3973, %v3969
    %v4118 = vpack.c.b16 %v3974, %v3970
    %v4119 = vpack.c.b16 %v3975, %v3971
    %v4120 = vpack.c.b16 %v3980, %v3976
    %v4121 = vpack.c.b16 %v3981, %v3977
    %v4122 = vpack.c.b16 %v3982, %v3978
    %v4123 = vpack.c.b16 %v3983, %v3979
    %v4124 = vpack.c.b16 %v3988, %v3984
    %v4125 = vpack.c.b16 %v3989, %v3985
    %v4126 = vpack.c.b16 %v3990, %v3986
    %v4127 = vpack.c.b16 %v3991, %v3987
    %v4128 = vpack.c.b16 %v3996, %v3992
    %v4129 = vpack.c.b16 %v3997, %v3993
    %v4130 = vpack.c.b16 %v3998, %v3994
    %v4131 = vpack.c.b16 %v3999, %v3995
    %v4132 = vpack.c.b16 %v4004, %v4000
    %v4133 = vpack.c.b16 %v4005, %v4001
    %v4134 = vpack.c.b16 %v4006, %v4002
    %v4135 = vpack.c.b16 %v4007, %v4003
    %4264 = vmatprep.subr.bf16.mxu0 %v4037
    %4265 = vmatpush1.bf16.msra.mxu0 %v4036
    %4266 = vmatprep.subr.bf16.mxu0 %v4033
    %4267 = vmatpush1.bf16.msra.mxu0 %v4032
    %4268 = vmatprep.subr.bf16.mxu0 %v4029
    %4269 = vmatpush1.bf16.msra.mxu0 %v4028
    %4270 = vmatprep.subr.bf16.mxu0 %v4025
    %4271 = vmatpush1.bf16.msra.mxu0 %v4024
    %4272 = vmatprep.subr.bf16.mxu0 %v4021
    %4273 = vmatpush1.bf16.msra.mxu0 %v4020
    %4274 = vmatprep.subr.bf16.mxu0 %v4017
    %4275 = vmatpush1.bf16.msra.mxu0 %v4016
    %4276 = vmatprep.subr.bf16.mxu0 %v4013
    %4277 = vmatpush1.bf16.msra.mxu0 %v4012
    %4278 = vmatprep.subr.bf16.mxu0 %v4009
    %4279 = vmatpush1.bf16.msra.mxu0 %v4008
    %4280 = vmatprep.subr.bf16.mxu0 %v4069
    %4281 = vmatpush2.bf16.msra.mxu0 %v4068
    %4282 = vmatprep.subr.bf16.mxu0 %v4065
    %4283 = vmatpush2.bf16.msra.mxu0 %v4064
    %4284 = vmatprep.subr.bf16.mxu0 %v4061
    %4285 = vmatpush2.bf16.msra.mxu0 %v4060
    %4286 = vmatprep.subr.bf16.mxu0 %v4057
    %4287 = vmatpush2.bf16.msra.mxu0 %v4056
    %4288 = vmatprep.subr.bf16.mxu0 %v4053
    %4289 = vmatpush2.bf16.msra.mxu0 %v4052
    %4290 = vmatprep.subr.bf16.mxu0 %v4049
    %4291 = vmatpush2.bf16.msra.mxu0 %v4048
    %4292 = vmatprep.subr.bf16.mxu0 %v4045
    %4293 = vmatpush2.bf16.msra.mxu0 %v4044
    %4294 = vmatprep.subr.bf16.mxu0 %v4041
    %4295 = vmatpush2.bf16.msra.mxu0 %v4040
    %4296 = vmatprep.mubr.bf16.mxu0 %v2557
    %4297 = vmatmul.mubr.bf16.gmra.mxu0 %v2556
    %v4298 = vpop.f32.mrf.mxu0
    %v4299 = vadd.f32 %v3536, %v4298
    %v4300 = vpop.f32.mrf.mxu0
    %v4301 = vadd.f32 %v3538, %v4300
    %v4302 = vpop.f32.mrf.mxu0
    %v4303 = vpop.f32.mrf.mxu0
    %4304 = vdwg.mxu0
    %4305 = vmatprep.subr.bf16.mxu0 %v4101
    %4306 = vmatpush1.bf16.msra.mxu0 %v4100
    %4307 = vmatprep.subr.bf16.mxu0 %v4097
    %4308 = vmatpush1.bf16.msra.mxu0 %v4096
    %4309 = vmatprep.subr.bf16.mxu0 %v4093
    %4310 = vmatpush1.bf16.msra.mxu0 %v4092
    %4311 = vmatprep.subr.bf16.mxu0 %v4089
    %4312 = vmatpush1.bf16.msra.mxu0 %v4088
    %4313 = vmatprep.subr.bf16.mxu0 %v4085
    %4314 = vmatpush1.bf16.msra.mxu0 %v4084
    %4315 = vmatprep.subr.bf16.mxu0 %v4081
    %4316 = vmatpush1.bf16.msra.mxu0 %v4080
    %4317 = vmatprep.subr.bf16.mxu0 %v4077
    %4318 = vmatpush1.bf16.msra.mxu0 %v4076
    %4319 = vmatprep.subr.bf16.mxu0 %v4073
    %4320 = vmatpush1.bf16.msra.mxu0 %v4072
    %4321 = vmatprep.subr.bf16.mxu0 %v4133
    %4322 = vmatpush2.bf16.msra.mxu0 %v4132
    %4323 = vmatprep.subr.bf16.mxu0 %v4129
    %4324 = vmatpush2.bf16.msra.mxu0 %v4128
    %4325 = vmatprep.subr.bf16.mxu0 %v4125
    %4326 = vmatpush2.bf16.msra.mxu0 %v4124
    %4327 = vmatprep.subr.bf16.mxu0 %v4121
    %4328 = vmatpush2.bf16.msra.mxu0 %v4120
    %4329 = vmatprep.subr.bf16.mxu0 %v4117
    %4330 = vmatpush2.bf16.msra.mxu0 %v4116
    %4331 = vmatprep.subr.bf16.mxu0 %v4113
    %4332 = vmatpush2.bf16.msra.mxu0 %v4112
    %4333 = vmatprep.subr.bf16.mxu0 %v4109
    %4334 = vmatpush2.bf16.msra.mxu0 %v4108
    %4335 = vmatprep.subr.bf16.mxu0 %v4105
    %4336 = vmatpush2.bf16.msra.mxu0 %v4104
    %4337 = vmatprep.mubr.bf16.mxu0 %v2559
    %4338 = vmatmul.mubr.bf16.gmra.mxu0 %v2558
    %v4339 = vpop.f32.mrf.mxu0
    %v4340 = vadd.f32 %v4299, %v4339
    %v4341 = vpop.f32.mrf.mxu0
    %v4342 = vadd.f32 %v4301, %v4341
    %v4343 = vpop.f32.mrf.mxu0
    %v4344 = vpop.f32.mrf.mxu0
    %4345 = vdwg.mxu0
    %4346 = vmatprep.subr.bf16.mxu0 %v4039
    %4347 = vmatpush1.bf16.msra.mxu0 %v4038
    %4348 = vmatprep.subr.bf16.mxu0 %v4035
    %4349 = vmatpush1.bf16.msra.mxu0 %v4034
    %4350 = vmatprep.subr.bf16.mxu0 %v4031
    %4351 = vmatpush1.bf16.msra.mxu0 %v4030
    %4352 = vmatprep.subr.bf16.mxu0 %v4027
    %4353 = vmatpush1.bf16.msra.mxu0 %v4026
    %4354 = vmatprep.subr.bf16.mxu0 %v4023
    %4355 = vmatpush1.bf16.msra.mxu0 %v4022
    %4356 = vmatprep.subr.bf16.mxu0 %v4019
    %4357 = vmatpush1.bf16.msra.mxu0 %v4018
    %4358 = vmatprep.subr.bf16.mxu0 %v4015
    %4359 = vmatpush1.bf16.msra.mxu0 %v4014
    %4360 = vmatprep.subr.bf16.mxu0 %v4011
    %4361 = vmatpush1.bf16.msra.mxu0 %v4010
    %4362 = vmatprep.subr.bf16.mxu0 %v4071
    %4363 = vmatpush2.bf16.msra.mxu0 %v4070
    %4364 = vmatprep.subr.bf16.mxu0 %v4067
    %4365 = vmatpush2.bf16.msra.mxu0 %v4066
    %4366 = vmatprep.subr.bf16.mxu0 %v4063
    %4367 = vmatpush2.bf16.msra.mxu0 %v4062
    %4368 = vmatprep.subr.bf16.mxu0 %v4059
    %4369 = vmatpush2.bf16.msra.mxu0 %v4058
    %4370 = vmatprep.subr.bf16.mxu0 %v4055
    %4371 = vmatpush2.bf16.msra.mxu0 %v4054
    %4372 = vmatprep.subr.bf16.mxu0 %v4051
    %4373 = vmatpush2.bf16.msra.mxu0 %v4050
    %4374 = vmatprep.subr.bf16.mxu0 %v4047
    %4375 = vmatpush2.bf16.msra.mxu0 %v4046
    %4376 = vmatprep.subr.bf16.mxu0 %v4043
    %4377 = vmatpush2.bf16.msra.mxu0 %v4042
    %4378 = vmatprep.mubr.bf16.mxu0 %v2557
    %4379 = vmatmul.mubr.bf16.gmra.mxu0 %v2556
    %v4380 = vpop.f32.mrf.mxu0
    %v4381 = vadd.f32 %v3618, %v4380
    %v4382 = vpop.f32.mrf.mxu0
    %v4383 = vadd.f32 %v3620, %v4382
    %v4384 = vpop.f32.mrf.mxu0
    %v4385 = vpop.f32.mrf.mxu0
    %4386 = vdwg.mxu0
    %4387 = vmatprep.subr.bf16.mxu0 %v4103
    %4388 = vmatpush1.bf16.msra.mxu0 %v4102
    %4389 = vmatprep.subr.bf16.mxu0 %v4099
    %4390 = vmatpush1.bf16.msra.mxu0 %v4098
    %4391 = vmatprep.subr.bf16.mxu0 %v4095
    %4392 = vmatpush1.bf16.msra.mxu0 %v4094
    %4393 = vmatprep.subr.bf16.mxu0 %v4091
    %4394 = vmatpush1.bf16.msra.mxu0 %v4090
    %4395 = vmatprep.subr.bf16.mxu0 %v4087
    %4396 = vmatpush1.bf16.msra.mxu0 %v4086
    %4397 = vmatprep.subr.bf16.mxu0 %v4083
    %4398 = vmatpush1.bf16.msra.mxu0 %v4082
    %4399 = vmatprep.subr.bf16.mxu0 %v4079
    %4400 = vmatpush1.bf16.msra.mxu0 %v4078
    %4401 = vmatprep.subr.bf16.mxu0 %v4075
    %4402 = vmatpush1.bf16.msra.mxu0 %v4074
    %4403 = vmatprep.subr.bf16.mxu0 %v4135
    %4404 = vmatpush2.bf16.msra.mxu0 %v4134
    %4405 = vmatprep.subr.bf16.mxu0 %v4131
    %4406 = vmatpush2.bf16.msra.mxu0 %v4130
    %4407 = vmatprep.subr.bf16.mxu0 %v4127
    %4408 = vmatpush2.bf16.msra.mxu0 %v4126
    %4409 = vmatprep.subr.bf16.mxu0 %v4123
    %4410 = vmatpush2.bf16.msra.mxu0 %v4122
    %4411 = vmatprep.subr.bf16.mxu0 %v4119
    %4412 = vmatpush2.bf16.msra.mxu0 %v4118
    %4413 = vmatprep.subr.bf16.mxu0 %v4115
    %4414 = vmatpush2.bf16.msra.mxu0 %v4114
    %4415 = vmatprep.subr.bf16.mxu0 %v4111
    %4416 = vmatpush2.bf16.msra.mxu0 %v4110
    %4417 = vmatprep.subr.bf16.mxu0 %v4107
    %4418 = vmatpush2.bf16.msra.mxu0 %v4106
    %4419 = vmatprep.mubr.bf16.mxu0 %v2559
    %4420 = vmatmul.mubr.bf16.gmra.mxu0 %v2558
    %v4421 = vpop.f32.mrf.mxu0
    %v4422 = vadd.f32 %v4381, %v4421
    %v4423 = vpop.f32.mrf.mxu0
    %v4424 = vadd.f32 %v4383, %v4423
    %v4425 = vpop.f32.mrf.mxu0
    %v4426 = vpop.f32.mrf.mxu0
    %4427 = vdwg.mxu0
    %v4428 = vld [vmem:[#allocation13] sm:$0xf]
    %v4430 = vlaneseq
    %v4431 = vshrl.u32 %v4430, 7
    %v4432 = vsub.s32 0, %v4431
    %v4433 = vrot.slane %v4428, %v4432
    %v4434 = vlaneseq
    %v4435 = vshrl.u32 %v4434, 7
    %v4436 = vsub.s32 1, %v4435
    %v4437 = vrot.slane %v4428, %v4436
    %v4438 = vlaneseq
    %v4439 = vshrl.u32 %v4438, 7
    %v4440 = vsub.s32 2, %v4439
    %v4441 = vrot.slane %v4428, %v4440
    %v4442 = vlaneseq
    %v4443 = vshrl.u32 %v4442, 7
    %v4444 = vsub.s32 3, %v4443
    %v4445 = vrot.slane %v4428, %v4444
    %v4450 = vadd.f32 %v4340, %v4433
    %v4451 = vadd.f32 %v4342, %v4437
    %v4452 = vadd.f32 %v4422, %v4441
    %v4453 = vadd.f32 %v4424, %v4445
    %v4454 = vmax.f32 %v4450, 0.0
    %v4455 = vmax.f32 %v4451, 0.0
    %v4456 = vmax.f32 %v4452, 0.0
    %v4457 = vmax.f32 %v4453, 0.0
    %v4458 = vpack.c.bf16 %v4454, %v4454
    %v4459 = vpack.c.bf16 %v4455, %v4455
    %v4460 = vpack.c.bf16 %v4456, %v4456
    %v4461 = vpack.c.bf16 %v4457, %v4457
    %v4462 = vld [vmem:[#allocation14] sm:$0xf]
    %v4463 = vld [vmem:[#allocation14 + $0x4] sm:$0xf]
    %v4464 = vld [vmem:[#allocation14 + $0x8] sm:$0xf]
    %v4465 = vld [vmem:[#allocation14 + $0xc] sm:$0xf]
    %v4466 = vld [vmem:[#allocation14 + $0x10] sm:$0xf]
    %v4467 = vld [vmem:[#allocation14 + $0x14] sm:$0xf]
    %v4468 = vld [vmem:[#allocation14 + $0x18] sm:$0xf]
    %v4469 = vld [vmem:[#allocation14 + $0x1c] sm:$0xf]
    %v4470 = vld [vmem:[#allocation14 + $0x20] sm:$0xf]
    %v4471 = vld [vmem:[#allocation14 + $0x24] sm:$0xf]
    %v4472 = vld [vmem:[#allocation14 + $0x28] sm:$0xf]
    %v4473 = vld [vmem:[#allocation14 + $0x2c] sm:$0xf]
    %v4474 = vld [vmem:[#allocation14 + $0x30] sm:$0xf]
    %v4475 = vld [vmem:[#allocation14 + $0x34] sm:$0xf]
    %v4476 = vld [vmem:[#allocation14 + $0x38] sm:$0xf]
    %v4477 = vld [vmem:[#allocation14 + $0x3c] sm:$0xf]
    %v4478 = vld [vmem:[#allocation14 + $0x40] sm:$0xf]
    %v4479 = vld [vmem:[#allocation14 + $0x44] sm:$0xf]
    %v4480 = vld [vmem:[#allocation14 + $0x48] sm:$0xf]
    %v4481 = vld [vmem:[#allocation14 + $0x4c] sm:$0xf]
    %v4482 = vld [vmem:[#allocation14 + $0x50] sm:$0xf]
    %v4483 = vld [vmem:[#allocation14 + $0x54] sm:$0xf]
    %v4484 = vld [vmem:[#allocation14 + $0x58] sm:$0xf]
    %v4485 = vld [vmem:[#allocation14 + $0x5c] sm:$0xf]
    %v4486 = vld [vmem:[#allocation14 + $0x60] sm:$0xf]
    %v4487 = vld [vmem:[#allocation14 + $0x64] sm:$0xf]
    %v4488 = vld [vmem:[#allocation14 + $0x68] sm:$0xf]
    %v4489 = vld [vmem:[#allocation14 + $0x6c] sm:$0xf]
    %v4490 = vld [vmem:[#allocation14 + $0x70] sm:$0xf]
    %v4491 = vld [vmem:[#allocation14 + $0x74] sm:$0xf]
    %v4492 = vld [vmem:[#allocation14 + $0x78] sm:$0xf]
    %v4493 = vld [vmem:[#allocation14 + $0x7c] sm:$0xf]
    %v4494 = vld [vmem:[#allocation14 + $0x80] sm:$0xf]
    %v4495 = vld [vmem:[#allocation14 + $0x84] sm:$0xf]
    %v4496 = vld [vmem:[#allocation14 + $0x88] sm:$0xf]
    %v4497 = vld [vmem:[#allocation14 + $0x8c] sm:$0xf]
    %v4498 = vld [vmem:[#allocation14 + $0x90] sm:$0xf]
    %v4499 = vld [vmem:[#allocation14 + $0x94] sm:$0xf]
    %v4500 = vld [vmem:[#allocation14 + $0x98] sm:$0xf]
    %v4501 = vld [vmem:[#allocation14 + $0x9c] sm:$0xf]
    %v4502 = vld [vmem:[#allocation14 + $0xa0] sm:$0xf]
    %v4503 = vld [vmem:[#allocation14 + $0xa4] sm:$0xf]
    %v4504 = vld [vmem:[#allocation14 + $0xa8] sm:$0xf]
    %v4505 = vld [vmem:[#allocation14 + $0xac] sm:$0xf]
    %v4506 = vld [vmem:[#allocation14 + $0xb0] sm:$0xf]
    %v4507 = vld [vmem:[#allocation14 + $0xb4] sm:$0xf]
    %v4508 = vld [vmem:[#allocation14 + $0xb8] sm:$0xf]
    %v4509 = vld [vmem:[#allocation14 + $0xbc] sm:$0xf]
    %v4510 = vld [vmem:[#allocation14 + $0xc0] sm:$0xf]
    %v4511 = vld [vmem:[#allocation14 + $0xc4] sm:$0xf]
    %v4512 = vld [vmem:[#allocation14 + $0xc8] sm:$0xf]
    %v4513 = vld [vmem:[#allocation14 + $0xcc] sm:$0xf]
    %v4514 = vld [vmem:[#allocation14 + $0xd0] sm:$0xf]
    %v4515 = vld [vmem:[#allocation14 + $0xd4] sm:$0xf]
    %v4516 = vld [vmem:[#allocation14 + $0xd8] sm:$0xf]
    %v4517 = vld [vmem:[#allocation14 + $0xdc] sm:$0xf]
    %v4518 = vld [vmem:[#allocation14 + $0xe0] sm:$0xf]
    %v4519 = vld [vmem:[#allocation14 + $0xe4] sm:$0xf]
    %v4520 = vld [vmem:[#allocation14 + $0xe8] sm:$0xf]
    %v4521 = vld [vmem:[#allocation14 + $0xec] sm:$0xf]
    %v4522 = vld [vmem:[#allocation14 + $0xf0] sm:$0xf]
    %v4523 = vld [vmem:[#allocation14 + $0xf4] sm:$0xf]
    %v4524 = vld [vmem:[#allocation14 + $0xf8] sm:$0xf]
    %v4525 = vld [vmem:[#allocation14 + $0xfc] sm:$0xf]
    %v4526 = vld [vmem:[#allocation16] sm:$0x1]
    %v4528 = vlaneseq
    %v4529 = vshrl.u32 %v4528, 7
    %v4530 = vsub.s32 0, %v4529
    %v4531 = vrot.slane %v4526, %v4530
    %v4597 = vunpack.c.l.b16 %v4462
    %v4598 = vunpack.c.l.b16 %v4463
    %v4599 = vunpack.c.l.b16 %v4464
    %v4600 = vunpack.c.l.b16 %v4465
    %v4601 = vunpack.c.l.b16 %v4466
    %v4602 = vunpack.c.l.b16 %v4467
    %v4603 = vunpack.c.l.b16 %v4468
    %v4604 = vunpack.c.l.b16 %v4469
    %v4605 = vunpack.c.l.b16 %v4470
    %v4606 = vunpack.c.l.b16 %v4471
    %v4607 = vunpack.c.l.b16 %v4472
    %v4608 = vunpack.c.l.b16 %v4473
    %v4609 = vunpack.c.l.b16 %v4474
    %v4610 = vunpack.c.l.b16 %v4475
    %v4611 = vunpack.c.l.b16 %v4476
    %v4612 = vunpack.c.l.b16 %v4477
    %v4613 = vunpack.c.l.b16 %v4478
    %v4614 = vunpack.c.l.b16 %v4479
    %v4615 = vunpack.c.l.b16 %v4480
    %v4616 = vunpack.c.l.b16 %v4481
    %v4617 = vunpack.c.l.b16 %v4482
    %v4618 = vunpack.c.l.b16 %v4483
    %v4619 = vunpack.c.l.b16 %v4484
    %v4620 = vunpack.c.l.b16 %v4485
    %v4621 = vunpack.c.l.b16 %v4486
    %v4622 = vunpack.c.l.b16 %v4487
    %v4623 = vunpack.c.l.b16 %v4488
    %v4624 = vunpack.c.l.b16 %v4489
    %v4625 = vunpack.c.l.b16 %v4490
    %v4626 = vunpack.c.l.b16 %v4491
    %v4627 = vunpack.c.l.b16 %v4492
    %v4628 = vunpack.c.l.b16 %v4493
    %v4629 = vunpack.c.l.b16 %v4494
    %v4630 = vunpack.c.l.b16 %v4495
    %v4631 = vunpack.c.l.b16 %v4496
    %v4632 = vunpack.c.l.b16 %v4497
    %v4633 = vunpack.c.l.b16 %v4498
    %v4634 = vunpack.c.l.b16 %v4499
    %v4635 = vunpack.c.l.b16 %v4500
    %v4636 = vunpack.c.l.b16 %v4501
    %v4637 = vunpack.c.l.b16 %v4502
    %v4638 = vunpack.c.l.b16 %v4503
    %v4639 = vunpack.c.l.b16 %v4504
    %v4640 = vunpack.c.l.b16 %v4505
    %v4641 = vunpack.c.l.b16 %v4506
    %v4642 = vunpack.c.l.b16 %v4507
    %v4643 = vunpack.c.l.b16 %v4508
    %v4644 = vunpack.c.l.b16 %v4509
    %v4645 = vunpack.c.l.b16 %v4510
    %v4646 = vunpack.c.l.b16 %v4511
    %v4647 = vunpack.c.l.b16 %v4512
    %v4648 = vunpack.c.l.b16 %v4513
    %v4649 = vunpack.c.l.b16 %v4514
    %v4650 = vunpack.c.l.b16 %v4515
    %v4651 = vunpack.c.l.b16 %v4516
    %v4652 = vunpack.c.l.b16 %v4517
    %v4653 = vunpack.c.l.b16 %v4518
    %v4654 = vunpack.c.l.b16 %v4519
    %v4655 = vunpack.c.l.b16 %v4520
    %v4656 = vunpack.c.l.b16 %v4521
    %v4657 = vunpack.c.l.b16 %v4522
    %v4658 = vunpack.c.l.b16 %v4523
    %v4659 = vunpack.c.l.b16 %v4524
    %v4660 = vunpack.c.l.b16 %v4525
    %v4661 = vpack.c.b16 %v4598, %v4597
    %v4662 = vpack.c.b16 %v4600, %v4599
    %v4663 = vpack.c.b16 %v4602, %v4601
    %v4664 = vpack.c.b16 %v4604, %v4603
    %v4665 = vpack.c.b16 %v4606, %v4605
    %v4666 = vpack.c.b16 %v4608, %v4607
    %v4667 = vpack.c.b16 %v4610, %v4609
    %v4668 = vpack.c.b16 %v4612, %v4611
    %v4669 = vpack.c.b16 %v4614, %v4613
    %v4670 = vpack.c.b16 %v4616, %v4615
    %v4671 = vpack.c.b16 %v4618, %v4617
    %v4672 = vpack.c.b16 %v4620, %v4619
    %v4673 = vpack.c.b16 %v4622, %v4621
    %v4674 = vpack.c.b16 %v4624, %v4623
    %v4675 = vpack.c.b16 %v4626, %v4625
    %v4676 = vpack.c.b16 %v4628, %v4627
    %v4677 = vpack.c.b16 %v4630, %v4629
    %v4678 = vpack.c.b16 %v4632, %v4631
    %v4679 = vpack.c.b16 %v4634, %v4633
    %v4680 = vpack.c.b16 %v4636, %v4635
    %v4681 = vpack.c.b16 %v4638, %v4637
    %v4682 = vpack.c.b16 %v4640, %v4639
    %v4683 = vpack.c.b16 %v4642, %v4641
    %v4684 = vpack.c.b16 %v4644, %v4643
    %v4685 = vpack.c.b16 %v4646, %v4645
    %v4686 = vpack.c.b16 %v4648, %v4647
    %v4687 = vpack.c.b16 %v4650, %v4649
    %v4688 = vpack.c.b16 %v4652, %v4651
    %v4689 = vpack.c.b16 %v4654, %v4653
    %v4690 = vpack.c.b16 %v4656, %v4655
    %v4691 = vpack.c.b16 %v4658, %v4657
    %v4692 = vpack.c.b16 %v4660, %v4659
    %4725 = vmatprep.subr.bf16.mxu0 0
    %4726 = vmatpush1.bf16.msra.mxu0 %v4668
    %4727 = vmatprep.subr.bf16.mxu0 0
    %4728 = vmatpush1.bf16.msra.mxu0 %v4667
    %4729 = vmatprep.subr.bf16.mxu0 0
    %4730 = vmatpush1.bf16.msra.mxu0 %v4666
    %4731 = vmatprep.subr.bf16.mxu0 0
    %4732 = vmatpush1.bf16.msra.mxu0 %v4665
    %4733 = vmatprep.subr.bf16.mxu0 0
    %4734 = vmatpush1.bf16.msra.mxu0 %v4664
    %4735 = vmatprep.subr.bf16.mxu0 0
    %4736 = vmatpush1.bf16.msra.mxu0 %v4663
    %4737 = vmatprep.subr.bf16.mxu0 0
    %4738 = vmatpush1.bf16.msra.mxu0 %v4662
    %4739 = vmatprep.subr.bf16.mxu0 0
    %4740 = vmatpush1.bf16.msra.mxu0 %v4661
    %4741 = vmatprep.subr.bf16.mxu0 0
    %4742 = vmatpush2.bf16.msra.mxu0 %v4676
    %4743 = vmatprep.subr.bf16.mxu0 0
    %4744 = vmatpush2.bf16.msra.mxu0 %v4675
    %4745 = vmatprep.subr.bf16.mxu0 0
    %4746 = vmatpush2.bf16.msra.mxu0 %v4674
    %4747 = vmatprep.subr.bf16.mxu0 0
    %4748 = vmatpush2.bf16.msra.mxu0 %v4673
    %4749 = vmatprep.subr.bf16.mxu0 0
    %4750 = vmatpush2.bf16.msra.mxu0 %v4672
    %4751 = vmatprep.subr.bf16.mxu0 0
    %4752 = vmatpush2.bf16.msra.mxu0 %v4671
    %4753 = vmatprep.subr.bf16.mxu0 0
    %4754 = vmatpush2.bf16.msra.mxu0 %v4670
    %4755 = vmatprep.subr.bf16.mxu0 0
    %4756 = vmatpush2.bf16.msra.mxu0 %v4669
    %4757 = vmatprep.mubr.bf16.mxu0 %v4459
    %4758 = vmatmul.mubr.bf16.gmra.mxu0 %v4458
    %v4759 = vpop.f32.mrf.mxu0
    %v4760 = vadd.f32 %v4531, %v4759
    %v4761 = vpop.f32.mrf.mxu0
    %v4762 = vpop.f32.mrf.mxu0
    %v4763 = vpop.f32.mrf.mxu0
    %4764 = vdwg.mxu0
    %4765 = vmatprep.subr.bf16.mxu0 0
    %4766 = vmatpush1.bf16.msra.mxu0 %v4684
    %4767 = vmatprep.subr.bf16.mxu0 0
    %4768 = vmatpush1.bf16.msra.mxu0 %v4683
    %4769 = vmatprep.subr.bf16.mxu0 0
    %4770 = vmatpush1.bf16.msra.mxu0 %v4682
    %4771 = vmatprep.subr.bf16.mxu0 0
    %4772 = vmatpush1.bf16.msra.mxu0 %v4681
    %4773 = vmatprep.subr.bf16.mxu0 0
    %4774 = vmatpush1.bf16.msra.mxu0 %v4680
    %4775 = vmatprep.subr.bf16.mxu0 0
    %4776 = vmatpush1.bf16.msra.mxu0 %v4679
    %4777 = vmatprep.subr.bf16.mxu0 0
    %4778 = vmatpush1.bf16.msra.mxu0 %v4678
    %4779 = vmatprep.subr.bf16.mxu0 0
    %4780 = vmatpush1.bf16.msra.mxu0 %v4677
    %4781 = vmatprep.subr.bf16.mxu0 0
    %4782 = vmatpush2.bf16.msra.mxu0 %v4692
    %4783 = vmatprep.subr.bf16.mxu0 0
    %4784 = vmatpush2.bf16.msra.mxu0 %v4691
    %4785 = vmatprep.subr.bf16.mxu0 0
    %4786 = vmatpush2.bf16.msra.mxu0 %v4690
    %4787 = vmatprep.subr.bf16.mxu0 0
    %4788 = vmatpush2.bf16.msra.mxu0 %v4689
    %4789 = vmatprep.subr.bf16.mxu0 0
    %4790 = vmatpush2.bf16.msra.mxu0 %v4688
    %4791 = vmatprep.subr.bf16.mxu0 0
    %4792 = vmatpush2.bf16.msra.mxu0 %v4687
    %4793 = vmatprep.subr.bf16.mxu0 0
    %4794 = vmatpush2.bf16.msra.mxu0 %v4686
    %4795 = vmatprep.subr.bf16.mxu0 0
    %4796 = vmatpush2.bf16.msra.mxu0 %v4685
    %4797 = vmatprep.mubr.bf16.mxu0 %v4461
    %4798 = vmatmul.mubr.bf16.gmra.mxu0 %v4460
    %v4799 = vpop.f32.mrf.mxu0
    %v4800 = vadd.f32 %v4760, %v4799
    %v4801 = vpop.f32.mrf.mxu0
    %v4802 = vpop.f32.mrf.mxu0
    %v4803 = vpop.f32.mrf.mxu0
    %4804 = vdwg.mxu0
    %4805 = vst [vmem:[#allocation17] sm:$0xff] %v4800
    // Predicated region
    $region74: #{tpu_custom_call.1} parent=1 // pred_check
      _
    $region75: #{tpu_custom_call.1} parent=1 // pred_check_branch
      %4807 = sbr.rel (0) target = $region77
    $region76: #{tpu_custom_call.1} parent=1 // pred_region
      %s4809 = ssub.s32 128, 128
      %4810 = vsyncadd [#allocation4], %s4809
      %s4812 = sshll.u32 [#allocation17], 4
      %s4813 = int_to_ptr.vmem [resolvable:$true] %s4812
      %4815 = dma.vmem_to_hbm [thread:$0]  %s4813, 128, %s9, [#allocation4]
    $region77: #{tpu_custom_call.1} parent=1 // pred_fallthru
      _
    // Predicated region
    $region78: #{tpu_custom_call.1} parent=1 // pred_check
      _
    $region79: #{tpu_custom_call.1} parent=1 // pred_check_branch
      %4817 = sbr.rel (0) target = $region81
    $region80: #{tpu_custom_call.1} parent=1 // pred_region
      %4818 = dma.done [#allocation4], 128
    $region81: #{tpu_custom_call.1} parent=1 // pred_fallthru
      _
    %4819 = vsyncpa [#allocation3], 1
    %4820 = vsyncpa [#allocation6], 1
    %4821 = vsyncpa [#allocation9], 1
    %4822 = vsyncpa [#allocation12], 1
    %4823 = vsyncpa [#allocation15], 1
    %4824 = vsyncpa [#allocation4], 1

</llo_original>
